<compile_context>
chip_gen: v5e
topology: v5e:2x2
jax: 0.10.0
libtpu: 0.0.40
codegen_flags: <defaults>
</compile_context>

<pallas_src>
import math

import jax
import jax.numpy as jnp
from jax.experimental import pallas as pl
from jax.experimental.pallas import tpu as pltpu


def _biaffine_tile_kernel(x1_ref, x2t_ref, wb_ref, wl1_ref, wl2t_ref, bl_ref, o_ref):
    """One (batch, row-tile, col-tile) output block.

    x1_ref  : (1, ts1, f1)          row tile of un-expanded x1
    x2t_ref : (1, f2, ts2)          col tile of x2, pre-transposed (lane dim = ts2)
    wb_ref  : (f_out, f1, f2)       bilinear weight      (VMEM-resident)
    wl1_ref : (f1, f_out)           linear weight, x1 half (VMEM-resident)
    wl2t_ref: (f_out, f2)           linear weight, x2 half (VMEM-resident)
    bl_ref  : (1, f_out)            linear bias           (VMEM-resident)
    o_ref   : (1, f_out, ts1, ts2)  channel-major output block (lane dim = ts2)
    """
    f_out = o_ref.shape[1]
    hp = jax.lax.Precision.HIGHEST

    x1 = x1_ref[0]                      # (ts1, f1)
    x2t = x2t_ref[0]                    # (f2, ts2)

    # Linear part: row term (bias folded in) + column term.
    lin_r = jnp.dot(x1, wl1_ref[...], preferred_element_type=jnp.float32,
                    precision=hp) + bl_ref[...]                      # (ts1, f_out)
    lin_c = jnp.dot(wl2t_ref[...], x2t, preferred_element_type=jnp.float32,
                    precision=hp)                                    # (f_out, ts2)

    # Bilinear part, one output channel at a time (f_out is small and static):
    #   u_o = x1 @ Wb[o]        (ts1, f2)
    #   s_o = u_o @ x2^T        (ts1, ts2)   -- dense-N MXU matmul
    for o in range(f_out):
        u_o = jnp.dot(x1, wb_ref[o], preferred_element_type=jnp.float32,
                      precision=hp)                                  # (ts1, f2)
        s_o = jnp.dot(u_o, x2t, preferred_element_type=jnp.float32,
                      precision=hp)                                  # (ts1, ts2)
        o_ref[0, o] = (s_o + lin_r[:, o:o + 1] + lin_c[o:o + 1, :]).astype(o_ref.dtype)


def _get_shapes(s1, s2):
    # Mirrors Biaffine.get_shapes.
    assert len(s1) == len(s2)
    shape = list(s1)
    for i, j in enumerate(s2):
        if shape[i] == 1:
            shape[i] = j
    return shape, shape[:-1] + [s2[-1]]


def _pick_tile(extent, target):
    # Full extent is always a legal block dim; otherwise `target` (multiple of
    # 8 for rows, 128 for cols) with a ragged, store-masked last block.
    return extent if extent <= target else target


def biaffine_forward(x1, x2, w_bil, w_lin, b_lin, *, ts_rows=256, ts_cols=256):
    """x1: (..., f1), x2: (..., f2) with Biaffine broadcast semantics -> (..., f_out)."""
    f_out, f1, f2 = w_bil.shape
    assert w_lin.shape == (f_out, f1 + f2)

    shape1, shape2 = _get_shapes(list(x1.shape), list(x2.shape))
    assert shape1[-1] == f1 and shape2[-1] == f2, "feature dims must match the weights"
    nlead = len(shape1) - 1

    # Classify every leading axis: shared batch / x1-varying (row) / x2-varying (col).
    batch_ax, row_ax, col_ax = [], [], []
    for a in range(nlead):
        d1, d2 = x1.shape[a], x2.shape[a]
        if d1 == d2:
            batch_ax.append(a)
        elif d2 == 1:
            row_ax.append(a)
        elif d1 == 1:
            col_ax.append(a)
        else:
            raise ValueError(f"non-broadcastable dims {d1} vs {d2} at axis {a}")

    b_dims = tuple(shape1[a] for a in batch_ax)
    r_dims = tuple(shape1[a] for a in row_ax)
    c_dims = tuple(shape1[a] for a in col_ax)
    B, R, C = math.prod(b_dims), math.prod(r_dims), math.prod(c_dims)

    # Pack un-expanded inputs (no broadcast materialization, no concat).
    perm = batch_ax + row_ax + col_ax + [nlead]
    x1p = jnp.transpose(x1, perm).reshape(B, R, f1).astype(jnp.float32)   # (B, R, f1)
    x2p = jnp.transpose(x2, perm).reshape(B, C, f2).astype(jnp.float32)   # (B, C, f2)
    # One cheap transpose so the kernel sees a lane-dense (f2, ts_cols) RHS.
    x2t = jnp.swapaxes(x2p, 1, 2)                                         # (B, f2, C)

    # Parameter re-layouts (tiny, done once).
    wb = jnp.asarray(w_bil, jnp.float32)                  # (f_out, f1, f2)
    wl1 = jnp.asarray(w_lin[:, :f1], jnp.float32).T       # (f1, f_out)
    wl2t = jnp.asarray(w_lin[:, f1:], jnp.float32)        # (f_out, f2)
    bl = jnp.asarray(b_lin, jnp.float32).reshape(1, f_out)

    ts1 = _pick_tile(R, ts_rows)
    ts2 = _pick_tile(C, ts_cols)
    grid = (B, pl.cdiv(R, ts1), pl.cdiv(C, ts2))

    out_k = pl.pallas_call(
        _biaffine_tile_kernel,
        out_shape=jax.ShapeDtypeStruct((B, f_out, R, C), jnp.float32),
        grid=grid,
        in_specs=[
            pl.BlockSpec((1, ts1, f1), lambda b, i, j: (b, i, 0)),       # x1 row tile
            pl.BlockSpec((1, f2, ts2), lambda b, i, j: (b, 0, j)),       # x2^T col tile
            pl.BlockSpec((f_out, f1, f2), lambda b, i, j: (0, 0, 0)),    # Wb   (resident)
            pl.BlockSpec((f1, f_out), lambda b, i, j: (0, 0)),           # Wl1  (resident)
            pl.BlockSpec((f_out, f2), lambda b, i, j: (0, 0)),           # Wl2T (resident)
            pl.BlockSpec((1, f_out), lambda b, i, j: (0, 0)),            # bias (resident)
        ],
        out_specs=pl.BlockSpec((1, f_out, ts1, ts2), lambda b, i, j: (b, 0, i, j)),
        compiler_params=pltpu.CompilerParams(
            dimension_semantics=("parallel", "parallel", "parallel")),
    )(x1p, x2t, wb, wl1, wl2t, bl)

    # Un-pack the channel-major kernel output back to the module's layout
    # (layout plumbing over the output only).
    cur_axes = batch_ax + ["O"] + row_ax + col_ax
    tgt_axes = list(range(nlead)) + ["O"]
    inv_perm = [cur_axes.index(a) for a in tgt_axes]
    out = out_k.reshape(b_dims + (f_out,) + r_dims + c_dims)
    return jnp.transpose(out, inv_perm)


def biaffine_reference(x1, x2, w_bil, w_lin, b_lin):
    with jax.default_matmul_precision("highest"):
        shape1, shape2 = _get_shapes(list(x1.shape), list(x2.shape))
        x1e = jnp.broadcast_to(x1, tuple(shape1)).astype(jnp.float32)
        x2e = jnp.broadcast_to(x2, tuple(shape2)).astype(jnp.float32)
        a = jnp.concatenate([x1e, x2e], axis=-1) @ w_lin.T + b_lin
        b = jnp.einsum('...i,oij,...j->...o', x1e, w_bil, x2e)
        return a + b


if __name__ == "__main__":
    B, S, F1, F2, F_OUT = 2, 8, 16, 16, 8

    key = jax.random.PRNGKey(0)
    k1, k2, k3, k4, k5 = jax.random.split(key, 5)

    # Canonical biaffine usage: x1 broadcast over columns, x2 over rows.
    x1 = jax.random.normal(k1, (B, S, 1, F1), dtype=jnp.float32)
    x2 = jax.random.normal(k2, (B, 1, S, F2), dtype=jnp.float32)

    # Deterministic synthetic parameters (shapes from nn.Bilinear / nn.Linear).
    w_bil = jax.random.normal(k3, (F_OUT, F1, F2), dtype=jnp.float32) * 0.05
    w_lin = jax.random.normal(k4, (F_OUT, F1 + F2), dtype=jnp.float32) * 0.05
    b_lin = jax.random.normal(k5, (F_OUT,), dtype=jnp.float32) * 0.1

    out = biaffine_forward(x1, x2, w_bil, w_lin, b_lin)
    out = jax.block_until_ready(out)

    ref = biaffine_reference(x1, x2, w_bil, w_lin, b_lin)
    assert out.shape == (B, S, S, F_OUT), out.shape
    assert jnp.allclose(out, ref, atol=5e-4, rtol=5e-4), "mismatch vs reference"

    print("KERNEL_OK")
</pallas_src>

<mosaic_0001>
module attributes {stable_mosaic.version = 11 : i64} {
  func.func @_biaffine_tile_kernel(%arg0: i32, %arg1: i32, %arg2: i32, %arg3: memref<1x8x16xf32, #tpu.memory_space<vmem>>, %arg4: memref<1x16x8xf32, #tpu.memory_space<vmem>>, %arg5: memref<8x16x16xf32, #tpu.memory_space<vmem>>, %arg6: memref<16x8xf32, #tpu.memory_space<vmem>>, %arg7: memref<8x16xf32, #tpu.memory_space<vmem>>, %arg8: memref<1x8xf32, #tpu.memory_space<vmem>>, %arg9: memref<1x8x8x8xf32, #tpu.memory_space<vmem>>) attributes {dimension_semantics = [#tpu.dimension_semantics<parallel>, #tpu.dimension_semantics<parallel>, #tpu.dimension_semantics<parallel>], iteration_bounds = array<i64: 2, 1, 1>, scalar_prefetch = 0 : i64, scratch_operands = 0 : i64, tpu.core_type = #tpu.core_type<tc>, window_params = [{transform_indices = @transform_0, window_bounds = array<i64: 1, 8, 16>}, {transform_indices = @transform_1, window_bounds = array<i64: 1, 16, 8>}, {pipeline_mode = #tpu.pipeline_mode<synchronous>, transform_indices = @transform_2, window_bounds = array<i64: 8, 16, 16>}, {pipeline_mode = #tpu.pipeline_mode<synchronous>, transform_indices = @transform_3, window_bounds = array<i64: 16, 8>}, {pipeline_mode = #tpu.pipeline_mode<synchronous>, transform_indices = @transform_4, window_bounds = array<i64: 8, 16>}, {pipeline_mode = #tpu.pipeline_mode<synchronous>, transform_indices = @transform_5, window_bounds = array<i64: 1, 8>}, {transform_indices = @transform_6, window_bounds = array<i64: 1, 8, 8, 8>}]} {
    %c0 = arith.constant 0 : index
    %c0_0 = arith.constant 0 : index
    %c0_1 = arith.constant 0 : index
    %0 = vector.load %arg3[%c0, %c0_0, %c0_1] : memref<1x8x16xf32, #tpu.memory_space<vmem>>, vector<1x8x16xf32>
    %1 = vector.shape_cast %0 : vector<1x8x16xf32> to vector<8x16xf32>
    %c0_2 = arith.constant 0 : index
    %c0_3 = arith.constant 0 : index
    %c0_4 = arith.constant 0 : index
    %2 = vector.load %arg4[%c0_2, %c0_3, %c0_4] : memref<1x16x8xf32, #tpu.memory_space<vmem>>, vector<1x16x8xf32>
    %3 = vector.shape_cast %2 : vector<1x16x8xf32> to vector<16x8xf32>
    %c0_5 = arith.constant 0 : index
    %c0_6 = arith.constant 0 : index
    %4 = vector.load %arg6[%c0_5, %c0_6] : memref<16x8xf32, #tpu.memory_space<vmem>>, vector<16x8xf32>
    %cst = arith.constant dense<0.000000e+00> : vector<8x8xf32>
    %5 = tpu.matmul %1, %4, %cst {dimension_numbers = #tpu.dot_dimension_numbers<[1], [0], [0], [1], [0, 0, 1, 1], [], []>, precision = #tpu.contract_precision<fp32>} : vector<8x16xf32>, vector<16x8xf32>, vector<8x8xf32> -> vector<8x8xf32>
    %c0_7 = arith.constant 0 : index
    %c0_8 = arith.constant 0 : index
    %6 = vector.load %arg8[%c0_7, %c0_8] : memref<1x8xf32, #tpu.memory_space<vmem>>, vector<1x8xf32>
    %7 = vector.broadcast %6 : vector<1x8xf32> to vector<8x8xf32>
    %8 = arith.addf %5, %7 : vector<8x8xf32>
    %c0_9 = arith.constant 0 : index
    %c0_10 = arith.constant 0 : index
    %9 = vector.load %arg7[%c0_9, %c0_10] : memref<8x16xf32, #tpu.memory_space<vmem>>, vector<8x16xf32>
    %cst_11 = arith.constant dense<0.000000e+00> : vector<8x8xf32>
    %10 = tpu.matmul %9, %3, %cst_11 {dimension_numbers = #tpu.dot_dimension_numbers<[1], [0], [0], [1], [0, 0, 1, 1], [], []>, precision = #tpu.contract_precision<fp32>} : vector<8x16xf32>, vector<16x8xf32>, vector<8x8xf32> -> vector<8x8xf32>
    %c0_12 = arith.constant 0 : index
    %c0_13 = arith.constant 0 : index
    %c0_14 = arith.constant 0 : index
    %11 = vector.load %arg5[%c0_12, %c0_13, %c0_14] : memref<8x16x16xf32, #tpu.memory_space<vmem>>, vector<1x16x16xf32>
    %12 = vector.shape_cast %11 : vector<1x16x16xf32> to vector<16x16xf32>
    %cst_15 = arith.constant dense<0.000000e+00> : vector<8x16xf32>
    %13 = tpu.matmul %1, %12, %cst_15 {dimension_numbers = #tpu.dot_dimension_numbers<[1], [0], [0], [1], [0, 0, 1, 1], [], []>, precision = #tpu.contract_precision<fp32>} : vector<8x16xf32>, vector<16x16xf32>, vector<8x16xf32> -> vector<8x16xf32>
    %cst_16 = arith.constant dense<0.000000e+00> : vector<8x8xf32>
    %14 = tpu.matmul %13, %3, %cst_16 {dimension_numbers = #tpu.dot_dimension_numbers<[1], [0], [0], [1], [0, 0, 1, 1], [], []>, precision = #tpu.contract_precision<fp32>} : vector<8x16xf32>, vector<16x8xf32>, vector<8x8xf32> -> vector<8x8xf32>
    %15 = vector.extract_strided_slice %8 {offsets = [0, 0], sizes = [8, 1], strides = [1, 1]} : vector<8x8xf32> to vector<8x1xf32>
    %16 = vector.broadcast %15 : vector<8x1xf32> to vector<8x8xf32>
    %17 = arith.addf %14, %16 : vector<8x8xf32>
    %18 = vector.extract_strided_slice %10 {offsets = [0, 0], sizes = [1, 8], strides = [1, 1]} : vector<8x8xf32> to vector<1x8xf32>
    %19 = vector.broadcast %18 : vector<1x8xf32> to vector<8x8xf32>
    %20 = arith.addf %17, %19 : vector<8x8xf32>
    %c0_17 = arith.constant 0 : index
    %c0_18 = arith.constant 0 : index
    %c0_19 = arith.constant 0 : index
    %c0_20 = arith.constant 0 : index
    %21 = vector.load %arg9[%c0_17, %c0_18, %c0_19, %c0_20] : memref<1x8x8x8xf32, #tpu.memory_space<vmem>>, vector<1x1x8x8xf32>
    %22 = vector.shape_cast %21 : vector<1x1x8x8xf32> to vector<8x8xf32>
    %23 = vector.shape_cast %20 : vector<8x8xf32> to vector<1x1x8x8xf32>
    tpu.vector_store %arg9[%c0_17, %c0_18, %c0_19, %c0_20], %23 {strides = array<i32>} : memref<1x8x8x8xf32, #tpu.memory_space<vmem>>, vector<1x1x8x8xf32>,
    %c1 = arith.constant 1 : index
    %c0_21 = arith.constant 0 : index
    %c0_22 = arith.constant 0 : index
    %24 = vector.load %arg5[%c1, %c0_21, %c0_22] : memref<8x16x16xf32, #tpu.memory_space<vmem>>, vector<1x16x16xf32>
    %25 = vector.shape_cast %24 : vector<1x16x16xf32> to vector<16x16xf32>
    %cst_23 = arith.constant dense<0.000000e+00> : vector<8x16xf32>
    %26 = tpu.matmul %1, %25, %cst_23 {dimension_numbers = #tpu.dot_dimension_numbers<[1], [0], [0], [1], [0, 0, 1, 1], [], []>, precision = #tpu.contract_precision<fp32>} : vector<8x16xf32>, vector<16x16xf32>, vector<8x16xf32> -> vector<8x16xf32>
    %cst_24 = arith.constant dense<0.000000e+00> : vector<8x8xf32>
    %27 = tpu.matmul %26, %3, %cst_24 {dimension_numbers = #tpu.dot_dimension_numbers<[1], [0], [0], [1], [0, 0, 1, 1], [], []>, precision = #tpu.contract_precision<fp32>} : vector<8x16xf32>, vector<16x8xf32>, vector<8x8xf32> -> vector<8x8xf32>
    %28 = vector.extract_strided_slice %8 {offsets = [0, 1], sizes = [8, 1], strides = [1, 1]} : vector<8x8xf32> to vector<8x1xf32>
    %29 = vector.broadcast %28 : vector<8x1xf32> to vector<8x8xf32>
    %30 = arith.addf %27, %29 : vector<8x8xf32>
    %31 = vector.extract_strided_slice %10 {offsets = [1, 0], sizes = [1, 8], strides = [1, 1]} : vector<8x8xf32> to vector<1x8xf32>
    %32 = vector.broadcast %31 : vector<1x8xf32> to vector<8x8xf32>
    %33 = arith.addf %30, %32 : vector<8x8xf32>
    %c0_25 = arith.constant 0 : index
    %c1_26 = arith.constant 1 : index
    %c0_27 = arith.constant 0 : index
    %c0_28 = arith.constant 0 : index
    %34 = vector.load %arg9[%c0_25, %c1_26, %c0_27, %c0_28] : memref<1x8x8x8xf32, #tpu.memory_space<vmem>>, vector<1x1x8x8xf32>
    %35 = vector.shape_cast %34 : vector<1x1x8x8xf32> to vector<8x8xf32>
    %36 = vector.shape_cast %33 : vector<8x8xf32> to vector<1x1x8x8xf32>
    tpu.vector_store %arg9[%c0_25, %c1_26, %c0_27, %c0_28], %36 {strides = array<i32>} : memref<1x8x8x8xf32, #tpu.memory_space<vmem>>, vector<1x1x8x8xf32>,
    %c2 = arith.constant 2 : index
    %c0_29 = arith.constant 0 : index
    %c0_30 = arith.constant 0 : index
    %37 = vector.load %arg5[%c2, %c0_29, %c0_30] : memref<8x16x16xf32, #tpu.memory_space<vmem>>, vector<1x16x16xf32>
    %38 = vector.shape_cast %37 : vector<1x16x16xf32> to vector<16x16xf32>
    %cst_31 = arith.constant dense<0.000000e+00> : vector<8x16xf32>
    %39 = tpu.matmul %1, %38, %cst_31 {dimension_numbers = #tpu.dot_dimension_numbers<[1], [0], [0], [1], [0, 0, 1, 1], [], []>, precision = #tpu.contract_precision<fp32>} : vector<8x16xf32>, vector<16x16xf32>, vector<8x16xf32> -> vector<8x16xf32>
    %cst_32 = arith.constant dense<0.000000e+00> : vector<8x8xf32>
    %40 = tpu.matmul %39, %3, %cst_32 {dimension_numbers = #tpu.dot_dimension_numbers<[1], [0], [0], [1], [0, 0, 1, 1], [], []>, precision = #tpu.contract_precision<fp32>} : vector<8x16xf32>, vector<16x8xf32>, vector<8x8xf32> -> vector<8x8xf32>
    %41 = vector.extract_strided_slice %8 {offsets = [0, 2], sizes = [8, 1], strides = [1, 1]} : vector<8x8xf32> to vector<8x1xf32>
    %42 = vector.broadcast %41 : vector<8x1xf32> to vector<8x8xf32>
    %43 = arith.addf %40, %42 : vector<8x8xf32>
    %44 = vector.extract_strided_slice %10 {offsets = [2, 0], sizes = [1, 8], strides = [1, 1]} : vector<8x8xf32> to vector<1x8xf32>
    %45 = vector.broadcast %44 : vector<1x8xf32> to vector<8x8xf32>
    %46 = arith.addf %43, %45 : vector<8x8xf32>
    %c0_33 = arith.constant 0 : index
    %c2_34 = arith.constant 2 : index
    %c0_35 = arith.constant 0 : index
    %c0_36 = arith.constant 0 : index
    %47 = vector.load %arg9[%c0_33, %c2_34, %c0_35, %c0_36] : memref<1x8x8x8xf32, #tpu.memory_space<vmem>>, vector<1x1x8x8xf32>
    %48 = vector.shape_cast %47 : vector<1x1x8x8xf32> to vector<8x8xf32>
    %49 = vector.shape_cast %46 : vector<8x8xf32> to vector<1x1x8x8xf32>
    tpu.vector_store %arg9[%c0_33, %c2_34, %c0_35, %c0_36], %49 {strides = array<i32>} : memref<1x8x8x8xf32, #tpu.memory_space<vmem>>, vector<1x1x8x8xf32>,
    %c3 = arith.constant 3 : index
    %c0_37 = arith.constant 0 : index
    %c0_38 = arith.constant 0 : index
    %50 = vector.load %arg5[%c3, %c0_37, %c0_38] : memref<8x16x16xf32, #tpu.memory_space<vmem>>, vector<1x16x16xf32>
    %51 = vector.shape_cast %50 : vector<1x16x16xf32> to vector<16x16xf32>
    %cst_39 = arith.constant dense<0.000000e+00> : vector<8x16xf32>
    %52 = tpu.matmul %1, %51, %cst_39 {dimension_numbers = #tpu.dot_dimension_numbers<[1], [0], [0], [1], [0, 0, 1, 1], [], []>, precision = #tpu.contract_precision<fp32>} : vector<8x16xf32>, vector<16x16xf32>, vector<8x16xf32> -> vector<8x16xf32>
    %cst_40 = arith.constant dense<0.000000e+00> : vector<8x8xf32>
    %53 = tpu.matmul %52, %3, %cst_40 {dimension_numbers = #tpu.dot_dimension_numbers<[1], [0], [0], [1], [0, 0, 1, 1], [], []>, precision = #tpu.contract_precision<fp32>} : vector<8x16xf32>, vector<16x8xf32>, vector<8x8xf32> -> vector<8x8xf32>
    %54 = vector.extract_strided_slice %8 {offsets = [0, 3], sizes = [8, 1], strides = [1, 1]} : vector<8x8xf32> to vector<8x1xf32>
    %55 = vector.broadcast %54 : vector<8x1xf32> to vector<8x8xf32>
    %56 = arith.addf %53, %55 : vector<8x8xf32>
    %57 = vector.extract_strided_slice %10 {offsets = [3, 0], sizes = [1, 8], strides = [1, 1]} : vector<8x8xf32> to vector<1x8xf32>
    %58 = vector.broadcast %57 : vector<1x8xf32> to vector<8x8xf32>
    %59 = arith.addf %56, %58 : vector<8x8xf32>
    %c0_41 = arith.constant 0 : index
    %c3_42 = arith.constant 3 : index
    %c0_43 = arith.constant 0 : index
    %c0_44 = arith.constant 0 : index
    %60 = vector.load %arg9[%c0_41, %c3_42, %c0_43, %c0_44] : memref<1x8x8x8xf32, #tpu.memory_space<vmem>>, vector<1x1x8x8xf32>
    %61 = vector.shape_cast %60 : vector<1x1x8x8xf32> to vector<8x8xf32>
    %62 = vector.shape_cast %59 : vector<8x8xf32> to vector<1x1x8x8xf32>
    tpu.vector_store %arg9[%c0_41, %c3_42, %c0_43, %c0_44], %62 {strides = array<i32>} : memref<1x8x8x8xf32, #tpu.memory_space<vmem>>, vector<1x1x8x8xf32>,
    %c4 = arith.constant 4 : index
    %c0_45 = arith.constant 0 : index
    %c0_46 = arith.constant 0 : index
    %63 = vector.load %arg5[%c4, %c0_45, %c0_46] : memref<8x16x16xf32, #tpu.memory_space<vmem>>, vector<1x16x16xf32>
    %64 = vector.shape_cast %63 : vector<1x16x16xf32> to vector<16x16xf32>
    %cst_47 = arith.constant dense<0.000000e+00> : vector<8x16xf32>
    %65 = tpu.matmul %1, %64, %cst_47 {dimension_numbers = #tpu.dot_dimension_numbers<[1], [0], [0], [1], [0, 0, 1, 1], [], []>, precision = #tpu.contract_precision<fp32>} : vector<8x16xf32>, vector<16x16xf32>, vector<8x16xf32> -> vector<8x16xf32>
    %cst_48 = arith.constant dense<0.000000e+00> : vector<8x8xf32>
    %66 = tpu.matmul %65, %3, %cst_48 {dimension_numbers = #tpu.dot_dimension_numbers<[1], [0], [0], [1], [0, 0, 1, 1], [], []>, precision = #tpu.contract_precision<fp32>} : vector<8x16xf32>, vector<16x8xf32>, vector<8x8xf32> -> vector<8x8xf32>
    %67 = vector.extract_strided_slice %8 {offsets = [0, 4], sizes = [8, 1], strides = [1, 1]} : vector<8x8xf32> to vector<8x1xf32>
    %68 = vector.broadcast %67 : vector<8x1xf32> to vector<8x8xf32>
    %69 = arith.addf %66, %68 : vector<8x8xf32>
    %70 = vector.extract_strided_slice %10 {offsets = [4, 0], sizes = [1, 8], strides = [1, 1]} : vector<8x8xf32> to vector<1x8xf32>
    %71 = vector.broadcast %70 : vector<1x8xf32> to vector<8x8xf32>
    %72 = arith.addf %69, %71 : vector<8x8xf32>
    %c0_49 = arith.constant 0 : index
    %c4_50 = arith.constant 4 : index
    %c0_51 = arith.constant 0 : index
    %c0_52 = arith.constant 0 : index
    %73 = vector.load %arg9[%c0_49, %c4_50, %c0_51, %c0_52] : memref<1x8x8x8xf32, #tpu.memory_space<vmem>>, vector<1x1x8x8xf32>
    %74 = vector.shape_cast %73 : vector<1x1x8x8xf32> to vector<8x8xf32>
    %75 = vector.shape_cast %72 : vector<8x8xf32> to vector<1x1x8x8xf32>
    tpu.vector_store %arg9[%c0_49, %c4_50, %c0_51, %c0_52], %75 {strides = array<i32>} : memref<1x8x8x8xf32, #tpu.memory_space<vmem>>, vector<1x1x8x8xf32>,
    %c5 = arith.constant 5 : index
    %c0_53 = arith.constant 0 : index
    %c0_54 = arith.constant 0 : index
    %76 = vector.load %arg5[%c5, %c0_53, %c0_54] : memref<8x16x16xf32, #tpu.memory_space<vmem>>, vector<1x16x16xf32>
    %77 = vector.shape_cast %76 : vector<1x16x16xf32> to vector<16x16xf32>
    %cst_55 = arith.constant dense<0.000000e+00> : vector<8x16xf32>
    %78 = tpu.matmul %1, %77, %cst_55 {dimension_numbers = #tpu.dot_dimension_numbers<[1], [0], [0], [1], [0, 0, 1, 1], [], []>, precision = #tpu.contract_precision<fp32>} : vector<8x16xf32>, vector<16x16xf32>, vector<8x16xf32> -> vector<8x16xf32>
    %cst_56 = arith.constant dense<0.000000e+00> : vector<8x8xf32>
    %79 = tpu.matmul %78, %3, %cst_56 {dimension_numbers = #tpu.dot_dimension_numbers<[1], [0], [0], [1], [0, 0, 1, 1], [], []>, precision = #tpu.contract_precision<fp32>} : vector<8x16xf32>, vector<16x8xf32>, vector<8x8xf32> -> vector<8x8xf32>
    %80 = vector.extract_strided_slice %8 {offsets = [0, 5], sizes = [8, 1], strides = [1, 1]} : vector<8x8xf32> to vector<8x1xf32>
    %81 = vector.broadcast %80 : vector<8x1xf32> to vector<8x8xf32>
    %82 = arith.addf %79, %81 : vector<8x8xf32>
    %83 = vector.extract_strided_slice %10 {offsets = [5, 0], sizes = [1, 8], strides = [1, 1]} : vector<8x8xf32> to vector<1x8xf32>
    %84 = vector.broadcast %83 : vector<1x8xf32> to vector<8x8xf32>
    %85 = arith.addf %82, %84 : vector<8x8xf32>
    %c0_57 = arith.constant 0 : index
    %c5_58 = arith.constant 5 : index
    %c0_59 = arith.constant 0 : index
    %c0_60 = arith.constant 0 : index
    %86 = vector.load %arg9[%c0_57, %c5_58, %c0_59, %c0_60] : memref<1x8x8x8xf32, #tpu.memory_space<vmem>>, vector<1x1x8x8xf32>
    %87 = vector.shape_cast %86 : vector<1x1x8x8xf32> to vector<8x8xf32>
    %88 = vector.shape_cast %85 : vector<8x8xf32> to vector<1x1x8x8xf32>
    tpu.vector_store %arg9[%c0_57, %c5_58, %c0_59, %c0_60], %88 {strides = array<i32>} : memref<1x8x8x8xf32, #tpu.memory_space<vmem>>, vector<1x1x8x8xf32>,
    %c6 = arith.constant 6 : index
    %c0_61 = arith.constant 0 : index
    %c0_62 = arith.constant 0 : index
    %89 = vector.load %arg5[%c6, %c0_61, %c0_62] : memref<8x16x16xf32, #tpu.memory_space<vmem>>, vector<1x16x16xf32>
    %90 = vector.shape_cast %89 : vector<1x16x16xf32> to vector<16x16xf32>
    %cst_63 = arith.constant dense<0.000000e+00> : vector<8x16xf32>
    %91 = tpu.matmul %1, %90, %cst_63 {dimension_numbers = #tpu.dot_dimension_numbers<[1], [0], [0], [1], [0, 0, 1, 1], [], []>, precision = #tpu.contract_precision<fp32>} : vector<8x16xf32>, vector<16x16xf32>, vector<8x16xf32> -> vector<8x16xf32>
    %cst_64 = arith.constant dense<0.000000e+00> : vector<8x8xf32>
    %92 = tpu.matmul %91, %3, %cst_64 {dimension_numbers = #tpu.dot_dimension_numbers<[1], [0], [0], [1], [0, 0, 1, 1], [], []>, precision = #tpu.contract_precision<fp32>} : vector<8x16xf32>, vector<16x8xf32>, vector<8x8xf32> -> vector<8x8xf32>
    %93 = vector.extract_strided_slice %8 {offsets = [0, 6], sizes = [8, 1], strides = [1, 1]} : vector<8x8xf32> to vector<8x1xf32>
    %94 = vector.broadcast %93 : vector<8x1xf32> to vector<8x8xf32>
    %95 = arith.addf %92, %94 : vector<8x8xf32>
    %96 = vector.extract_strided_slice %10 {offsets = [6, 0], sizes = [1, 8], strides = [1, 1]} : vector<8x8xf32> to vector<1x8xf32>
    %97 = vector.broadcast %96 : vector<1x8xf32> to vector<8x8xf32>
    %98 = arith.addf %95, %97 : vector<8x8xf32>
    %c0_65 = arith.constant 0 : index
    %c6_66 = arith.constant 6 : index
    %c0_67 = arith.constant 0 : index
    %c0_68 = arith.constant 0 : index
    %99 = vector.load %arg9[%c0_65, %c6_66, %c0_67, %c0_68] : memref<1x8x8x8xf32, #tpu.memory_space<vmem>>, vector<1x1x8x8xf32>
    %100 = vector.shape_cast %99 : vector<1x1x8x8xf32> to vector<8x8xf32>
    %101 = vector.shape_cast %98 : vector<8x8xf32> to vector<1x1x8x8xf32>
    tpu.vector_store %arg9[%c0_65, %c6_66, %c0_67, %c0_68], %101 {strides = array<i32>} : memref<1x8x8x8xf32, #tpu.memory_space<vmem>>, vector<1x1x8x8xf32>,
    %c7 = arith.constant 7 : index
    %c0_69 = arith.constant 0 : index
    %c0_70 = arith.constant 0 : index
    %102 = vector.load %arg5[%c7, %c0_69, %c0_70] : memref<8x16x16xf32, #tpu.memory_space<vmem>>, vector<1x16x16xf32>
    %103 = vector.shape_cast %102 : vector<1x16x16xf32> to vector<16x16xf32>
    %cst_71 = arith.constant dense<0.000000e+00> : vector<8x16xf32>
    %104 = tpu.matmul %1, %103, %cst_71 {dimension_numbers = #tpu.dot_dimension_numbers<[1], [0], [0], [1], [0, 0, 1, 1], [], []>, precision = #tpu.contract_precision<fp32>} : vector<8x16xf32>, vector<16x16xf32>, vector<8x16xf32> -> vector<8x16xf32>
    %cst_72 = arith.constant dense<0.000000e+00> : vector<8x8xf32>
    %105 = tpu.matmul %104, %3, %cst_72 {dimension_numbers = #tpu.dot_dimension_numbers<[1], [0], [0], [1], [0, 0, 1, 1], [], []>, precision = #tpu.contract_precision<fp32>} : vector<8x16xf32>, vector<16x8xf32>, vector<8x8xf32> -> vector<8x8xf32>
    %106 = vector.extract_strided_slice %8 {offsets = [0, 7], sizes = [8, 1], strides = [1, 1]} : vector<8x8xf32> to vector<8x1xf32>
    %107 = vector.broadcast %106 : vector<8x1xf32> to vector<8x8xf32>
    %108 = arith.addf %105, %107 : vector<8x8xf32>
    %109 = vector.extract_strided_slice %10 {offsets = [7, 0], sizes = [1, 8], strides = [1, 1]} : vector<8x8xf32> to vector<1x8xf32>
    %110 = vector.broadcast %109 : vector<1x8xf32> to vector<8x8xf32>
    %111 = arith.addf %108, %110 : vector<8x8xf32>
    %c0_73 = arith.constant 0 : index
    %c7_74 = arith.constant 7 : index
    %c0_75 = arith.constant 0 : index
    %c0_76 = arith.constant 0 : index
    %112 = vector.load %arg9[%c0_73, %c7_74, %c0_75, %c0_76] : memref<1x8x8x8xf32, #tpu.memory_space<vmem>>, vector<1x1x8x8xf32>
    %113 = vector.shape_cast %112 : vector<1x1x8x8xf32> to vector<8x8xf32>
    %114 = vector.shape_cast %111 : vector<8x8xf32> to vector<1x1x8x8xf32>
    tpu.vector_store %arg9[%c0_73, %c7_74, %c0_75, %c0_76], %114 {strides = array<i32>} : memref<1x8x8x8xf32, #tpu.memory_space<vmem>>, vector<1x1x8x8xf32>,
    return
  }
  func.func @transform_0(%arg0: i32, %arg1: i32, %arg2: i32) -> (i32, i32, i32) {
    %c0_i32 = arith.constant 0 : i32
    %c0_i32_0 = arith.constant 0 : i32
    return %arg0, %arg1, %c0_i32 : i32, i32, i32
  }
  func.func @transform_1(%arg0: i32, %arg1: i32, %arg2: i32) -> (i32, i32, i32) {
    %c0_i32 = arith.constant 0 : i32
    %c0_i32_0 = arith.constant 0 : i32
    return %arg0, %c0_i32, %arg2 : i32, i32, i32
  }
  func.func @transform_2(%arg0: i32, %arg1: i32, %arg2: i32) -> (i32, i32, i32) {
    %c0_i32 = arith.constant 0 : i32
    %c0_i32_0 = arith.constant 0 : i32
    %c0_i32_1 = arith.constant 0 : i32
    %c0_i32_2 = arith.constant 0 : i32
    return %c0_i32, %c0_i32_0, %c0_i32_1 : i32, i32, i32
  }
  func.func @transform_3(%arg0: i32, %arg1: i32, %arg2: i32) -> (i32, i32) {
    %c0_i32 = arith.constant 0 : i32
    %c0_i32_0 = arith.constant 0 : i32
    %c0_i32_1 = arith.constant 0 : i32
    return %c0_i32, %c0_i32_0 : i32, i32
  }
  func.func @transform_4(%arg0: i32, %arg1: i32, %arg2: i32) -> (i32, i32) {
    %c0_i32 = arith.constant 0 : i32
    %c0_i32_0 = arith.constant 0 : i32
    %c0_i32_1 = arith.constant 0 : i32
    return %c0_i32, %c0_i32_0 : i32, i32
  }
  func.func @transform_5(%arg0: i32, %arg1: i32, %arg2: i32) -> (i32, i32) {
    %c0_i32 = arith.constant 0 : i32
    %c0_i32_0 = arith.constant 0 : i32
    %c0_i32_1 = arith.constant 0 : i32
    return %c0_i32, %c0_i32_0 : i32, i32
  }
  func.func @transform_6(%arg0: i32, %arg1: i32, %arg2: i32) -> (i32, i32, i32, i32) {
    %c0_i32 = arith.constant 0 : i32
    %c0_i32_0 = arith.constant 0 : i32
    return %arg0, %c0_i32, %arg1, %arg2 : i32, i32, i32, i32
  }
}

</mosaic_0001>

<llo_original>
// kernel: tpu_custom_call.1
$region0: #{tpu_custom_call.1}
  #allocation0 [shape = 'u32[]', space=smem, size = 0x4, offset = 0x4, fixed_abs, tag = 'smem constant byte address 0x4 - core index']
  #allocation1 [shape = 'u32[72,128]{1,0:T(1,128)}', space=vmem, size = 0x9000, scoped, tag = 'internal scratch']
  %s0 = inlined_call_operand.vmem [shape: f32[2,8,16], index: 0, kind: input, shape index: {}]
  %s1 = inlined_call_operand.vmem [shape: f32[2,16,8], index: 1, kind: input, shape index: {}]
  %s2 = inlined_call_operand.hbm [shape: f32[8,16,16], index: 2, kind: input, shape index: {}]
  %s3 = inlined_call_operand.vmem [shape: f32[16,8], index: 3, kind: input, shape index: {}]
  %s4 = inlined_call_operand.vmem [shape: f32[8,16], index: 4, kind: input, shape index: {}]
  %s5 = inlined_call_operand.vmem [shape: f32[1,8], index: 5, kind: input, shape index: {}]
  %s6 = inlined_call_operand.hbm [shape: f32[2,8,8,8], index: 6, kind: output, shape index: {}]
  %s7 = sld [smem:[#allocation0]]
  $region61: #{tpu_custom_call.1} parent=0
    _
  %s9 = ssub.s32 1, %s7
  %s10 = scalar_select 0, %s9, %s7
  $region1: #{tpu_custom_call.1} parent=0
    #allocation2 [shape = 'u8[65536]{0}', space=vmem, size = 0x10000, scoped, tag = 'input window, operand 2, single buffered']
    #allocation3 [shape = 's32[2]{0}', space=sflag, size = 0x8, scoped, tag = 'scoped memory for tpu_custom_call.1']
    #allocation4 [shape = 's32[2]{0}', space=sflag, size = 0x8, scoped, tag = 'scoped memory for tpu_custom_call.1']
    #allocation5 [shape = 'u8[65536]{0}', space=vmem, size = 0x10000, scoped, tag = 'output window, operand 0']
    %11 = vsyncpa [#allocation3], 0
    %12 = vsyncpa [#allocation4], 0
    %s13 = scalar_lea.sflag [#allocation4], 1
    %14 = vsyncpa %s13, 0
    loop: start=0, step=1, limit=4
    $region2: #{tpu_custom_call.1} parent=1 // loop_pre_header
      _
    $region3: #{tpu_custom_call.1} parent=1 // loop_header
      %s16 = sphi 0, %s20
      %p17 = scmp.ge.s32.totalorder %s16, 4
      %s23 = sphi 0, %s42
      %s24 = sphi 0, %s38
      %s25 = sphi 0, %s34
      %s26 = sphi 0, %s23
      %s27 = sphi 0, %s24
      %s28 = sphi 0, %s25
      %s29 = sphi 0, %s26
      %s30 = sphi 0, %s27
      %s31 = sphi 0, %s28
      %s47 = sphi 0, %s49
      %s50 = sphi 0, %s47
      %s51 = sphi 0, %s50
      %s67 = sphi 0, %s51
      %s75 = sphi 0, %s77
      %s78 = sphi 0, %s75
      %s79 = sphi 0, %s78
      %s95 = sphi 0, %s79
      %s99 = sphi 0, %s99
      %s101 = sphi 0, %s99
      %s102 = sphi 0, %s101
      %s116 = sphi 0, %s102
      %s120 = sphi 0, %s120
      %s122 = sphi 0, %s120
      %s123 = sphi 0, %s122
      %s137 = sphi 0, %s123
      %s141 = sphi 0, %s141
      %s143 = sphi 0, %s141
      %s144 = sphi 0, %s143
      %s158 = sphi 0, %s144
      %s162 = sphi 0, %s162
      %s164 = sphi 0, %s162
      %s165 = sphi 0, %s164
      %s179 = sphi 0, %s165
      %s189 = sphi 0, %s191
      %s192 = sphi 0, %s189
      %s193 = sphi 0, %s192
      %s209 = sphi 0, %s193
    $region4: #{tpu_custom_call.1} parent=1 // loop_header_branch
      %19 = sbr.rel (%p17) target = $region8
    $region5: #{tpu_custom_call.1} parent=1 // loop_body
      %s21 = ssub.s32 %s16, 1
      %s22 = ssub.s32 %s16, 2
      %s32 = sadd.s32 1, %s25
      %p33 = scmp.ge.s32.totalorder %s32, 1
      %s34 = scalar_select %p33, 0, %s32
      %s35 = sadd.s32 1, %s24
      %s36 = scalar_select %p33, %s35, %s24
      %p37 = scmp.ge.s32.totalorder %s36, 1
      %s38 = scalar_select %p37, 0, %s36
      %s39 = sadd.s32 1, %s23
      %s40 = scalar_select %p37, %s39, %s23
      %p41 = scmp.ge.s32.totalorder %s40, 2
      %s42 = scalar_select %p41, 0, %s40
      %s43 = ssub.s32 %s23, %s42
      %s44 = ssub.s32 %s24, %s38
      %s45 = sor.u32 %s43, %s44
      %p46 = scmp.eq.s32.totalorder %s45, 0
      %s48 = sadd.s32 %s47, 1
      %s49 = scalar_select %p46, %s47, %s48
      %p52 = pneg %p46
      %p53 = scmp.eq.s32.totalorder %s16, 1
      %p54 = por %p52, %p53
      %p55 = scmp.ne.s32.totalorder %s47, %s50
      %p56 = scmp.eq.s32.totalorder %s16, 0
      %p57 = por %p55, %p56
      %p58 = scmp.ne.s32.totalorder %s47, %s50
      %p59 = scmp.eq.s32.totalorder %s21, 1
      %p60 = por %p58, %p59
      %p61 = scmp.ne.s32.totalorder %s50, %s51
      %p62 = scmp.eq.s32.totalorder %s21, 0
      %p63 = por %p61, %p62
      %p64 = scmp.ne.s32.totalorder %s50, %s51
      %p65 = scmp.eq.s32.totalorder %s22, 1
      %p66 = por %p64, %p65
      %p68 = scmp.ne.s32.totalorder %s51, %s67
      %p69 = scmp.eq.s32.totalorder %s22, 0
      %p70 = por %p68, %p69
      %s71 = ssub.s32 %s23, %s42
      %s72 = ssub.s32 %s25, %s34
      %s73 = sor.u32 %s71, %s72
      %p74 = scmp.eq.s32.totalorder %s73, 0
      %s76 = sadd.s32 %s75, 1
      %s77 = scalar_select %p74, %s75, %s76
      %p80 = pneg %p74
      %p81 = scmp.eq.s32.totalorder %s16, 1
      %p82 = por %p80, %p81
      %p83 = scmp.ne.s32.totalorder %s75, %s78
      %p84 = scmp.eq.s32.totalorder %s16, 0
      %p85 = por %p83, %p84
      %p86 = scmp.ne.s32.totalorder %s75, %s78
      %p87 = scmp.eq.s32.totalorder %s21, 1
      %p88 = por %p86, %p87
      %p89 = scmp.ne.s32.totalorder %s78, %s79
      %p90 = scmp.eq.s32.totalorder %s21, 0
      %p91 = por %p89, %p90
      %p92 = scmp.ne.s32.totalorder %s78, %s79
      %p93 = scmp.eq.s32.totalorder %s22, 1
      %p94 = por %p92, %p93
      %p96 = scmp.ne.s32.totalorder %s79, %s95
      %p97 = scmp.eq.s32.totalorder %s22, 0
      %p98 = por %p96, %p97
      %s100 = sadd.s32 %s99, 1
      %p103 = scmp.eq.s32.totalorder %s16, 1
      %p104 = scmp.ne.s32.totalorder %s99, %s101
      %p105 = scmp.eq.s32.totalorder %s16, 0
      %p106 = por %p104, %p105
      %p107 = scmp.ne.s32.totalorder %s99, %s101
      %p108 = scmp.eq.s32.totalorder %s21, 1
      %p109 = por %p107, %p108
      %p110 = scmp.ne.s32.totalorder %s101, %s102
      %p111 = scmp.eq.s32.totalorder %s21, 0
      %p112 = por %p110, %p111
      %p113 = scmp.ne.s32.totalorder %s101, %s102
      %p114 = scmp.eq.s32.totalorder %s22, 1
      %p115 = por %p113, %p114
      %p117 = scmp.ne.s32.totalorder %s102, %s116
      %p118 = scmp.eq.s32.totalorder %s22, 0
      %p119 = por %p117, %p118
      %s121 = sadd.s32 %s120, 1
      %p124 = scmp.eq.s32.totalorder %s16, 1
      %p125 = scmp.ne.s32.totalorder %s120, %s122
      %p126 = scmp.eq.s32.totalorder %s16, 0
      %p127 = por %p125, %p126
      %p128 = scmp.ne.s32.totalorder %s120, %s122
      %p129 = scmp.eq.s32.totalorder %s21, 1
      %p130 = por %p128, %p129
      %p131 = scmp.ne.s32.totalorder %s122, %s123
      %p132 = scmp.eq.s32.totalorder %s21, 0
      %p133 = por %p131, %p132
      %p134 = scmp.ne.s32.totalorder %s122, %s123
      %p135 = scmp.eq.s32.totalorder %s22, 1
      %p136 = por %p134, %p135
      %p138 = scmp.ne.s32.totalorder %s123, %s137
      %p139 = scmp.eq.s32.totalorder %s22, 0
      %p140 = por %p138, %p139
      %s142 = sadd.s32 %s141, 1
      %p145 = scmp.eq.s32.totalorder %s16, 1
      %p146 = scmp.ne.s32.totalorder %s141, %s143
      %p147 = scmp.eq.s32.totalorder %s16, 0
      %p148 = por %p146, %p147
      %p149 = scmp.ne.s32.totalorder %s141, %s143
      %p150 = scmp.eq.s32.totalorder %s21, 1
      %p151 = por %p149, %p150
      %p152 = scmp.ne.s32.totalorder %s143, %s144
      %p153 = scmp.eq.s32.totalorder %s21, 0
      %p154 = por %p152, %p153
      %p155 = scmp.ne.s32.totalorder %s143, %s144
      %p156 = scmp.eq.s32.totalorder %s22, 1
      %p157 = por %p155, %p156
      %p159 = scmp.ne.s32.totalorder %s144, %s158
      %p160 = scmp.eq.s32.totalorder %s22, 0
      %p161 = por %p159, %p160
      %s163 = sadd.s32 %s162, 1
      %p166 = scmp.eq.s32.totalorder %s16, 1
      %p167 = scmp.ne.s32.totalorder %s162, %s164
      %p168 = scmp.eq.s32.totalorder %s16, 0
      %p169 = por %p167, %p168
      %p170 = scmp.ne.s32.totalorder %s162, %s164
      %p171 = scmp.eq.s32.totalorder %s21, 1
      %p172 = por %p170, %p171
      %p173 = scmp.ne.s32.totalorder %s164, %s165
      %p174 = scmp.eq.s32.totalorder %s21, 0
      %p175 = por %p173, %p174
      %p176 = scmp.ne.s32.totalorder %s164, %s165
      %p177 = scmp.eq.s32.totalorder %s22, 1
      %p178 = por %p176, %p177
      %p180 = scmp.ne.s32.totalorder %s165, %s179
      %p181 = scmp.eq.s32.totalorder %s22, 0
      %p182 = por %p180, %p181
      %s183 = ssub.s32 %s23, %s42
      %s184 = ssub.s32 %s24, %s38
      %s185 = sor.u32 %s183, %s184
      %s186 = ssub.s32 %s25, %s34
      %s187 = sor.u32 %s185, %s186
      %p188 = scmp.eq.s32.totalorder %s187, 0
      %s190 = sadd.s32 %s189, 1
      %s191 = scalar_select %p188, %s189, %s190
      %p194 = pneg %p188
      %p195 = scmp.eq.s32.totalorder %s16, 1
      %p196 = por %p194, %p195
      %p197 = scmp.ne.s32.totalorder %s189, %s192
      %p198 = scmp.eq.s32.totalorder %s16, 0
      %p199 = por %p197, %p198
      %p200 = scmp.ne.s32.totalorder %s189, %s192
      %p201 = scmp.eq.s32.totalorder %s21, 1
      %p202 = por %p200, %p201
      %p203 = scmp.ne.s32.totalorder %s192, %s193
      %p204 = scmp.eq.s32.totalorder %s21, 0
      %p205 = por %p203, %p204
      %p206 = scmp.ne.s32.totalorder %s192, %s193
      %p207 = scmp.eq.s32.totalorder %s22, 1
      %p208 = por %p206, %p207
      %p210 = scmp.ne.s32.totalorder %s193, %s209
      %p211 = scmp.eq.s32.totalorder %s22, 0
      %p212 = por %p210, %p211
      %p213 = scmp.le.s32.totalorder 1, %s16
      %p214 = scmp.lt.s32.totalorder %s16, 3
      %p215 = pnand %p213, %p214
      %p216 = pneg %p215
      // Predicated region
      $region9: #{tpu_custom_call.1} parent=5 // pred_check
        _
      $region10: #{tpu_custom_call.1} parent=5 // pred_check_branch
        %218 = sbr.rel (%p215) target = $region12
      $region11: #{tpu_custom_call.1} parent=5 // pred_region
        %s219 = ssub.s32 %s16, 1
        // Predicated region
        $region13: #{tpu_custom_call.1} parent=11 // pred_check
          %p220 = pneg %p112
        $region14: #{tpu_custom_call.1} parent=11 // pred_check_branch
          %222 = sbr.rel (%p220) target = $region16
        $region15: #{tpu_custom_call.1} parent=11 // pred_region
          %224 = vsyncadd [#allocation3], 0
          %s225 = sshll.u32 %s2, 4
          %s226 = int_to_ptr.hbm [resolvable:$true] %s225
          %s227 = sshll.u32 [#allocation2], 4
          %s228 = int_to_ptr.vmem [resolvable:$true] %s227
          %233 = dma.hbm_to_vmem [thread:$0]  %s226, 2048, %s228, [#allocation3], 128, 128, 8
        $region16: #{tpu_custom_call.1} parent=11 // pred_fallthru
          _
        // Predicated region
        $region17: #{tpu_custom_call.1} parent=11 // pred_check
          %p234 = pneg %p133
        $region18: #{tpu_custom_call.1} parent=11 // pred_check_branch
          %236 = sbr.rel (%p234) target = $region20
        $region19: #{tpu_custom_call.1} parent=11 // pred_region
          _
        $region20: #{tpu_custom_call.1} parent=11 // pred_fallthru
          _
        // Predicated region
        $region21: #{tpu_custom_call.1} parent=11 // pred_check
          %p237 = pneg %p154
        $region22: #{tpu_custom_call.1} parent=11 // pred_check_branch
          %239 = sbr.rel (%p237) target = $region24
        $region23: #{tpu_custom_call.1} parent=11 // pred_region
          _
        $region24: #{tpu_custom_call.1} parent=11 // pred_fallthru
          _
        // Predicated region
        $region25: #{tpu_custom_call.1} parent=11 // pred_check
          %p240 = pneg %p175
        $region26: #{tpu_custom_call.1} parent=11 // pred_check_branch
          %242 = sbr.rel (%p240) target = $region28
        $region27: #{tpu_custom_call.1} parent=11 // pred_region
          _
        $region28: #{tpu_custom_call.1} parent=11 // pred_fallthru
          _
      $region12: #{tpu_custom_call.1} parent=5 // pred_fallthru
        _
      %p243 = scmp.lt.s32.totalorder %s16, 2
      // Predicated region
      $region29: #{tpu_custom_call.1} parent=5 // pred_check
        %p244 = pneg %p243
      $region30: #{tpu_custom_call.1} parent=5 // pred_check_branch
        %246 = sbr.rel (%p244) target = $region32
      $region31: #{tpu_custom_call.1} parent=5 // pred_region
        // Predicated region
        $region33: #{tpu_custom_call.1} parent=31 // pred_check
          %p247 = pneg %p57
        $region34: #{tpu_custom_call.1} parent=31 // pred_check_branch
          %249 = sbr.rel (%p247) target = $region36
        $region35: #{tpu_custom_call.1} parent=31 // pred_region
          %p250 = scmp.lt.s32.totalorder %s23, 1
          %s251 = scalar_select %p250, %s23, 1
          %p252 = scmp.lt.s32.totalorder %s24, 0
          %s253 = scalar_select %p252, %s24, 0
          %s254 = sadd.s32 %s253, %s251
          %s255 = smul.addr %s254, 8
          %s256 = scalar_lea.vmem %s0, %s255
        $region36: #{tpu_custom_call.1} parent=31 // pred_fallthru
          _
        // Predicated region
        $region37: #{tpu_custom_call.1} parent=31 // pred_check
          %p257 = pneg %p85
        $region38: #{tpu_custom_call.1} parent=31 // pred_check_branch
          %259 = sbr.rel (%p257) target = $region40
        $region39: #{tpu_custom_call.1} parent=31 // pred_region
          %p260 = scmp.lt.s32.totalorder %s23, 1
          %s261 = scalar_select %p260, %s23, 1
          %p262 = scmp.lt.s32.totalorder %s25, 0
          %s263 = scalar_select %p262, %s25, 0
          %s264 = smul.addr %s261, 2
          %s265 = sadd.s32 %s263, %s264
          %s266 = smul.addr %s265, 8
          %s267 = scalar_lea.vmem %s1, %s266
        $region40: #{tpu_custom_call.1} parent=31 // pred_fallthru
          _
      $region32: #{tpu_custom_call.1} parent=5 // pred_fallthru
        _
      %p268 = scmp.le.s32.totalorder 1, %s16
      %p269 = scmp.lt.s32.totalorder %s16, 3
      %p270 = pnand %p268, %p269
      %p271 = pneg %p270
      // Predicated region
      $region41: #{tpu_custom_call.1} parent=5 // pred_check
        _
      $region42: #{tpu_custom_call.1} parent=5 // pred_check_branch
        %273 = sbr.rel (%p270) target = $region44
      $region43: #{tpu_custom_call.1} parent=5 // pred_region
        %s274 = ssub.s32 %s16, 1
        // Predicated region
        $region45: #{tpu_custom_call.1} parent=43 // pred_check
          %p275 = pneg %p112
        $region46: #{tpu_custom_call.1} parent=43 // pred_check_branch
          %277 = sbr.rel (%p275) target = $region48
        $region47: #{tpu_custom_call.1} parent=43 // pred_region
          %279 = dma.done [#allocation3], 2048
        $region48: #{tpu_custom_call.1} parent=43 // pred_fallthru
          _
        %p280 = scmp.lt.s32.totalorder %s26, 1
        %s281 = scalar_select %p280, %s26, 1
        %p282 = scmp.lt.s32.totalorder %s27, 0
        %s283 = scalar_select %p282, %s27, 0
        %s284 = sadd.s32 %s283, %s281
        %s285 = smul.addr %s284, 8
        %s286 = scalar_lea.vmem %s0, %s285
        %p287 = pneg %p63
        %p288 = pneg %p60
        %p289 = scmp.lt.s32.totalorder %s26, 1
        %s290 = scalar_select %p289, %s26, 1
        %p291 = scmp.lt.s32.totalorder %s28, 0
        %s292 = scalar_select %p291, %s28, 0
        %s293 = smul.addr %s290, 2
        %s294 = sadd.s32 %s292, %s293
        %s295 = smul.addr %s294, 8
        %s296 = scalar_lea.vmem %s1, %s295
        %p297 = pneg %p91
        %p298 = pneg %p88
        %p299 = pneg %p112
        %p300 = pneg %p109
        %p301 = pneg %p133
        %p302 = pneg %p130
        %p303 = pneg %p154
        %p304 = pneg %p151
        %p305 = pneg %p175
        %p306 = pneg %p172
        %p307 = pneg %p205
        %p308 = pneg %p202
        %s309 = sand.u32 %s192, 1
        %s310 = scalar_lea.sflag [#allocation4], %s309
        %s311 = sand.u32 %s192, 1
        %s312 = smul.addr %s311, 64
        %s313 = scalar_lea.vmem [#allocation5], %s312
        %p314 = scmp.lt.s32.totalorder %s26, 1
        %s315 = scalar_select %p314, %s26, 1
        %p316 = scmp.lt.s32.totalorder %s27, 0
        %s317 = scalar_select %p316, %s27, 0
        %s318 = sadd.s32 %s317, %s315
        %s319 = smul.addr %s318, 8
        %s320 = scalar_lea.vmem %s0, %s319
        %p321 = scmp.lt.s32.totalorder %s26, 1
        %s322 = scalar_select %p321, %s26, 1
        %p323 = scmp.lt.s32.totalorder %s28, 0
        %s324 = scalar_select %p323, %s28, 0
        %s325 = smul.addr %s322, 2
        %s326 = sadd.s32 %s324, %s325
        %s327 = smul.addr %s326, 8
        %s328 = scalar_lea.vmem %s1, %s327
        %v329 = vld [vmem:[%s320] sm:$0xff]
        %v330 = vld [vmem:[%s328] sm:$0xff]
        %v331 = vld [vmem:[%s328 + $0x8] sm:$0xff]
        %v332 = vld [vmem:[%s3] sm:$0xff]
        %v333 = vld [vmem:[%s3 + $0x8] sm:$0xff]
        %v334 = vld [vmem:[%s5] sm:$0x1]
        %v336 = vperm.slane %v334, 0
        %vm338 = vcmask 130048
        %v340 = vsel %vm338, %v329, 0
        %342 = vmatpush.msra.mxu0 0.0
        %343 = vmatpush.msra.mxu0 0.0
        %344 = vmatpush.msra.mxu0 0.0
        %345 = vmatpush.msra.mxu0 0.0
        %346 = vmatpush.msra.mxu0 0.0
        %347 = vmatpush.msra.mxu0 0.0
        %348 = vmatpush.msra.mxu0 0.0
        %349 = vmatpush.msra.mxu0 0.0
        %350 = vmatpush.msra.mxu0 0.0
        %351 = vmatpush.msra.mxu0 0.0
        %352 = vmatpush.msra.mxu0 0.0
        %353 = vmatpush.msra.mxu0 0.0
        %354 = vmatpush.msra.mxu0 0.0
        %355 = vmatpush.msra.mxu0 0.0
        %v356 = vand.u32 %v333, 4294901760
        %357 = vmatpush.msra.mxu0 %v356
        %v358 = vand.u32 %v332, 4294901760
        %359 = vmatpush.msra.mxu0 %v358
        %v360 = vand.u32 %v340, 4294901760
        %v361 = vsub.f32 %v340, %v360
        %v362 = vand.u32 %v361, 4294901760
        %v363 = vsub.f32 %v361, %v362
        %v364 = vand.u32 %v363, 4294901760
        %365 = vmatmul.f32.gmra.mxu0 %v364
        %v366 = vpop.f32.mrf.mxu0
        %v367 = vadd.f32 %v336, %v366
        %368 = vdwg.mxu0
        %369 = vmatpush.msra.mxu0 0.0
        %370 = vmatpush.msra.mxu0 0.0
        %371 = vmatpush.msra.mxu0 0.0
        %372 = vmatpush.msra.mxu0 0.0
        %373 = vmatpush.msra.mxu0 0.0
        %374 = vmatpush.msra.mxu0 0.0
        %375 = vmatpush.msra.mxu0 0.0
        %376 = vmatpush.msra.mxu0 0.0
        %377 = vmatpush.msra.mxu0 0.0
        %378 = vmatpush.msra.mxu0 0.0
        %379 = vmatpush.msra.mxu0 0.0
        %380 = vmatpush.msra.mxu0 0.0
        %381 = vmatpush.msra.mxu0 0.0
        %382 = vmatpush.msra.mxu0 0.0
        %v383 = vand.u32 %v333, 4294901760
        %v384 = vsub.f32 %v333, %v383
        %v385 = vand.u32 %v384, 4294901760
        %v386 = vsub.f32 %v384, %v385
        %v387 = vand.u32 %v386, 4294901760
        %388 = vmatpush.msra.mxu0 %v387
        %v389 = vand.u32 %v332, 4294901760
        %v390 = vsub.f32 %v332, %v389
        %v391 = vand.u32 %v390, 4294901760
        %v392 = vsub.f32 %v390, %v391
        %v393 = vand.u32 %v392, 4294901760
        %394 = vmatpush.msra.mxu0 %v393
        %v395 = vand.u32 %v340, 4294901760
        %396 = vmatmul.f32.gmra.mxu0 %v395
        %v397 = vpop.f32.mrf.mxu0
        %v398 = vadd.f32 %v367, %v397
        %399 = vdwg.mxu0
        %400 = vmatpush.msra.mxu0 0.0
        %401 = vmatpush.msra.mxu0 0.0
        %402 = vmatpush.msra.mxu0 0.0
        %403 = vmatpush.msra.mxu0 0.0
        %404 = vmatpush.msra.mxu0 0.0
        %405 = vmatpush.msra.mxu0 0.0
        %406 = vmatpush.msra.mxu0 0.0
        %407 = vmatpush.msra.mxu0 0.0
        %408 = vmatpush.msra.mxu0 0.0
        %409 = vmatpush.msra.mxu0 0.0
        %410 = vmatpush.msra.mxu0 0.0
        %411 = vmatpush.msra.mxu0 0.0
        %412 = vmatpush.msra.mxu0 0.0
        %413 = vmatpush.msra.mxu0 0.0
        %v414 = vand.u32 %v333, 4294901760
        %v415 = vsub.f32 %v333, %v414
        %416 = vmatpush.msra.mxu0 %v415
        %v417 = vand.u32 %v332, 4294901760
        %v418 = vsub.f32 %v332, %v417
        %419 = vmatpush.msra.mxu0 %v418
        %v420 = vand.u32 %v340, 4294901760
        %v421 = vsub.f32 %v340, %v420
        %422 = vmatmul.f32.gmra.mxu0 %v421
        %v423 = vpop.f32.mrf.mxu0
        %v424 = vadd.f32 %v398, %v423
        %425 = vdwg.mxu0
        %426 = vmatpush.msra.mxu0 0.0
        %427 = vmatpush.msra.mxu0 0.0
        %428 = vmatpush.msra.mxu0 0.0
        %429 = vmatpush.msra.mxu0 0.0
        %430 = vmatpush.msra.mxu0 0.0
        %431 = vmatpush.msra.mxu0 0.0
        %432 = vmatpush.msra.mxu0 0.0
        %433 = vmatpush.msra.mxu0 0.0
        %434 = vmatpush.msra.mxu0 0.0
        %435 = vmatpush.msra.mxu0 0.0
        %436 = vmatpush.msra.mxu0 0.0
        %437 = vmatpush.msra.mxu0 0.0
        %438 = vmatpush.msra.mxu0 0.0
        %439 = vmatpush.msra.mxu0 0.0
        %v440 = vand.u32 %v333, 4294901760
        %441 = vmatpush.msra.mxu0 %v440
        %v442 = vand.u32 %v332, 4294901760
        %443 = vmatpush.msra.mxu0 %v442
        %v444 = vand.u32 %v340, 4294901760
        %v445 = vsub.f32 %v340, %v444
        %v446 = vand.u32 %v445, 4294901760
        %447 = vmatmul.f32.gmra.mxu0 %v446
        %v448 = vpop.f32.mrf.mxu0
        %v449 = vadd.f32 %v424, %v448
        %450 = vdwg.mxu0
        %451 = vmatpush.msra.mxu0 0.0
        %452 = vmatpush.msra.mxu0 0.0
        %453 = vmatpush.msra.mxu0 0.0
        %454 = vmatpush.msra.mxu0 0.0
        %455 = vmatpush.msra.mxu0 0.0
        %456 = vmatpush.msra.mxu0 0.0
        %457 = vmatpush.msra.mxu0 0.0
        %458 = vmatpush.msra.mxu0 0.0
        %459 = vmatpush.msra.mxu0 0.0
        %460 = vmatpush.msra.mxu0 0.0
        %461 = vmatpush.msra.mxu0 0.0
        %462 = vmatpush.msra.mxu0 0.0
        %463 = vmatpush.msra.mxu0 0.0
        %464 = vmatpush.msra.mxu0 0.0
        %v465 = vand.u32 %v333, 4294901760
        %v466 = vsub.f32 %v333, %v465
        %v467 = vand.u32 %v466, 4294901760
        %468 = vmatpush.msra.mxu0 %v467
        %v469 = vand.u32 %v332, 4294901760
        %v470 = vsub.f32 %v332, %v469
        %v471 = vand.u32 %v470, 4294901760
        %472 = vmatpush.msra.mxu0 %v471
        %v473 = vand.u32 %v340, 4294901760
        %474 = vmatmul.f32.gmra.mxu0 %v473
        %v475 = vpop.f32.mrf.mxu0
        %v476 = vadd.f32 %v449, %v475
        %477 = vdwg.mxu0
        %478 = vmatpush.msra.mxu0 0.0
        %479 = vmatpush.msra.mxu0 0.0
        %480 = vmatpush.msra.mxu0 0.0
        %481 = vmatpush.msra.mxu0 0.0
        %482 = vmatpush.msra.mxu0 0.0
        %483 = vmatpush.msra.mxu0 0.0
        %484 = vmatpush.msra.mxu0 0.0
        %485 = vmatpush.msra.mxu0 0.0
        %486 = vmatpush.msra.mxu0 0.0
        %487 = vmatpush.msra.mxu0 0.0
        %488 = vmatpush.msra.mxu0 0.0
        %489 = vmatpush.msra.mxu0 0.0
        %490 = vmatpush.msra.mxu0 0.0
        %491 = vmatpush.msra.mxu0 0.0
        %v492 = vand.u32 %v333, 4294901760
        %493 = vmatpush.msra.mxu0 %v492
        %v494 = vand.u32 %v332, 4294901760
        %495 = vmatpush.msra.mxu0 %v494
        %v496 = vand.u32 %v340, 4294901760
        %497 = vmatmul.f32.gmra.mxu0 %v496
        %v498 = vpop.f32.mrf.mxu0
        %v499 = vadd.f32 %v476, %v498
        %500 = vdwg.mxu0
        %v501 = vld [vmem:[%s4] sm:$0xff]
        %v503 = vsel %vm338, %v501, 0
        %505 = vmatpush.msra.mxu0 0.0
        %506 = vmatpush.msra.mxu0 0.0
        %507 = vmatpush.msra.mxu0 0.0
        %508 = vmatpush.msra.mxu0 0.0
        %509 = vmatpush.msra.mxu0 0.0
        %510 = vmatpush.msra.mxu0 0.0
        %511 = vmatpush.msra.mxu0 0.0
        %512 = vmatpush.msra.mxu0 0.0
        %513 = vmatpush.msra.mxu0 0.0
        %514 = vmatpush.msra.mxu0 0.0
        %515 = vmatpush.msra.mxu0 0.0
        %516 = vmatpush.msra.mxu0 0.0
        %517 = vmatpush.msra.mxu0 0.0
        %518 = vmatpush.msra.mxu0 0.0
        %v519 = vand.u32 %v331, 4294901760
        %520 = vmatpush.msra.mxu0 %v519
        %v521 = vand.u32 %v330, 4294901760
        %522 = vmatpush.msra.mxu0 %v521
        %v523 = vand.u32 %v503, 4294901760
        %v524 = vsub.f32 %v503, %v523
        %v525 = vand.u32 %v524, 4294901760
        %v526 = vsub.f32 %v524, %v525
        %v527 = vand.u32 %v526, 4294901760
        %528 = vmatmul.f32.gmra.mxu0 %v527
        %v529 = vpop.f32.mrf.mxu0
        %v530 = vadd.f32 0.0, %v529
        %531 = vdwg.mxu0
        %532 = vmatpush.msra.mxu0 0.0
        %533 = vmatpush.msra.mxu0 0.0
        %534 = vmatpush.msra.mxu0 0.0
        %535 = vmatpush.msra.mxu0 0.0
        %536 = vmatpush.msra.mxu0 0.0
        %537 = vmatpush.msra.mxu0 0.0
        %538 = vmatpush.msra.mxu0 0.0
        %539 = vmatpush.msra.mxu0 0.0
        %540 = vmatpush.msra.mxu0 0.0
        %541 = vmatpush.msra.mxu0 0.0
        %542 = vmatpush.msra.mxu0 0.0
        %543 = vmatpush.msra.mxu0 0.0
        %544 = vmatpush.msra.mxu0 0.0
        %545 = vmatpush.msra.mxu0 0.0
        %v546 = vand.u32 %v331, 4294901760
        %v547 = vsub.f32 %v331, %v546
        %v548 = vand.u32 %v547, 4294901760
        %v549 = vsub.f32 %v547, %v548
        %v550 = vand.u32 %v549, 4294901760
        %551 = vmatpush.msra.mxu0 %v550
        %v552 = vand.u32 %v330, 4294901760
        %v553 = vsub.f32 %v330, %v552
        %v554 = vand.u32 %v553, 4294901760
        %v555 = vsub.f32 %v553, %v554
        %v556 = vand.u32 %v555, 4294901760
        %557 = vmatpush.msra.mxu0 %v556
        %v558 = vand.u32 %v503, 4294901760
        %559 = vmatmul.f32.gmra.mxu0 %v558
        %v560 = vpop.f32.mrf.mxu0
        %v561 = vadd.f32 %v530, %v560
        %562 = vdwg.mxu0
        %563 = vmatpush.msra.mxu0 0.0
        %564 = vmatpush.msra.mxu0 0.0
        %565 = vmatpush.msra.mxu0 0.0
        %566 = vmatpush.msra.mxu0 0.0
        %567 = vmatpush.msra.mxu0 0.0
        %568 = vmatpush.msra.mxu0 0.0
        %569 = vmatpush.msra.mxu0 0.0
        %570 = vmatpush.msra.mxu0 0.0
        %571 = vmatpush.msra.mxu0 0.0
        %572 = vmatpush.msra.mxu0 0.0
        %573 = vmatpush.msra.mxu0 0.0
        %574 = vmatpush.msra.mxu0 0.0
        %575 = vmatpush.msra.mxu0 0.0
        %576 = vmatpush.msra.mxu0 0.0
        %v577 = vand.u32 %v331, 4294901760
        %v578 = vsub.f32 %v331, %v577
        %579 = vmatpush.msra.mxu0 %v578
        %v580 = vand.u32 %v330, 4294901760
        %v581 = vsub.f32 %v330, %v580
        %582 = vmatpush.msra.mxu0 %v581
        %v583 = vand.u32 %v503, 4294901760
        %v584 = vsub.f32 %v503, %v583
        %585 = vmatmul.f32.gmra.mxu0 %v584
        %v586 = vpop.f32.mrf.mxu0
        %v587 = vadd.f32 %v561, %v586
        %588 = vdwg.mxu0
        %589 = vmatpush.msra.mxu0 0.0
        %590 = vmatpush.msra.mxu0 0.0
        %591 = vmatpush.msra.mxu0 0.0
        %592 = vmatpush.msra.mxu0 0.0
        %593 = vmatpush.msra.mxu0 0.0
        %594 = vmatpush.msra.mxu0 0.0
        %595 = vmatpush.msra.mxu0 0.0
        %596 = vmatpush.msra.mxu0 0.0
        %597 = vmatpush.msra.mxu0 0.0
        %598 = vmatpush.msra.mxu0 0.0
        %599 = vmatpush.msra.mxu0 0.0
        %600 = vmatpush.msra.mxu0 0.0
        %601 = vmatpush.msra.mxu0 0.0
        %602 = vmatpush.msra.mxu0 0.0
        %v603 = vand.u32 %v331, 4294901760
        %604 = vmatpush.msra.mxu0 %v603
        %v605 = vand.u32 %v330, 4294901760
        %606 = vmatpush.msra.mxu0 %v605
        %v607 = vand.u32 %v503, 4294901760
        %v608 = vsub.f32 %v503, %v607
        %v609 = vand.u32 %v608, 4294901760
        %610 = vmatmul.f32.gmra.mxu0 %v609
        %v611 = vpop.f32.mrf.mxu0
        %v612 = vadd.f32 %v587, %v611
        %613 = vdwg.mxu0
        %614 = vmatpush.msra.mxu0 0.0
        %615 = vmatpush.msra.mxu0 0.0
        %616 = vmatpush.msra.mxu0 0.0
        %617 = vmatpush.msra.mxu0 0.0
        %618 = vmatpush.msra.mxu0 0.0
        %619 = vmatpush.msra.mxu0 0.0
        %620 = vmatpush.msra.mxu0 0.0
        %621 = vmatpush.msra.mxu0 0.0
        %622 = vmatpush.msra.mxu0 0.0
        %623 = vmatpush.msra.mxu0 0.0
        %624 = vmatpush.msra.mxu0 0.0
        %625 = vmatpush.msra.mxu0 0.0
        %626 = vmatpush.msra.mxu0 0.0
        %627 = vmatpush.msra.mxu0 0.0
        %v628 = vand.u32 %v331, 4294901760
        %v629 = vsub.f32 %v331, %v628
        %v630 = vand.u32 %v629, 4294901760
        %631 = vmatpush.msra.mxu0 %v630
        %v632 = vand.u32 %v330, 4294901760
        %v633 = vsub.f32 %v330, %v632
        %v634 = vand.u32 %v633, 4294901760
        %635 = vmatpush.msra.mxu0 %v634
        %v636 = vand.u32 %v503, 4294901760
        %637 = vmatmul.f32.gmra.mxu0 %v636
        %v638 = vpop.f32.mrf.mxu0
        %v639 = vadd.f32 %v612, %v638
        %640 = vdwg.mxu0
        %641 = vmatpush.msra.mxu0 0.0
        %642 = vmatpush.msra.mxu0 0.0
        %643 = vmatpush.msra.mxu0 0.0
        %644 = vmatpush.msra.mxu0 0.0
        %645 = vmatpush.msra.mxu0 0.0
        %646 = vmatpush.msra.mxu0 0.0
        %647 = vmatpush.msra.mxu0 0.0
        %648 = vmatpush.msra.mxu0 0.0
        %649 = vmatpush.msra.mxu0 0.0
        %650 = vmatpush.msra.mxu0 0.0
        %651 = vmatpush.msra.mxu0 0.0
        %652 = vmatpush.msra.mxu0 0.0
        %653 = vmatpush.msra.mxu0 0.0
        %654 = vmatpush.msra.mxu0 0.0
        %v655 = vand.u32 %v331, 4294901760
        %656 = vmatpush.msra.mxu0 %v655
        %v657 = vand.u32 %v330, 4294901760
        %658 = vmatpush.msra.mxu0 %v657
        %v659 = vand.u32 %v503, 4294901760
        %660 = vmatmul.f32.gmra.mxu0 %v659
        %v661 = vpop.f32.mrf.mxu0
        %v662 = vadd.f32 %v639, %v661
        %663 = vdwg.mxu0
        %v664 = vld [vmem:[#allocation2] sm:$0xff]
        %v665 = vld [vmem:[#allocation2 + $0x8] sm:$0xff]
        %666 = vmatpush.msra.mxu0 0.0
        %667 = vmatpush.msra.mxu0 0.0
        %668 = vmatpush.msra.mxu0 0.0
        %669 = vmatpush.msra.mxu0 0.0
        %670 = vmatpush.msra.mxu0 0.0
        %671 = vmatpush.msra.mxu0 0.0
        %672 = vmatpush.msra.mxu0 0.0
        %673 = vmatpush.msra.mxu0 0.0
        %674 = vmatpush.msra.mxu0 0.0
        %675 = vmatpush.msra.mxu0 0.0
        %676 = vmatpush.msra.mxu0 0.0
        %677 = vmatpush.msra.mxu0 0.0
        %678 = vmatpush.msra.mxu0 0.0
        %679 = vmatpush.msra.mxu0 0.0
        %v680 = vand.u32 %v665, 4294901760
        %681 = vmatpush.msra.mxu0 %v680
        %v682 = vand.u32 %v664, 4294901760
        %683 = vmatpush.msra.mxu0 %v682
        %v684 = vand.u32 %v340, 4294901760
        %v685 = vsub.f32 %v340, %v684
        %v686 = vand.u32 %v685, 4294901760
        %v687 = vsub.f32 %v685, %v686
        %v688 = vand.u32 %v687, 4294901760
        %689 = vmatmul.f32.gmra.mxu0 %v688
        %v690 = vpop.f32.mrf.mxu0
        %v691 = vadd.f32 0.0, %v690
        %692 = vdwg.mxu0
        %693 = vmatpush.msra.mxu0 0.0
        %694 = vmatpush.msra.mxu0 0.0
        %695 = vmatpush.msra.mxu0 0.0
        %696 = vmatpush.msra.mxu0 0.0
        %697 = vmatpush.msra.mxu0 0.0
        %698 = vmatpush.msra.mxu0 0.0
        %699 = vmatpush.msra.mxu0 0.0
        %700 = vmatpush.msra.mxu0 0.0
        %701 = vmatpush.msra.mxu0 0.0
        %702 = vmatpush.msra.mxu0 0.0
        %703 = vmatpush.msra.mxu0 0.0
        %704 = vmatpush.msra.mxu0 0.0
        %705 = vmatpush.msra.mxu0 0.0
        %706 = vmatpush.msra.mxu0 0.0
        %v707 = vand.u32 %v665, 4294901760
        %v708 = vsub.f32 %v665, %v707
        %v709 = vand.u32 %v708, 4294901760
        %v710 = vsub.f32 %v708, %v709
        %v711 = vand.u32 %v710, 4294901760
        %712 = vmatpush.msra.mxu0 %v711
        %v713 = vand.u32 %v664, 4294901760
        %v714 = vsub.f32 %v664, %v713
        %v715 = vand.u32 %v714, 4294901760
        %v716 = vsub.f32 %v714, %v715
        %v717 = vand.u32 %v716, 4294901760
        %718 = vmatpush.msra.mxu0 %v717
        %v719 = vand.u32 %v340, 4294901760
        %720 = vmatmul.f32.gmra.mxu0 %v719
        %v721 = vpop.f32.mrf.mxu0
        %v722 = vadd.f32 %v691, %v721
        %723 = vdwg.mxu0
        %724 = vmatpush.msra.mxu0 0.0
        %725 = vmatpush.msra.mxu0 0.0
        %726 = vmatpush.msra.mxu0 0.0
        %727 = vmatpush.msra.mxu0 0.0
        %728 = vmatpush.msra.mxu0 0.0
        %729 = vmatpush.msra.mxu0 0.0
        %730 = vmatpush.msra.mxu0 0.0
        %731 = vmatpush.msra.mxu0 0.0
        %732 = vmatpush.msra.mxu0 0.0
        %733 = vmatpush.msra.mxu0 0.0
        %734 = vmatpush.msra.mxu0 0.0
        %735 = vmatpush.msra.mxu0 0.0
        %736 = vmatpush.msra.mxu0 0.0
        %737 = vmatpush.msra.mxu0 0.0
        %v738 = vand.u32 %v665, 4294901760
        %v739 = vsub.f32 %v665, %v738
        %740 = vmatpush.msra.mxu0 %v739
        %v741 = vand.u32 %v664, 4294901760
        %v742 = vsub.f32 %v664, %v741
        %743 = vmatpush.msra.mxu0 %v742
        %v744 = vand.u32 %v340, 4294901760
        %v745 = vsub.f32 %v340, %v744
        %746 = vmatmul.f32.gmra.mxu0 %v745
        %v747 = vpop.f32.mrf.mxu0
        %v748 = vadd.f32 %v722, %v747
        %749 = vdwg.mxu0
        %750 = vmatpush.msra.mxu0 0.0
        %751 = vmatpush.msra.mxu0 0.0
        %752 = vmatpush.msra.mxu0 0.0
        %753 = vmatpush.msra.mxu0 0.0
        %754 = vmatpush.msra.mxu0 0.0
        %755 = vmatpush.msra.mxu0 0.0
        %756 = vmatpush.msra.mxu0 0.0
        %757 = vmatpush.msra.mxu0 0.0
        %758 = vmatpush.msra.mxu0 0.0
        %759 = vmatpush.msra.mxu0 0.0
        %760 = vmatpush.msra.mxu0 0.0
        %761 = vmatpush.msra.mxu0 0.0
        %762 = vmatpush.msra.mxu0 0.0
        %763 = vmatpush.msra.mxu0 0.0
        %v764 = vand.u32 %v665, 4294901760
        %765 = vmatpush.msra.mxu0 %v764
        %v766 = vand.u32 %v664, 4294901760
        %767 = vmatpush.msra.mxu0 %v766
        %v768 = vand.u32 %v340, 4294901760
        %v769 = vsub.f32 %v340, %v768
        %v770 = vand.u32 %v769, 4294901760
        %771 = vmatmul.f32.gmra.mxu0 %v770
        %v772 = vpop.f32.mrf.mxu0
        %v773 = vadd.f32 %v748, %v772
        %774 = vdwg.mxu0
        %775 = vmatpush.msra.mxu0 0.0
        %776 = vmatpush.msra.mxu0 0.0
        %777 = vmatpush.msra.mxu0 0.0
        %778 = vmatpush.msra.mxu0 0.0
        %779 = vmatpush.msra.mxu0 0.0
        %780 = vmatpush.msra.mxu0 0.0
        %781 = vmatpush.msra.mxu0 0.0
        %782 = vmatpush.msra.mxu0 0.0
        %783 = vmatpush.msra.mxu0 0.0
        %784 = vmatpush.msra.mxu0 0.0
        %785 = vmatpush.msra.mxu0 0.0
        %786 = vmatpush.msra.mxu0 0.0
        %787 = vmatpush.msra.mxu0 0.0
        %788 = vmatpush.msra.mxu0 0.0
        %v789 = vand.u32 %v665, 4294901760
        %v790 = vsub.f32 %v665, %v789
        %v791 = vand.u32 %v790, 4294901760
        %792 = vmatpush.msra.mxu0 %v791
        %v793 = vand.u32 %v664, 4294901760
        %v794 = vsub.f32 %v664, %v793
        %v795 = vand.u32 %v794, 4294901760
        %796 = vmatpush.msra.mxu0 %v795
        %v797 = vand.u32 %v340, 4294901760
        %798 = vmatmul.f32.gmra.mxu0 %v797
        %v799 = vpop.f32.mrf.mxu0
        %v800 = vadd.f32 %v773, %v799
        %801 = vdwg.mxu0
        %802 = vmatpush.msra.mxu0 0.0
        %803 = vmatpush.msra.mxu0 0.0
        %804 = vmatpush.msra.mxu0 0.0
        %805 = vmatpush.msra.mxu0 0.0
        %806 = vmatpush.msra.mxu0 0.0
        %807 = vmatpush.msra.mxu0 0.0
        %808 = vmatpush.msra.mxu0 0.0
        %809 = vmatpush.msra.mxu0 0.0
        %810 = vmatpush.msra.mxu0 0.0
        %811 = vmatpush.msra.mxu0 0.0
        %812 = vmatpush.msra.mxu0 0.0
        %813 = vmatpush.msra.mxu0 0.0
        %814 = vmatpush.msra.mxu0 0.0
        %815 = vmatpush.msra.mxu0 0.0
        %v816 = vand.u32 %v665, 4294901760
        %817 = vmatpush.msra.mxu0 %v816
        %v818 = vand.u32 %v664, 4294901760
        %819 = vmatpush.msra.mxu0 %v818
        %v820 = vand.u32 %v340, 4294901760
        %821 = vmatmul.f32.gmra.mxu0 %v820
        %v822 = vpop.f32.mrf.mxu0
        %v823 = vadd.f32 %v800, %v822
        %824 = vdwg.mxu0
        %826 = vset.pattern.permute.xlu0 0
        %827 = vperm.xlu0 %826, %v499
        %v828 = vpop.permute.xlu0 %827
        %v831 = vsel %vm338, %v823, 0
        %833 = vmatpush.msra.mxu0 0.0
        %834 = vmatpush.msra.mxu0 0.0
        %835 = vmatpush.msra.mxu0 0.0
        %836 = vmatpush.msra.mxu0 0.0
        %837 = vmatpush.msra.mxu0 0.0
        %838 = vmatpush.msra.mxu0 0.0
        %839 = vmatpush.msra.mxu0 0.0
        %840 = vmatpush.msra.mxu0 0.0
        %841 = vmatpush.msra.mxu0 0.0
        %842 = vmatpush.msra.mxu0 0.0
        %843 = vmatpush.msra.mxu0 0.0
        %844 = vmatpush.msra.mxu0 0.0
        %845 = vmatpush.msra.mxu0 0.0
        %846 = vmatpush.msra.mxu0 0.0
        %v847 = vand.u32 %v331, 4294901760
        %848 = vmatpush.msra.mxu0 %v847
        %v849 = vand.u32 %v330, 4294901760
        %850 = vmatpush.msra.mxu0 %v849
        %v851 = vand.u32 %v831, 4294901760
        %v852 = vsub.f32 %v831, %v851
        %v853 = vand.u32 %v852, 4294901760
        %v854 = vsub.f32 %v852, %v853
        %v855 = vand.u32 %v854, 4294901760
        %856 = vmatmul.f32.gmra.mxu0 %v855
        %v857 = vpop.f32.mrf.mxu0
        %v858 = vadd.f32 %v828, %v857
        %859 = vdwg.mxu0
        %860 = vmatpush.msra.mxu0 0.0
        %861 = vmatpush.msra.mxu0 0.0
        %862 = vmatpush.msra.mxu0 0.0
        %863 = vmatpush.msra.mxu0 0.0
        %864 = vmatpush.msra.mxu0 0.0
        %865 = vmatpush.msra.mxu0 0.0
        %866 = vmatpush.msra.mxu0 0.0
        %867 = vmatpush.msra.mxu0 0.0
        %868 = vmatpush.msra.mxu0 0.0
        %869 = vmatpush.msra.mxu0 0.0
        %870 = vmatpush.msra.mxu0 0.0
        %871 = vmatpush.msra.mxu0 0.0
        %872 = vmatpush.msra.mxu0 0.0
        %873 = vmatpush.msra.mxu0 0.0
        %v874 = vand.u32 %v331, 4294901760
        %v875 = vsub.f32 %v331, %v874
        %v876 = vand.u32 %v875, 4294901760
        %v877 = vsub.f32 %v875, %v876
        %v878 = vand.u32 %v877, 4294901760
        %879 = vmatpush.msra.mxu0 %v878
        %v880 = vand.u32 %v330, 4294901760
        %v881 = vsub.f32 %v330, %v880
        %v882 = vand.u32 %v881, 4294901760
        %v883 = vsub.f32 %v881, %v882
        %v884 = vand.u32 %v883, 4294901760
        %885 = vmatpush.msra.mxu0 %v884
        %v886 = vand.u32 %v831, 4294901760
        %887 = vmatmul.f32.gmra.mxu0 %v886
        %v888 = vpop.f32.mrf.mxu0
        %v889 = vadd.f32 %v858, %v888
        %890 = vdwg.mxu0
        %891 = vmatpush.msra.mxu0 0.0
        %892 = vmatpush.msra.mxu0 0.0
        %893 = vmatpush.msra.mxu0 0.0
        %894 = vmatpush.msra.mxu0 0.0
        %895 = vmatpush.msra.mxu0 0.0
        %896 = vmatpush.msra.mxu0 0.0
        %897 = vmatpush.msra.mxu0 0.0
        %898 = vmatpush.msra.mxu0 0.0
        %899 = vmatpush.msra.mxu0 0.0
        %900 = vmatpush.msra.mxu0 0.0
        %901 = vmatpush.msra.mxu0 0.0
        %902 = vmatpush.msra.mxu0 0.0
        %903 = vmatpush.msra.mxu0 0.0
        %904 = vmatpush.msra.mxu0 0.0
        %v905 = vand.u32 %v331, 4294901760
        %v906 = vsub.f32 %v331, %v905
        %907 = vmatpush.msra.mxu0 %v906
        %v908 = vand.u32 %v330, 4294901760
        %v909 = vsub.f32 %v330, %v908
        %910 = vmatpush.msra.mxu0 %v909
        %v911 = vand.u32 %v831, 4294901760
        %v912 = vsub.f32 %v831, %v911
        %913 = vmatmul.f32.gmra.mxu0 %v912
        %v914 = vpop.f32.mrf.mxu0
        %v915 = vadd.f32 %v889, %v914
        %916 = vdwg.mxu0
        %917 = vmatpush.msra.mxu0 0.0
        %918 = vmatpush.msra.mxu0 0.0
        %919 = vmatpush.msra.mxu0 0.0
        %920 = vmatpush.msra.mxu0 0.0
        %921 = vmatpush.msra.mxu0 0.0
        %922 = vmatpush.msra.mxu0 0.0
        %923 = vmatpush.msra.mxu0 0.0
        %924 = vmatpush.msra.mxu0 0.0
        %925 = vmatpush.msra.mxu0 0.0
        %926 = vmatpush.msra.mxu0 0.0
        %927 = vmatpush.msra.mxu0 0.0
        %928 = vmatpush.msra.mxu0 0.0
        %929 = vmatpush.msra.mxu0 0.0
        %930 = vmatpush.msra.mxu0 0.0
        %v931 = vand.u32 %v331, 4294901760
        %932 = vmatpush.msra.mxu0 %v931
        %v933 = vand.u32 %v330, 4294901760
        %934 = vmatpush.msra.mxu0 %v933
        %v935 = vand.u32 %v831, 4294901760
        %v936 = vsub.f32 %v831, %v935
        %v937 = vand.u32 %v936, 4294901760
        %938 = vmatmul.f32.gmra.mxu0 %v937
        %v939 = vpop.f32.mrf.mxu0
        %v940 = vadd.f32 %v915, %v939
        %941 = vdwg.mxu0
        %942 = vmatpush.msra.mxu0 0.0
        %943 = vmatpush.msra.mxu0 0.0
        %944 = vmatpush.msra.mxu0 0.0
        %945 = vmatpush.msra.mxu0 0.0
        %946 = vmatpush.msra.mxu0 0.0
        %947 = vmatpush.msra.mxu0 0.0
        %948 = vmatpush.msra.mxu0 0.0
        %949 = vmatpush.msra.mxu0 0.0
        %950 = vmatpush.msra.mxu0 0.0
        %951 = vmatpush.msra.mxu0 0.0
        %952 = vmatpush.msra.mxu0 0.0
        %953 = vmatpush.msra.mxu0 0.0
        %954 = vmatpush.msra.mxu0 0.0
        %955 = vmatpush.msra.mxu0 0.0
        %v956 = vand.u32 %v331, 4294901760
        %v957 = vsub.f32 %v331, %v956
        %v958 = vand.u32 %v957, 4294901760
        %959 = vmatpush.msra.mxu0 %v958
        %v960 = vand.u32 %v330, 4294901760
        %v961 = vsub.f32 %v330, %v960
        %v962 = vand.u32 %v961, 4294901760
        %963 = vmatpush.msra.mxu0 %v962
        %v964 = vand.u32 %v831, 4294901760
        %965 = vmatmul.f32.gmra.mxu0 %v964
        %v966 = vpop.f32.mrf.mxu0
        %v967 = vadd.f32 %v940, %v966
        %968 = vdwg.mxu0
        %969 = vmatpush.msra.mxu0 0.0
        %970 = vmatpush.msra.mxu0 0.0
        %971 = vmatpush.msra.mxu0 0.0
        %972 = vmatpush.msra.mxu0 0.0
        %973 = vmatpush.msra.mxu0 0.0
        %974 = vmatpush.msra.mxu0 0.0
        %975 = vmatpush.msra.mxu0 0.0
        %976 = vmatpush.msra.mxu0 0.0
        %977 = vmatpush.msra.mxu0 0.0
        %978 = vmatpush.msra.mxu0 0.0
        %979 = vmatpush.msra.mxu0 0.0
        %980 = vmatpush.msra.mxu0 0.0
        %981 = vmatpush.msra.mxu0 0.0
        %982 = vmatpush.msra.mxu0 0.0
        %v983 = vand.u32 %v331, 4294901760
        %984 = vmatpush.msra.mxu0 %v983
        %v985 = vand.u32 %v330, 4294901760
        %986 = vmatpush.msra.mxu0 %v985
        %v987 = vand.u32 %v831, 4294901760
        %988 = vmatmul.f32.gmra.mxu0 %v987
        %v989 = vpop.f32.mrf.mxu0
        %v990 = vadd.f32 %v967, %v989
        %991 = vdwg.mxu0
        %v992 = vperm.slane %v662, 0
        %v993 = vadd.f32 %v990, %v992
        %vm994 = vcmask 64512
        %995 = vst.msk [vmem:[%s313] sm:$0xff] %vm994, %v993
        %s996 = scalar_lea.vmem [#allocation2], 16
        %v997 = vld [vmem:[%s996] sm:$0xff]
        %v998 = vld [vmem:[%s996 + $0x8] sm:$0xff]
        %999 = vmatpush.msra.mxu0 0.0
        %1000 = vmatpush.msra.mxu0 0.0
        %1001 = vmatpush.msra.mxu0 0.0
        %1002 = vmatpush.msra.mxu0 0.0
        %1003 = vmatpush.msra.mxu0 0.0
        %1004 = vmatpush.msra.mxu0 0.0
        %1005 = vmatpush.msra.mxu0 0.0
        %1006 = vmatpush.msra.mxu0 0.0
        %1007 = vmatpush.msra.mxu0 0.0
        %1008 = vmatpush.msra.mxu0 0.0
        %1009 = vmatpush.msra.mxu0 0.0
        %1010 = vmatpush.msra.mxu0 0.0
        %1011 = vmatpush.msra.mxu0 0.0
        %1012 = vmatpush.msra.mxu0 0.0
        %v1013 = vand.u32 %v998, 4294901760
        %1014 = vmatpush.msra.mxu0 %v1013
        %v1015 = vand.u32 %v997, 4294901760
        %1016 = vmatpush.msra.mxu0 %v1015
        %v1017 = vand.u32 %v340, 4294901760
        %v1018 = vsub.f32 %v340, %v1017
        %v1019 = vand.u32 %v1018, 4294901760
        %v1020 = vsub.f32 %v1018, %v1019
        %v1021 = vand.u32 %v1020, 4294901760
        %1022 = vmatmul.f32.gmra.mxu0 %v1021
        %v1023 = vpop.f32.mrf.mxu0
        %v1024 = vadd.f32 0.0, %v1023
        %1025 = vdwg.mxu0
        %1026 = vmatpush.msra.mxu0 0.0
        %1027 = vmatpush.msra.mxu0 0.0
        %1028 = vmatpush.msra.mxu0 0.0
        %1029 = vmatpush.msra.mxu0 0.0
        %1030 = vmatpush.msra.mxu0 0.0
        %1031 = vmatpush.msra.mxu0 0.0
        %1032 = vmatpush.msra.mxu0 0.0
        %1033 = vmatpush.msra.mxu0 0.0
        %1034 = vmatpush.msra.mxu0 0.0
        %1035 = vmatpush.msra.mxu0 0.0
        %1036 = vmatpush.msra.mxu0 0.0
        %1037 = vmatpush.msra.mxu0 0.0
        %1038 = vmatpush.msra.mxu0 0.0
        %1039 = vmatpush.msra.mxu0 0.0
        %v1040 = vand.u32 %v998, 4294901760
        %v1041 = vsub.f32 %v998, %v1040
        %v1042 = vand.u32 %v1041, 4294901760
        %v1043 = vsub.f32 %v1041, %v1042
        %v1044 = vand.u32 %v1043, 4294901760
        %1045 = vmatpush.msra.mxu0 %v1044
        %v1046 = vand.u32 %v997, 4294901760
        %v1047 = vsub.f32 %v997, %v1046
        %v1048 = vand.u32 %v1047, 4294901760
        %v1049 = vsub.f32 %v1047, %v1048
        %v1050 = vand.u32 %v1049, 4294901760
        %1051 = vmatpush.msra.mxu0 %v1050
        %v1052 = vand.u32 %v340, 4294901760
        %1053 = vmatmul.f32.gmra.mxu0 %v1052
        %v1054 = vpop.f32.mrf.mxu0
        %v1055 = vadd.f32 %v1024, %v1054
        %1056 = vdwg.mxu0
        %1057 = vmatpush.msra.mxu0 0.0
        %1058 = vmatpush.msra.mxu0 0.0
        %1059 = vmatpush.msra.mxu0 0.0
        %1060 = vmatpush.msra.mxu0 0.0
        %1061 = vmatpush.msra.mxu0 0.0
        %1062 = vmatpush.msra.mxu0 0.0
        %1063 = vmatpush.msra.mxu0 0.0
        %1064 = vmatpush.msra.mxu0 0.0
        %1065 = vmatpush.msra.mxu0 0.0
        %1066 = vmatpush.msra.mxu0 0.0
        %1067 = vmatpush.msra.mxu0 0.0
        %1068 = vmatpush.msra.mxu0 0.0
        %1069 = vmatpush.msra.mxu0 0.0
        %1070 = vmatpush.msra.mxu0 0.0
        %v1071 = vand.u32 %v998, 4294901760
        %v1072 = vsub.f32 %v998, %v1071
        %1073 = vmatpush.msra.mxu0 %v1072
        %v1074 = vand.u32 %v997, 4294901760
        %v1075 = vsub.f32 %v997, %v1074
        %1076 = vmatpush.msra.mxu0 %v1075
        %v1077 = vand.u32 %v340, 4294901760
        %v1078 = vsub.f32 %v340, %v1077
        %1079 = vmatmul.f32.gmra.mxu0 %v1078
        %v1080 = vpop.f32.mrf.mxu0
        %v1081 = vadd.f32 %v1055, %v1080
        %1082 = vdwg.mxu0
        %1083 = vmatpush.msra.mxu0 0.0
        %1084 = vmatpush.msra.mxu0 0.0
        %1085 = vmatpush.msra.mxu0 0.0
        %1086 = vmatpush.msra.mxu0 0.0
        %1087 = vmatpush.msra.mxu0 0.0
        %1088 = vmatpush.msra.mxu0 0.0
        %1089 = vmatpush.msra.mxu0 0.0
        %1090 = vmatpush.msra.mxu0 0.0
        %1091 = vmatpush.msra.mxu0 0.0
        %1092 = vmatpush.msra.mxu0 0.0
        %1093 = vmatpush.msra.mxu0 0.0
        %1094 = vmatpush.msra.mxu0 0.0
        %1095 = vmatpush.msra.mxu0 0.0
        %1096 = vmatpush.msra.mxu0 0.0
        %v1097 = vand.u32 %v998, 4294901760
        %1098 = vmatpush.msra.mxu0 %v1097
        %v1099 = vand.u32 %v997, 4294901760
        %1100 = vmatpush.msra.mxu0 %v1099
        %v1101 = vand.u32 %v340, 4294901760
        %v1102 = vsub.f32 %v340, %v1101
        %v1103 = vand.u32 %v1102, 4294901760
        %1104 = vmatmul.f32.gmra.mxu0 %v1103
        %v1105 = vpop.f32.mrf.mxu0
        %v1106 = vadd.f32 %v1081, %v1105
        %1107 = vdwg.mxu0
        %1108 = vmatpush.msra.mxu0 0.0
        %1109 = vmatpush.msra.mxu0 0.0
        %1110 = vmatpush.msra.mxu0 0.0
        %1111 = vmatpush.msra.mxu0 0.0
        %1112 = vmatpush.msra.mxu0 0.0
        %1113 = vmatpush.msra.mxu0 0.0
        %1114 = vmatpush.msra.mxu0 0.0
        %1115 = vmatpush.msra.mxu0 0.0
        %1116 = vmatpush.msra.mxu0 0.0
        %1117 = vmatpush.msra.mxu0 0.0
        %1118 = vmatpush.msra.mxu0 0.0
        %1119 = vmatpush.msra.mxu0 0.0
        %1120 = vmatpush.msra.mxu0 0.0
        %1121 = vmatpush.msra.mxu0 0.0
        %v1122 = vand.u32 %v998, 4294901760
        %v1123 = vsub.f32 %v998, %v1122
        %v1124 = vand.u32 %v1123, 4294901760
        %1125 = vmatpush.msra.mxu0 %v1124
        %v1126 = vand.u32 %v997, 4294901760
        %v1127 = vsub.f32 %v997, %v1126
        %v1128 = vand.u32 %v1127, 4294901760
        %1129 = vmatpush.msra.mxu0 %v1128
        %v1130 = vand.u32 %v340, 4294901760
        %1131 = vmatmul.f32.gmra.mxu0 %v1130
        %v1132 = vpop.f32.mrf.mxu0
        %v1133 = vadd.f32 %v1106, %v1132
        %1134 = vdwg.mxu0
        %1135 = vmatpush.msra.mxu0 0.0
        %1136 = vmatpush.msra.mxu0 0.0
        %1137 = vmatpush.msra.mxu0 0.0
        %1138 = vmatpush.msra.mxu0 0.0
        %1139 = vmatpush.msra.mxu0 0.0
        %1140 = vmatpush.msra.mxu0 0.0
        %1141 = vmatpush.msra.mxu0 0.0
        %1142 = vmatpush.msra.mxu0 0.0
        %1143 = vmatpush.msra.mxu0 0.0
        %1144 = vmatpush.msra.mxu0 0.0
        %1145 = vmatpush.msra.mxu0 0.0
        %1146 = vmatpush.msra.mxu0 0.0
        %1147 = vmatpush.msra.mxu0 0.0
        %1148 = vmatpush.msra.mxu0 0.0
        %v1149 = vand.u32 %v998, 4294901760
        %1150 = vmatpush.msra.mxu0 %v1149
        %v1151 = vand.u32 %v997, 4294901760
        %1152 = vmatpush.msra.mxu0 %v1151
        %v1153 = vand.u32 %v340, 4294901760
        %1154 = vmatmul.f32.gmra.mxu0 %v1153
        %v1155 = vpop.f32.mrf.mxu0
        %v1156 = vadd.f32 %v1133, %v1155
        %1157 = vdwg.mxu0
        %1158 = vset.pattern.permute.xlu0 1
        %1159 = vperm.xlu0 %1158, %v499
        %v1160 = vpop.permute.xlu0 %1159
        %v1163 = vsel %vm338, %v1156, 0
        %1165 = vmatpush.msra.mxu0 0.0
        %1166 = vmatpush.msra.mxu0 0.0
        %1167 = vmatpush.msra.mxu0 0.0
        %1168 = vmatpush.msra.mxu0 0.0
        %1169 = vmatpush.msra.mxu0 0.0
        %1170 = vmatpush.msra.mxu0 0.0
        %1171 = vmatpush.msra.mxu0 0.0
        %1172 = vmatpush.msra.mxu0 0.0
        %1173 = vmatpush.msra.mxu0 0.0
        %1174 = vmatpush.msra.mxu0 0.0
        %1175 = vmatpush.msra.mxu0 0.0
        %1176 = vmatpush.msra.mxu0 0.0
        %1177 = vmatpush.msra.mxu0 0.0
        %1178 = vmatpush.msra.mxu0 0.0
        %v1179 = vand.u32 %v331, 4294901760
        %1180 = vmatpush.msra.mxu0 %v1179
        %v1181 = vand.u32 %v330, 4294901760
        %1182 = vmatpush.msra.mxu0 %v1181
        %v1183 = vand.u32 %v1163, 4294901760
        %v1184 = vsub.f32 %v1163, %v1183
        %v1185 = vand.u32 %v1184, 4294901760
        %v1186 = vsub.f32 %v1184, %v1185
        %v1187 = vand.u32 %v1186, 4294901760
        %1188 = vmatmul.f32.gmra.mxu0 %v1187
        %v1189 = vpop.f32.mrf.mxu0
        %v1190 = vadd.f32 %v1160, %v1189
        %1191 = vdwg.mxu0
        %1192 = vmatpush.msra.mxu0 0.0
        %1193 = vmatpush.msra.mxu0 0.0
        %1194 = vmatpush.msra.mxu0 0.0
        %1195 = vmatpush.msra.mxu0 0.0
        %1196 = vmatpush.msra.mxu0 0.0
        %1197 = vmatpush.msra.mxu0 0.0
        %1198 = vmatpush.msra.mxu0 0.0
        %1199 = vmatpush.msra.mxu0 0.0
        %1200 = vmatpush.msra.mxu0 0.0
        %1201 = vmatpush.msra.mxu0 0.0
        %1202 = vmatpush.msra.mxu0 0.0
        %1203 = vmatpush.msra.mxu0 0.0
        %1204 = vmatpush.msra.mxu0 0.0
        %1205 = vmatpush.msra.mxu0 0.0
        %v1206 = vand.u32 %v331, 4294901760
        %v1207 = vsub.f32 %v331, %v1206
        %v1208 = vand.u32 %v1207, 4294901760
        %v1209 = vsub.f32 %v1207, %v1208
        %v1210 = vand.u32 %v1209, 4294901760
        %1211 = vmatpush.msra.mxu0 %v1210
        %v1212 = vand.u32 %v330, 4294901760
        %v1213 = vsub.f32 %v330, %v1212
        %v1214 = vand.u32 %v1213, 4294901760
        %v1215 = vsub.f32 %v1213, %v1214
        %v1216 = vand.u32 %v1215, 4294901760
        %1217 = vmatpush.msra.mxu0 %v1216
        %v1218 = vand.u32 %v1163, 4294901760
        %1219 = vmatmul.f32.gmra.mxu0 %v1218
        %v1220 = vpop.f32.mrf.mxu0
        %v1221 = vadd.f32 %v1190, %v1220
        %1222 = vdwg.mxu0
        %1223 = vmatpush.msra.mxu0 0.0
        %1224 = vmatpush.msra.mxu0 0.0
        %1225 = vmatpush.msra.mxu0 0.0
        %1226 = vmatpush.msra.mxu0 0.0
        %1227 = vmatpush.msra.mxu0 0.0
        %1228 = vmatpush.msra.mxu0 0.0
        %1229 = vmatpush.msra.mxu0 0.0
        %1230 = vmatpush.msra.mxu0 0.0
        %1231 = vmatpush.msra.mxu0 0.0
        %1232 = vmatpush.msra.mxu0 0.0
        %1233 = vmatpush.msra.mxu0 0.0
        %1234 = vmatpush.msra.mxu0 0.0
        %1235 = vmatpush.msra.mxu0 0.0
        %1236 = vmatpush.msra.mxu0 0.0
        %v1237 = vand.u32 %v331, 4294901760
        %v1238 = vsub.f32 %v331, %v1237
        %1239 = vmatpush.msra.mxu0 %v1238
        %v1240 = vand.u32 %v330, 4294901760
        %v1241 = vsub.f32 %v330, %v1240
        %1242 = vmatpush.msra.mxu0 %v1241
        %v1243 = vand.u32 %v1163, 4294901760
        %v1244 = vsub.f32 %v1163, %v1243
        %1245 = vmatmul.f32.gmra.mxu0 %v1244
        %v1246 = vpop.f32.mrf.mxu0
        %v1247 = vadd.f32 %v1221, %v1246
        %1248 = vdwg.mxu0
        %1249 = vmatpush.msra.mxu0 0.0
        %1250 = vmatpush.msra.mxu0 0.0
        %1251 = vmatpush.msra.mxu0 0.0
        %1252 = vmatpush.msra.mxu0 0.0
        %1253 = vmatpush.msra.mxu0 0.0
        %1254 = vmatpush.msra.mxu0 0.0
        %1255 = vmatpush.msra.mxu0 0.0
        %1256 = vmatpush.msra.mxu0 0.0
        %1257 = vmatpush.msra.mxu0 0.0
        %1258 = vmatpush.msra.mxu0 0.0
        %1259 = vmatpush.msra.mxu0 0.0
        %1260 = vmatpush.msra.mxu0 0.0
        %1261 = vmatpush.msra.mxu0 0.0
        %1262 = vmatpush.msra.mxu0 0.0
        %v1263 = vand.u32 %v331, 4294901760
        %1264 = vmatpush.msra.mxu0 %v1263
        %v1265 = vand.u32 %v330, 4294901760
        %1266 = vmatpush.msra.mxu0 %v1265
        %v1267 = vand.u32 %v1163, 4294901760
        %v1268 = vsub.f32 %v1163, %v1267
        %v1269 = vand.u32 %v1268, 4294901760
        %1270 = vmatmul.f32.gmra.mxu0 %v1269
        %v1271 = vpop.f32.mrf.mxu0
        %v1272 = vadd.f32 %v1247, %v1271
        %1273 = vdwg.mxu0
        %1274 = vmatpush.msra.mxu0 0.0
        %1275 = vmatpush.msra.mxu0 0.0
        %1276 = vmatpush.msra.mxu0 0.0
        %1277 = vmatpush.msra.mxu0 0.0
        %1278 = vmatpush.msra.mxu0 0.0
        %1279 = vmatpush.msra.mxu0 0.0
        %1280 = vmatpush.msra.mxu0 0.0
        %1281 = vmatpush.msra.mxu0 0.0
        %1282 = vmatpush.msra.mxu0 0.0
        %1283 = vmatpush.msra.mxu0 0.0
        %1284 = vmatpush.msra.mxu0 0.0
        %1285 = vmatpush.msra.mxu0 0.0
        %1286 = vmatpush.msra.mxu0 0.0
        %1287 = vmatpush.msra.mxu0 0.0
        %v1288 = vand.u32 %v331, 4294901760
        %v1289 = vsub.f32 %v331, %v1288
        %v1290 = vand.u32 %v1289, 4294901760
        %1291 = vmatpush.msra.mxu0 %v1290
        %v1292 = vand.u32 %v330, 4294901760
        %v1293 = vsub.f32 %v330, %v1292
        %v1294 = vand.u32 %v1293, 4294901760
        %1295 = vmatpush.msra.mxu0 %v1294
        %v1296 = vand.u32 %v1163, 4294901760
        %1297 = vmatmul.f32.gmra.mxu0 %v1296
        %v1298 = vpop.f32.mrf.mxu0
        %v1299 = vadd.f32 %v1272, %v1298
        %1300 = vdwg.mxu0
        %1301 = vmatpush.msra.mxu0 0.0
        %1302 = vmatpush.msra.mxu0 0.0
        %1303 = vmatpush.msra.mxu0 0.0
        %1304 = vmatpush.msra.mxu0 0.0
        %1305 = vmatpush.msra.mxu0 0.0
        %1306 = vmatpush.msra.mxu0 0.0
        %1307 = vmatpush.msra.mxu0 0.0
        %1308 = vmatpush.msra.mxu0 0.0
        %1309 = vmatpush.msra.mxu0 0.0
        %1310 = vmatpush.msra.mxu0 0.0
        %1311 = vmatpush.msra.mxu0 0.0
        %1312 = vmatpush.msra.mxu0 0.0
        %1313 = vmatpush.msra.mxu0 0.0
        %1314 = vmatpush.msra.mxu0 0.0
        %v1315 = vand.u32 %v331, 4294901760
        %1316 = vmatpush.msra.mxu0 %v1315
        %v1317 = vand.u32 %v330, 4294901760
        %1318 = vmatpush.msra.mxu0 %v1317
        %v1319 = vand.u32 %v1163, 4294901760
        %1320 = vmatmul.f32.gmra.mxu0 %v1319
        %v1321 = vpop.f32.mrf.mxu0
        %v1322 = vadd.f32 %v1299, %v1321
        %1323 = vdwg.mxu0
        %v1324 = vperm.slane %v662, 1
        %v1325 = vadd.f32 %v1322, %v1324
        %s1326 = scalar_lea.vmem %s313, 8 [#allocation5]
        %1327 = vst.msk [vmem:[%s1326] sm:$0xff] %vm994, %v1325
        %s1328 = scalar_lea.vmem [#allocation2], 32
        %v1329 = vld [vmem:[%s1328] sm:$0xff]
        %v1330 = vld [vmem:[%s1328 + $0x8] sm:$0xff]
        %1331 = vmatpush.msra.mxu0 0.0
        %1332 = vmatpush.msra.mxu0 0.0
        %1333 = vmatpush.msra.mxu0 0.0
        %1334 = vmatpush.msra.mxu0 0.0
        %1335 = vmatpush.msra.mxu0 0.0
        %1336 = vmatpush.msra.mxu0 0.0
        %1337 = vmatpush.msra.mxu0 0.0
        %1338 = vmatpush.msra.mxu0 0.0
        %1339 = vmatpush.msra.mxu0 0.0
        %1340 = vmatpush.msra.mxu0 0.0
        %1341 = vmatpush.msra.mxu0 0.0
        %1342 = vmatpush.msra.mxu0 0.0
        %1343 = vmatpush.msra.mxu0 0.0
        %1344 = vmatpush.msra.mxu0 0.0
        %v1345 = vand.u32 %v1330, 4294901760
        %1346 = vmatpush.msra.mxu0 %v1345
        %v1347 = vand.u32 %v1329, 4294901760
        %1348 = vmatpush.msra.mxu0 %v1347
        %v1349 = vand.u32 %v340, 4294901760
        %v1350 = vsub.f32 %v340, %v1349
        %v1351 = vand.u32 %v1350, 4294901760
        %v1352 = vsub.f32 %v1350, %v1351
        %v1353 = vand.u32 %v1352, 4294901760
        %1354 = vmatmul.f32.gmra.mxu0 %v1353
        %v1355 = vpop.f32.mrf.mxu0
        %v1356 = vadd.f32 0.0, %v1355
        %1357 = vdwg.mxu0
        %1358 = vmatpush.msra.mxu0 0.0
        %1359 = vmatpush.msra.mxu0 0.0
        %1360 = vmatpush.msra.mxu0 0.0
        %1361 = vmatpush.msra.mxu0 0.0
        %1362 = vmatpush.msra.mxu0 0.0
        %1363 = vmatpush.msra.mxu0 0.0
        %1364 = vmatpush.msra.mxu0 0.0
        %1365 = vmatpush.msra.mxu0 0.0
        %1366 = vmatpush.msra.mxu0 0.0
        %1367 = vmatpush.msra.mxu0 0.0
        %1368 = vmatpush.msra.mxu0 0.0
        %1369 = vmatpush.msra.mxu0 0.0
        %1370 = vmatpush.msra.mxu0 0.0
        %1371 = vmatpush.msra.mxu0 0.0
        %v1372 = vand.u32 %v1330, 4294901760
        %v1373 = vsub.f32 %v1330, %v1372
        %v1374 = vand.u32 %v1373, 4294901760
        %v1375 = vsub.f32 %v1373, %v1374
        %v1376 = vand.u32 %v1375, 4294901760
        %1377 = vmatpush.msra.mxu0 %v1376
        %v1378 = vand.u32 %v1329, 4294901760
        %v1379 = vsub.f32 %v1329, %v1378
        %v1380 = vand.u32 %v1379, 4294901760
        %v1381 = vsub.f32 %v1379, %v1380
        %v1382 = vand.u32 %v1381, 4294901760
        %1383 = vmatpush.msra.mxu0 %v1382
        %v1384 = vand.u32 %v340, 4294901760
        %1385 = vmatmul.f32.gmra.mxu0 %v1384
        %v1386 = vpop.f32.mrf.mxu0
        %v1387 = vadd.f32 %v1356, %v1386
        %1388 = vdwg.mxu0
        %1389 = vmatpush.msra.mxu0 0.0
        %1390 = vmatpush.msra.mxu0 0.0
        %1391 = vmatpush.msra.mxu0 0.0
        %1392 = vmatpush.msra.mxu0 0.0
        %1393 = vmatpush.msra.mxu0 0.0
        %1394 = vmatpush.msra.mxu0 0.0
        %1395 = vmatpush.msra.mxu0 0.0
        %1396 = vmatpush.msra.mxu0 0.0
        %1397 = vmatpush.msra.mxu0 0.0
        %1398 = vmatpush.msra.mxu0 0.0
        %1399 = vmatpush.msra.mxu0 0.0
        %1400 = vmatpush.msra.mxu0 0.0
        %1401 = vmatpush.msra.mxu0 0.0
        %1402 = vmatpush.msra.mxu0 0.0
        %v1403 = vand.u32 %v1330, 4294901760
        %v1404 = vsub.f32 %v1330, %v1403
        %1405 = vmatpush.msra.mxu0 %v1404
        %v1406 = vand.u32 %v1329, 4294901760
        %v1407 = vsub.f32 %v1329, %v1406
        %1408 = vmatpush.msra.mxu0 %v1407
        %v1409 = vand.u32 %v340, 4294901760
        %v1410 = vsub.f32 %v340, %v1409
        %1411 = vmatmul.f32.gmra.mxu0 %v1410
        %v1412 = vpop.f32.mrf.mxu0
        %v1413 = vadd.f32 %v1387, %v1412
        %1414 = vdwg.mxu0
        %1415 = vmatpush.msra.mxu0 0.0
        %1416 = vmatpush.msra.mxu0 0.0
        %1417 = vmatpush.msra.mxu0 0.0
        %1418 = vmatpush.msra.mxu0 0.0
        %1419 = vmatpush.msra.mxu0 0.0
        %1420 = vmatpush.msra.mxu0 0.0
        %1421 = vmatpush.msra.mxu0 0.0
        %1422 = vmatpush.msra.mxu0 0.0
        %1423 = vmatpush.msra.mxu0 0.0
        %1424 = vmatpush.msra.mxu0 0.0
        %1425 = vmatpush.msra.mxu0 0.0
        %1426 = vmatpush.msra.mxu0 0.0
        %1427 = vmatpush.msra.mxu0 0.0
        %1428 = vmatpush.msra.mxu0 0.0
        %v1429 = vand.u32 %v1330, 4294901760
        %1430 = vmatpush.msra.mxu0 %v1429
        %v1431 = vand.u32 %v1329, 4294901760
        %1432 = vmatpush.msra.mxu0 %v1431
        %v1433 = vand.u32 %v340, 4294901760
        %v1434 = vsub.f32 %v340, %v1433
        %v1435 = vand.u32 %v1434, 4294901760
        %1436 = vmatmul.f32.gmra.mxu0 %v1435
        %v1437 = vpop.f32.mrf.mxu0
        %v1438 = vadd.f32 %v1413, %v1437
        %1439 = vdwg.mxu0
        %1440 = vmatpush.msra.mxu0 0.0
        %1441 = vmatpush.msra.mxu0 0.0
        %1442 = vmatpush.msra.mxu0 0.0
        %1443 = vmatpush.msra.mxu0 0.0
        %1444 = vmatpush.msra.mxu0 0.0
        %1445 = vmatpush.msra.mxu0 0.0
        %1446 = vmatpush.msra.mxu0 0.0
        %1447 = vmatpush.msra.mxu0 0.0
        %1448 = vmatpush.msra.mxu0 0.0
        %1449 = vmatpush.msra.mxu0 0.0
        %1450 = vmatpush.msra.mxu0 0.0
        %1451 = vmatpush.msra.mxu0 0.0
        %1452 = vmatpush.msra.mxu0 0.0
        %1453 = vmatpush.msra.mxu0 0.0
        %v1454 = vand.u32 %v1330, 4294901760
        %v1455 = vsub.f32 %v1330, %v1454
        %v1456 = vand.u32 %v1455, 4294901760
        %1457 = vmatpush.msra.mxu0 %v1456
        %v1458 = vand.u32 %v1329, 4294901760
        %v1459 = vsub.f32 %v1329, %v1458
        %v1460 = vand.u32 %v1459, 4294901760
        %1461 = vmatpush.msra.mxu0 %v1460
        %v1462 = vand.u32 %v340, 4294901760
        %1463 = vmatmul.f32.gmra.mxu0 %v1462
        %v1464 = vpop.f32.mrf.mxu0
        %v1465 = vadd.f32 %v1438, %v1464
        %1466 = vdwg.mxu0
        %1467 = vmatpush.msra.mxu0 0.0
        %1468 = vmatpush.msra.mxu0 0.0
        %1469 = vmatpush.msra.mxu0 0.0
        %1470 = vmatpush.msra.mxu0 0.0
        %1471 = vmatpush.msra.mxu0 0.0
        %1472 = vmatpush.msra.mxu0 0.0
        %1473 = vmatpush.msra.mxu0 0.0
        %1474 = vmatpush.msra.mxu0 0.0
        %1475 = vmatpush.msra.mxu0 0.0
        %1476 = vmatpush.msra.mxu0 0.0
        %1477 = vmatpush.msra.mxu0 0.0
        %1478 = vmatpush.msra.mxu0 0.0
        %1479 = vmatpush.msra.mxu0 0.0
        %1480 = vmatpush.msra.mxu0 0.0
        %v1481 = vand.u32 %v1330, 4294901760
        %1482 = vmatpush.msra.mxu0 %v1481
        %v1483 = vand.u32 %v1329, 4294901760
        %1484 = vmatpush.msra.mxu0 %v1483
        %v1485 = vand.u32 %v340, 4294901760
        %1486 = vmatmul.f32.gmra.mxu0 %v1485
        %v1487 = vpop.f32.mrf.mxu0
        %v1488 = vadd.f32 %v1465, %v1487
        %1489 = vdwg.mxu0
        %1490 = vset.pattern.permute.xlu0 2
        %1491 = vperm.xlu0 %1490, %v499
        %v1492 = vpop.permute.xlu0 %1491
        %v1495 = vsel %vm338, %v1488, 0
        %1497 = vmatpush.msra.mxu0 0.0
        %1498 = vmatpush.msra.mxu0 0.0
        %1499 = vmatpush.msra.mxu0 0.0
        %1500 = vmatpush.msra.mxu0 0.0
        %1501 = vmatpush.msra.mxu0 0.0
        %1502 = vmatpush.msra.mxu0 0.0
        %1503 = vmatpush.msra.mxu0 0.0
        %1504 = vmatpush.msra.mxu0 0.0
        %1505 = vmatpush.msra.mxu0 0.0
        %1506 = vmatpush.msra.mxu0 0.0
        %1507 = vmatpush.msra.mxu0 0.0
        %1508 = vmatpush.msra.mxu0 0.0
        %1509 = vmatpush.msra.mxu0 0.0
        %1510 = vmatpush.msra.mxu0 0.0
        %v1511 = vand.u32 %v331, 4294901760
        %1512 = vmatpush.msra.mxu0 %v1511
        %v1513 = vand.u32 %v330, 4294901760
        %1514 = vmatpush.msra.mxu0 %v1513
        %v1515 = vand.u32 %v1495, 4294901760
        %v1516 = vsub.f32 %v1495, %v1515
        %v1517 = vand.u32 %v1516, 4294901760
        %v1518 = vsub.f32 %v1516, %v1517
        %v1519 = vand.u32 %v1518, 4294901760
        %1520 = vmatmul.f32.gmra.mxu0 %v1519
        %v1521 = vpop.f32.mrf.mxu0
        %v1522 = vadd.f32 %v1492, %v1521
        %1523 = vdwg.mxu0
        %1524 = vmatpush.msra.mxu0 0.0
        %1525 = vmatpush.msra.mxu0 0.0
        %1526 = vmatpush.msra.mxu0 0.0
        %1527 = vmatpush.msra.mxu0 0.0
        %1528 = vmatpush.msra.mxu0 0.0
        %1529 = vmatpush.msra.mxu0 0.0
        %1530 = vmatpush.msra.mxu0 0.0
        %1531 = vmatpush.msra.mxu0 0.0
        %1532 = vmatpush.msra.mxu0 0.0
        %1533 = vmatpush.msra.mxu0 0.0
        %1534 = vmatpush.msra.mxu0 0.0
        %1535 = vmatpush.msra.mxu0 0.0
        %1536 = vmatpush.msra.mxu0 0.0
        %1537 = vmatpush.msra.mxu0 0.0
        %v1538 = vand.u32 %v331, 4294901760
        %v1539 = vsub.f32 %v331, %v1538
        %v1540 = vand.u32 %v1539, 4294901760
        %v1541 = vsub.f32 %v1539, %v1540
        %v1542 = vand.u32 %v1541, 4294901760
        %1543 = vmatpush.msra.mxu0 %v1542
        %v1544 = vand.u32 %v330, 4294901760
        %v1545 = vsub.f32 %v330, %v1544
        %v1546 = vand.u32 %v1545, 4294901760
        %v1547 = vsub.f32 %v1545, %v1546
        %v1548 = vand.u32 %v1547, 4294901760
        %1549 = vmatpush.msra.mxu0 %v1548
        %v1550 = vand.u32 %v1495, 4294901760
        %1551 = vmatmul.f32.gmra.mxu0 %v1550
        %v1552 = vpop.f32.mrf.mxu0
        %v1553 = vadd.f32 %v1522, %v1552
        %1554 = vdwg.mxu0
        %1555 = vmatpush.msra.mxu0 0.0
        %1556 = vmatpush.msra.mxu0 0.0
        %1557 = vmatpush.msra.mxu0 0.0
        %1558 = vmatpush.msra.mxu0 0.0
        %1559 = vmatpush.msra.mxu0 0.0
        %1560 = vmatpush.msra.mxu0 0.0
        %1561 = vmatpush.msra.mxu0 0.0
        %1562 = vmatpush.msra.mxu0 0.0
        %1563 = vmatpush.msra.mxu0 0.0
        %1564 = vmatpush.msra.mxu0 0.0
        %1565 = vmatpush.msra.mxu0 0.0
        %1566 = vmatpush.msra.mxu0 0.0
        %1567 = vmatpush.msra.mxu0 0.0
        %1568 = vmatpush.msra.mxu0 0.0
        %v1569 = vand.u32 %v331, 4294901760
        %v1570 = vsub.f32 %v331, %v1569
        %1571 = vmatpush.msra.mxu0 %v1570
        %v1572 = vand.u32 %v330, 4294901760
        %v1573 = vsub.f32 %v330, %v1572
        %1574 = vmatpush.msra.mxu0 %v1573
        %v1575 = vand.u32 %v1495, 4294901760
        %v1576 = vsub.f32 %v1495, %v1575
        %1577 = vmatmul.f32.gmra.mxu0 %v1576
        %v1578 = vpop.f32.mrf.mxu0
        %v1579 = vadd.f32 %v1553, %v1578
        %1580 = vdwg.mxu0
        %1581 = vmatpush.msra.mxu0 0.0
        %1582 = vmatpush.msra.mxu0 0.0
        %1583 = vmatpush.msra.mxu0 0.0
        %1584 = vmatpush.msra.mxu0 0.0
        %1585 = vmatpush.msra.mxu0 0.0
        %1586 = vmatpush.msra.mxu0 0.0
        %1587 = vmatpush.msra.mxu0 0.0
        %1588 = vmatpush.msra.mxu0 0.0
        %1589 = vmatpush.msra.mxu0 0.0
        %1590 = vmatpush.msra.mxu0 0.0
        %1591 = vmatpush.msra.mxu0 0.0
        %1592 = vmatpush.msra.mxu0 0.0
        %1593 = vmatpush.msra.mxu0 0.0
        %1594 = vmatpush.msra.mxu0 0.0
        %v1595 = vand.u32 %v331, 4294901760
        %1596 = vmatpush.msra.mxu0 %v1595
        %v1597 = vand.u32 %v330, 4294901760
        %1598 = vmatpush.msra.mxu0 %v1597
        %v1599 = vand.u32 %v1495, 4294901760
        %v1600 = vsub.f32 %v1495, %v1599
        %v1601 = vand.u32 %v1600, 4294901760
        %1602 = vmatmul.f32.gmra.mxu0 %v1601
        %v1603 = vpop.f32.mrf.mxu0
        %v1604 = vadd.f32 %v1579, %v1603
        %1605 = vdwg.mxu0
        %1606 = vmatpush.msra.mxu0 0.0
        %1607 = vmatpush.msra.mxu0 0.0
        %1608 = vmatpush.msra.mxu0 0.0
        %1609 = vmatpush.msra.mxu0 0.0
        %1610 = vmatpush.msra.mxu0 0.0
        %1611 = vmatpush.msra.mxu0 0.0
        %1612 = vmatpush.msra.mxu0 0.0
        %1613 = vmatpush.msra.mxu0 0.0
        %1614 = vmatpush.msra.mxu0 0.0
        %1615 = vmatpush.msra.mxu0 0.0
        %1616 = vmatpush.msra.mxu0 0.0
        %1617 = vmatpush.msra.mxu0 0.0
        %1618 = vmatpush.msra.mxu0 0.0
        %1619 = vmatpush.msra.mxu0 0.0
        %v1620 = vand.u32 %v331, 4294901760
        %v1621 = vsub.f32 %v331, %v1620
        %v1622 = vand.u32 %v1621, 4294901760
        %1623 = vmatpush.msra.mxu0 %v1622
        %v1624 = vand.u32 %v330, 4294901760
        %v1625 = vsub.f32 %v330, %v1624
        %v1626 = vand.u32 %v1625, 4294901760
        %1627 = vmatpush.msra.mxu0 %v1626
        %v1628 = vand.u32 %v1495, 4294901760
        %1629 = vmatmul.f32.gmra.mxu0 %v1628
        %v1630 = vpop.f32.mrf.mxu0
        %v1631 = vadd.f32 %v1604, %v1630
        %1632 = vdwg.mxu0
        %1633 = vmatpush.msra.mxu0 0.0
        %1634 = vmatpush.msra.mxu0 0.0
        %1635 = vmatpush.msra.mxu0 0.0
        %1636 = vmatpush.msra.mxu0 0.0
        %1637 = vmatpush.msra.mxu0 0.0
        %1638 = vmatpush.msra.mxu0 0.0
        %1639 = vmatpush.msra.mxu0 0.0
        %1640 = vmatpush.msra.mxu0 0.0
        %1641 = vmatpush.msra.mxu0 0.0
        %1642 = vmatpush.msra.mxu0 0.0
        %1643 = vmatpush.msra.mxu0 0.0
        %1644 = vmatpush.msra.mxu0 0.0
        %1645 = vmatpush.msra.mxu0 0.0
        %1646 = vmatpush.msra.mxu0 0.0
        %v1647 = vand.u32 %v331, 4294901760
        %1648 = vmatpush.msra.mxu0 %v1647
        %v1649 = vand.u32 %v330, 4294901760
        %1650 = vmatpush.msra.mxu0 %v1649
        %v1651 = vand.u32 %v1495, 4294901760
        %1652 = vmatmul.f32.gmra.mxu0 %v1651
        %v1653 = vpop.f32.mrf.mxu0
        %v1654 = vadd.f32 %v1631, %v1653
        %1655 = vdwg.mxu0
        %v1656 = vperm.slane %v662, 2
        %v1657 = vadd.f32 %v1654, %v1656
        %s1658 = scalar_lea.vmem %s313, 16 [#allocation5]
        %1659 = vst.msk [vmem:[%s1658] sm:$0xff] %vm994, %v1657
        %s1660 = scalar_lea.vmem [#allocation2], 48
        %v1661 = vld [vmem:[%s1660] sm:$0xff]
        %v1662 = vld [vmem:[%s1660 + $0x8] sm:$0xff]
        %1663 = vmatpush.msra.mxu0 0.0
        %1664 = vmatpush.msra.mxu0 0.0
        %1665 = vmatpush.msra.mxu0 0.0
        %1666 = vmatpush.msra.mxu0 0.0
        %1667 = vmatpush.msra.mxu0 0.0
        %1668 = vmatpush.msra.mxu0 0.0
        %1669 = vmatpush.msra.mxu0 0.0
        %1670 = vmatpush.msra.mxu0 0.0
        %1671 = vmatpush.msra.mxu0 0.0
        %1672 = vmatpush.msra.mxu0 0.0
        %1673 = vmatpush.msra.mxu0 0.0
        %1674 = vmatpush.msra.mxu0 0.0
        %1675 = vmatpush.msra.mxu0 0.0
        %1676 = vmatpush.msra.mxu0 0.0
        %v1677 = vand.u32 %v1662, 4294901760
        %1678 = vmatpush.msra.mxu0 %v1677
        %v1679 = vand.u32 %v1661, 4294901760
        %1680 = vmatpush.msra.mxu0 %v1679
        %v1681 = vand.u32 %v340, 4294901760
        %v1682 = vsub.f32 %v340, %v1681
        %v1683 = vand.u32 %v1682, 4294901760
        %v1684 = vsub.f32 %v1682, %v1683
        %v1685 = vand.u32 %v1684, 4294901760
        %1686 = vmatmul.f32.gmra.mxu0 %v1685
        %v1687 = vpop.f32.mrf.mxu0
        %v1688 = vadd.f32 0.0, %v1687
        %1689 = vdwg.mxu0
        %1690 = vmatpush.msra.mxu0 0.0
        %1691 = vmatpush.msra.mxu0 0.0
        %1692 = vmatpush.msra.mxu0 0.0
        %1693 = vmatpush.msra.mxu0 0.0
        %1694 = vmatpush.msra.mxu0 0.0
        %1695 = vmatpush.msra.mxu0 0.0
        %1696 = vmatpush.msra.mxu0 0.0
        %1697 = vmatpush.msra.mxu0 0.0
        %1698 = vmatpush.msra.mxu0 0.0
        %1699 = vmatpush.msra.mxu0 0.0
        %1700 = vmatpush.msra.mxu0 0.0
        %1701 = vmatpush.msra.mxu0 0.0
        %1702 = vmatpush.msra.mxu0 0.0
        %1703 = vmatpush.msra.mxu0 0.0
        %v1704 = vand.u32 %v1662, 4294901760
        %v1705 = vsub.f32 %v1662, %v1704
        %v1706 = vand.u32 %v1705, 4294901760
        %v1707 = vsub.f32 %v1705, %v1706
        %v1708 = vand.u32 %v1707, 4294901760
        %1709 = vmatpush.msra.mxu0 %v1708
        %v1710 = vand.u32 %v1661, 4294901760
        %v1711 = vsub.f32 %v1661, %v1710
        %v1712 = vand.u32 %v1711, 4294901760
        %v1713 = vsub.f32 %v1711, %v1712
        %v1714 = vand.u32 %v1713, 4294901760
        %1715 = vmatpush.msra.mxu0 %v1714
        %v1716 = vand.u32 %v340, 4294901760
        %1717 = vmatmul.f32.gmra.mxu0 %v1716
        %v1718 = vpop.f32.mrf.mxu0
        %v1719 = vadd.f32 %v1688, %v1718
        %1720 = vdwg.mxu0
        %1721 = vmatpush.msra.mxu0 0.0
        %1722 = vmatpush.msra.mxu0 0.0
        %1723 = vmatpush.msra.mxu0 0.0
        %1724 = vmatpush.msra.mxu0 0.0
        %1725 = vmatpush.msra.mxu0 0.0
        %1726 = vmatpush.msra.mxu0 0.0
        %1727 = vmatpush.msra.mxu0 0.0
        %1728 = vmatpush.msra.mxu0 0.0
        %1729 = vmatpush.msra.mxu0 0.0
        %1730 = vmatpush.msra.mxu0 0.0
        %1731 = vmatpush.msra.mxu0 0.0
        %1732 = vmatpush.msra.mxu0 0.0
        %1733 = vmatpush.msra.mxu0 0.0
        %1734 = vmatpush.msra.mxu0 0.0
        %v1735 = vand.u32 %v1662, 4294901760
        %v1736 = vsub.f32 %v1662, %v1735
        %1737 = vmatpush.msra.mxu0 %v1736
        %v1738 = vand.u32 %v1661, 4294901760
        %v1739 = vsub.f32 %v1661, %v1738
        %1740 = vmatpush.msra.mxu0 %v1739
        %v1741 = vand.u32 %v340, 4294901760
        %v1742 = vsub.f32 %v340, %v1741
        %1743 = vmatmul.f32.gmra.mxu0 %v1742
        %v1744 = vpop.f32.mrf.mxu0
        %v1745 = vadd.f32 %v1719, %v1744
        %1746 = vdwg.mxu0
        %1747 = vmatpush.msra.mxu0 0.0
        %1748 = vmatpush.msra.mxu0 0.0
        %1749 = vmatpush.msra.mxu0 0.0
        %1750 = vmatpush.msra.mxu0 0.0
        %1751 = vmatpush.msra.mxu0 0.0
        %1752 = vmatpush.msra.mxu0 0.0
        %1753 = vmatpush.msra.mxu0 0.0
        %1754 = vmatpush.msra.mxu0 0.0
        %1755 = vmatpush.msra.mxu0 0.0
        %1756 = vmatpush.msra.mxu0 0.0
        %1757 = vmatpush.msra.mxu0 0.0
        %1758 = vmatpush.msra.mxu0 0.0
        %1759 = vmatpush.msra.mxu0 0.0
        %1760 = vmatpush.msra.mxu0 0.0
        %v1761 = vand.u32 %v1662, 4294901760
        %1762 = vmatpush.msra.mxu0 %v1761
        %v1763 = vand.u32 %v1661, 4294901760
        %1764 = vmatpush.msra.mxu0 %v1763
        %v1765 = vand.u32 %v340, 4294901760
        %v1766 = vsub.f32 %v340, %v1765
        %v1767 = vand.u32 %v1766, 4294901760
        %1768 = vmatmul.f32.gmra.mxu0 %v1767
        %v1769 = vpop.f32.mrf.mxu0
        %v1770 = vadd.f32 %v1745, %v1769
        %1771 = vdwg.mxu0
        %1772 = vmatpush.msra.mxu0 0.0
        %1773 = vmatpush.msra.mxu0 0.0
        %1774 = vmatpush.msra.mxu0 0.0
        %1775 = vmatpush.msra.mxu0 0.0
        %1776 = vmatpush.msra.mxu0 0.0
        %1777 = vmatpush.msra.mxu0 0.0
        %1778 = vmatpush.msra.mxu0 0.0
        %1779 = vmatpush.msra.mxu0 0.0
        %1780 = vmatpush.msra.mxu0 0.0
        %1781 = vmatpush.msra.mxu0 0.0
        %1782 = vmatpush.msra.mxu0 0.0
        %1783 = vmatpush.msra.mxu0 0.0
        %1784 = vmatpush.msra.mxu0 0.0
        %1785 = vmatpush.msra.mxu0 0.0
        %v1786 = vand.u32 %v1662, 4294901760
        %v1787 = vsub.f32 %v1662, %v1786
        %v1788 = vand.u32 %v1787, 4294901760
        %1789 = vmatpush.msra.mxu0 %v1788
        %v1790 = vand.u32 %v1661, 4294901760
        %v1791 = vsub.f32 %v1661, %v1790
        %v1792 = vand.u32 %v1791, 4294901760
        %1793 = vmatpush.msra.mxu0 %v1792
        %v1794 = vand.u32 %v340, 4294901760
        %1795 = vmatmul.f32.gmra.mxu0 %v1794
        %v1796 = vpop.f32.mrf.mxu0
        %v1797 = vadd.f32 %v1770, %v1796
        %1798 = vdwg.mxu0
        %1799 = vmatpush.msra.mxu0 0.0
        %1800 = vmatpush.msra.mxu0 0.0
        %1801 = vmatpush.msra.mxu0 0.0
        %1802 = vmatpush.msra.mxu0 0.0
        %1803 = vmatpush.msra.mxu0 0.0
        %1804 = vmatpush.msra.mxu0 0.0
        %1805 = vmatpush.msra.mxu0 0.0
        %1806 = vmatpush.msra.mxu0 0.0
        %1807 = vmatpush.msra.mxu0 0.0
        %1808 = vmatpush.msra.mxu0 0.0
        %1809 = vmatpush.msra.mxu0 0.0
        %1810 = vmatpush.msra.mxu0 0.0
        %1811 = vmatpush.msra.mxu0 0.0
        %1812 = vmatpush.msra.mxu0 0.0
        %v1813 = vand.u32 %v1662, 4294901760
        %1814 = vmatpush.msra.mxu0 %v1813
        %v1815 = vand.u32 %v1661, 4294901760
        %1816 = vmatpush.msra.mxu0 %v1815
        %v1817 = vand.u32 %v340, 4294901760
        %1818 = vmatmul.f32.gmra.mxu0 %v1817
        %v1819 = vpop.f32.mrf.mxu0
        %v1820 = vadd.f32 %v1797, %v1819
        %1821 = vdwg.mxu0
        %1822 = vset.pattern.permute.xlu0 3
        %1823 = vperm.xlu0 %1822, %v499
        %v1824 = vpop.permute.xlu0 %1823
        %v1827 = vsel %vm338, %v1820, 0
        %1829 = vmatpush.msra.mxu0 0.0
        %1830 = vmatpush.msra.mxu0 0.0
        %1831 = vmatpush.msra.mxu0 0.0
        %1832 = vmatpush.msra.mxu0 0.0
        %1833 = vmatpush.msra.mxu0 0.0
        %1834 = vmatpush.msra.mxu0 0.0
        %1835 = vmatpush.msra.mxu0 0.0
        %1836 = vmatpush.msra.mxu0 0.0
        %1837 = vmatpush.msra.mxu0 0.0
        %1838 = vmatpush.msra.mxu0 0.0
        %1839 = vmatpush.msra.mxu0 0.0
        %1840 = vmatpush.msra.mxu0 0.0
        %1841 = vmatpush.msra.mxu0 0.0
        %1842 = vmatpush.msra.mxu0 0.0
        %v1843 = vand.u32 %v331, 4294901760
        %1844 = vmatpush.msra.mxu0 %v1843
        %v1845 = vand.u32 %v330, 4294901760
        %1846 = vmatpush.msra.mxu0 %v1845
        %v1847 = vand.u32 %v1827, 4294901760
        %v1848 = vsub.f32 %v1827, %v1847
        %v1849 = vand.u32 %v1848, 4294901760
        %v1850 = vsub.f32 %v1848, %v1849
        %v1851 = vand.u32 %v1850, 4294901760
        %1852 = vmatmul.f32.gmra.mxu0 %v1851
        %v1853 = vpop.f32.mrf.mxu0
        %v1854 = vadd.f32 %v1824, %v1853
        %1855 = vdwg.mxu0
        %1856 = vmatpush.msra.mxu0 0.0
        %1857 = vmatpush.msra.mxu0 0.0
        %1858 = vmatpush.msra.mxu0 0.0
        %1859 = vmatpush.msra.mxu0 0.0
        %1860 = vmatpush.msra.mxu0 0.0
        %1861 = vmatpush.msra.mxu0 0.0
        %1862 = vmatpush.msra.mxu0 0.0
        %1863 = vmatpush.msra.mxu0 0.0
        %1864 = vmatpush.msra.mxu0 0.0
        %1865 = vmatpush.msra.mxu0 0.0
        %1866 = vmatpush.msra.mxu0 0.0
        %1867 = vmatpush.msra.mxu0 0.0
        %1868 = vmatpush.msra.mxu0 0.0
        %1869 = vmatpush.msra.mxu0 0.0
        %v1870 = vand.u32 %v331, 4294901760
        %v1871 = vsub.f32 %v331, %v1870
        %v1872 = vand.u32 %v1871, 4294901760
        %v1873 = vsub.f32 %v1871, %v1872
        %v1874 = vand.u32 %v1873, 4294901760
        %1875 = vmatpush.msra.mxu0 %v1874
        %v1876 = vand.u32 %v330, 4294901760
        %v1877 = vsub.f32 %v330, %v1876
        %v1878 = vand.u32 %v1877, 4294901760
        %v1879 = vsub.f32 %v1877, %v1878
        %v1880 = vand.u32 %v1879, 4294901760
        %1881 = vmatpush.msra.mxu0 %v1880
        %v1882 = vand.u32 %v1827, 4294901760
        %1883 = vmatmul.f32.gmra.mxu0 %v1882
        %v1884 = vpop.f32.mrf.mxu0
        %v1885 = vadd.f32 %v1854, %v1884
        %1886 = vdwg.mxu0
        %1887 = vmatpush.msra.mxu0 0.0
        %1888 = vmatpush.msra.mxu0 0.0
        %1889 = vmatpush.msra.mxu0 0.0
        %1890 = vmatpush.msra.mxu0 0.0
        %1891 = vmatpush.msra.mxu0 0.0
        %1892 = vmatpush.msra.mxu0 0.0
        %1893 = vmatpush.msra.mxu0 0.0
        %1894 = vmatpush.msra.mxu0 0.0
        %1895 = vmatpush.msra.mxu0 0.0
        %1896 = vmatpush.msra.mxu0 0.0
        %1897 = vmatpush.msra.mxu0 0.0
        %1898 = vmatpush.msra.mxu0 0.0
        %1899 = vmatpush.msra.mxu0 0.0
        %1900 = vmatpush.msra.mxu0 0.0
        %v1901 = vand.u32 %v331, 4294901760
        %v1902 = vsub.f32 %v331, %v1901
        %1903 = vmatpush.msra.mxu0 %v1902
        %v1904 = vand.u32 %v330, 4294901760
        %v1905 = vsub.f32 %v330, %v1904
        %1906 = vmatpush.msra.mxu0 %v1905
        %v1907 = vand.u32 %v1827, 4294901760
        %v1908 = vsub.f32 %v1827, %v1907
        %1909 = vmatmul.f32.gmra.mxu0 %v1908
        %v1910 = vpop.f32.mrf.mxu0
        %v1911 = vadd.f32 %v1885, %v1910
        %1912 = vdwg.mxu0
        %1913 = vmatpush.msra.mxu0 0.0
        %1914 = vmatpush.msra.mxu0 0.0
        %1915 = vmatpush.msra.mxu0 0.0
        %1916 = vmatpush.msra.mxu0 0.0
        %1917 = vmatpush.msra.mxu0 0.0
        %1918 = vmatpush.msra.mxu0 0.0
        %1919 = vmatpush.msra.mxu0 0.0
        %1920 = vmatpush.msra.mxu0 0.0
        %1921 = vmatpush.msra.mxu0 0.0
        %1922 = vmatpush.msra.mxu0 0.0
        %1923 = vmatpush.msra.mxu0 0.0
        %1924 = vmatpush.msra.mxu0 0.0
        %1925 = vmatpush.msra.mxu0 0.0
        %1926 = vmatpush.msra.mxu0 0.0
        %v1927 = vand.u32 %v331, 4294901760
        %1928 = vmatpush.msra.mxu0 %v1927
        %v1929 = vand.u32 %v330, 4294901760
        %1930 = vmatpush.msra.mxu0 %v1929
        %v1931 = vand.u32 %v1827, 4294901760
        %v1932 = vsub.f32 %v1827, %v1931
        %v1933 = vand.u32 %v1932, 4294901760
        %1934 = vmatmul.f32.gmra.mxu0 %v1933
        %v1935 = vpop.f32.mrf.mxu0
        %v1936 = vadd.f32 %v1911, %v1935
        %1937 = vdwg.mxu0
        %1938 = vmatpush.msra.mxu0 0.0
        %1939 = vmatpush.msra.mxu0 0.0
        %1940 = vmatpush.msra.mxu0 0.0
        %1941 = vmatpush.msra.mxu0 0.0
        %1942 = vmatpush.msra.mxu0 0.0
        %1943 = vmatpush.msra.mxu0 0.0
        %1944 = vmatpush.msra.mxu0 0.0
        %1945 = vmatpush.msra.mxu0 0.0
        %1946 = vmatpush.msra.mxu0 0.0
        %1947 = vmatpush.msra.mxu0 0.0
        %1948 = vmatpush.msra.mxu0 0.0
        %1949 = vmatpush.msra.mxu0 0.0
        %1950 = vmatpush.msra.mxu0 0.0
        %1951 = vmatpush.msra.mxu0 0.0
        %v1952 = vand.u32 %v331, 4294901760
        %v1953 = vsub.f32 %v331, %v1952
        %v1954 = vand.u32 %v1953, 4294901760
        %1955 = vmatpush.msra.mxu0 %v1954
        %v1956 = vand.u32 %v330, 4294901760
        %v1957 = vsub.f32 %v330, %v1956
        %v1958 = vand.u32 %v1957, 4294901760
        %1959 = vmatpush.msra.mxu0 %v1958
        %v1960 = vand.u32 %v1827, 4294901760
        %1961 = vmatmul.f32.gmra.mxu0 %v1960
        %v1962 = vpop.f32.mrf.mxu0
        %v1963 = vadd.f32 %v1936, %v1962
        %1964 = vdwg.mxu0
        %1965 = vmatpush.msra.mxu0 0.0
        %1966 = vmatpush.msra.mxu0 0.0
        %1967 = vmatpush.msra.mxu0 0.0
        %1968 = vmatpush.msra.mxu0 0.0
        %1969 = vmatpush.msra.mxu0 0.0
        %1970 = vmatpush.msra.mxu0 0.0
        %1971 = vmatpush.msra.mxu0 0.0
        %1972 = vmatpush.msra.mxu0 0.0
        %1973 = vmatpush.msra.mxu0 0.0
        %1974 = vmatpush.msra.mxu0 0.0
        %1975 = vmatpush.msra.mxu0 0.0
        %1976 = vmatpush.msra.mxu0 0.0
        %1977 = vmatpush.msra.mxu0 0.0
        %1978 = vmatpush.msra.mxu0 0.0
        %v1979 = vand.u32 %v331, 4294901760
        %1980 = vmatpush.msra.mxu0 %v1979
        %v1981 = vand.u32 %v330, 4294901760
        %1982 = vmatpush.msra.mxu0 %v1981
        %v1983 = vand.u32 %v1827, 4294901760
        %1984 = vmatmul.f32.gmra.mxu0 %v1983
        %v1985 = vpop.f32.mrf.mxu0
        %v1986 = vadd.f32 %v1963, %v1985
        %1987 = vdwg.mxu0
        %v1988 = vperm.slane %v662, 3
        %v1989 = vadd.f32 %v1986, %v1988
        %s1990 = scalar_lea.vmem %s313, 24 [#allocation5]
        %1991 = vst.msk [vmem:[%s1990] sm:$0xff] %vm994, %v1989
        %s1992 = scalar_lea.vmem [#allocation2], 64
        %v1993 = vld [vmem:[%s1992] sm:$0xff]
        %v1994 = vld [vmem:[%s1992 + $0x8] sm:$0xff]
        %1995 = vmatpush.msra.mxu0 0.0
        %1996 = vmatpush.msra.mxu0 0.0
        %1997 = vmatpush.msra.mxu0 0.0
        %1998 = vmatpush.msra.mxu0 0.0
        %1999 = vmatpush.msra.mxu0 0.0
        %2000 = vmatpush.msra.mxu0 0.0
        %2001 = vmatpush.msra.mxu0 0.0
        %2002 = vmatpush.msra.mxu0 0.0
        %2003 = vmatpush.msra.mxu0 0.0
        %2004 = vmatpush.msra.mxu0 0.0
        %2005 = vmatpush.msra.mxu0 0.0
        %2006 = vmatpush.msra.mxu0 0.0
        %2007 = vmatpush.msra.mxu0 0.0
        %2008 = vmatpush.msra.mxu0 0.0
        %v2009 = vand.u32 %v1994, 4294901760
        %2010 = vmatpush.msra.mxu0 %v2009
        %v2011 = vand.u32 %v1993, 4294901760
        %2012 = vmatpush.msra.mxu0 %v2011
        %v2013 = vand.u32 %v340, 4294901760
        %v2014 = vsub.f32 %v340, %v2013
        %v2015 = vand.u32 %v2014, 4294901760
        %v2016 = vsub.f32 %v2014, %v2015
        %v2017 = vand.u32 %v2016, 4294901760
        %2018 = vmatmul.f32.gmra.mxu0 %v2017
        %v2019 = vpop.f32.mrf.mxu0
        %v2020 = vadd.f32 0.0, %v2019
        %2021 = vdwg.mxu0
        %2022 = vmatpush.msra.mxu0 0.0
        %2023 = vmatpush.msra.mxu0 0.0
        %2024 = vmatpush.msra.mxu0 0.0
        %2025 = vmatpush.msra.mxu0 0.0
        %2026 = vmatpush.msra.mxu0 0.0
        %2027 = vmatpush.msra.mxu0 0.0
        %2028 = vmatpush.msra.mxu0 0.0
        %2029 = vmatpush.msra.mxu0 0.0
        %2030 = vmatpush.msra.mxu0 0.0
        %2031 = vmatpush.msra.mxu0 0.0
        %2032 = vmatpush.msra.mxu0 0.0
        %2033 = vmatpush.msra.mxu0 0.0
        %2034 = vmatpush.msra.mxu0 0.0
        %2035 = vmatpush.msra.mxu0 0.0
        %v2036 = vand.u32 %v1994, 4294901760
        %v2037 = vsub.f32 %v1994, %v2036
        %v2038 = vand.u32 %v2037, 4294901760
        %v2039 = vsub.f32 %v2037, %v2038
        %v2040 = vand.u32 %v2039, 4294901760
        %2041 = vmatpush.msra.mxu0 %v2040
        %v2042 = vand.u32 %v1993, 4294901760
        %v2043 = vsub.f32 %v1993, %v2042
        %v2044 = vand.u32 %v2043, 4294901760
        %v2045 = vsub.f32 %v2043, %v2044
        %v2046 = vand.u32 %v2045, 4294901760
        %2047 = vmatpush.msra.mxu0 %v2046
        %v2048 = vand.u32 %v340, 4294901760
        %2049 = vmatmul.f32.gmra.mxu0 %v2048
        %v2050 = vpop.f32.mrf.mxu0
        %v2051 = vadd.f32 %v2020, %v2050
        %2052 = vdwg.mxu0
        %2053 = vmatpush.msra.mxu0 0.0
        %2054 = vmatpush.msra.mxu0 0.0
        %2055 = vmatpush.msra.mxu0 0.0
        %2056 = vmatpush.msra.mxu0 0.0
        %2057 = vmatpush.msra.mxu0 0.0
        %2058 = vmatpush.msra.mxu0 0.0
        %2059 = vmatpush.msra.mxu0 0.0
        %2060 = vmatpush.msra.mxu0 0.0
        %2061 = vmatpush.msra.mxu0 0.0
        %2062 = vmatpush.msra.mxu0 0.0
        %2063 = vmatpush.msra.mxu0 0.0
        %2064 = vmatpush.msra.mxu0 0.0
        %2065 = vmatpush.msra.mxu0 0.0
        %2066 = vmatpush.msra.mxu0 0.0
        %v2067 = vand.u32 %v1994, 4294901760
        %v2068 = vsub.f32 %v1994, %v2067
        %2069 = vmatpush.msra.mxu0 %v2068
        %v2070 = vand.u32 %v1993, 4294901760
        %v2071 = vsub.f32 %v1993, %v2070
        %2072 = vmatpush.msra.mxu0 %v2071
        %v2073 = vand.u32 %v340, 4294901760
        %v2074 = vsub.f32 %v340, %v2073
        %2075 = vmatmul.f32.gmra.mxu0 %v2074
        %v2076 = vpop.f32.mrf.mxu0
        %v2077 = vadd.f32 %v2051, %v2076
        %2078 = vdwg.mxu0
        %2079 = vmatpush.msra.mxu0 0.0
        %2080 = vmatpush.msra.mxu0 0.0
        %2081 = vmatpush.msra.mxu0 0.0
        %2082 = vmatpush.msra.mxu0 0.0
        %2083 = vmatpush.msra.mxu0 0.0
        %2084 = vmatpush.msra.mxu0 0.0
        %2085 = vmatpush.msra.mxu0 0.0
        %2086 = vmatpush.msra.mxu0 0.0
        %2087 = vmatpush.msra.mxu0 0.0
        %2088 = vmatpush.msra.mxu0 0.0
        %2089 = vmatpush.msra.mxu0 0.0
        %2090 = vmatpush.msra.mxu0 0.0
        %2091 = vmatpush.msra.mxu0 0.0
        %2092 = vmatpush.msra.mxu0 0.0
        %v2093 = vand.u32 %v1994, 4294901760
        %2094 = vmatpush.msra.mxu0 %v2093
        %v2095 = vand.u32 %v1993, 4294901760
        %2096 = vmatpush.msra.mxu0 %v2095
        %v2097 = vand.u32 %v340, 4294901760
        %v2098 = vsub.f32 %v340, %v2097
        %v2099 = vand.u32 %v2098, 4294901760
        %2100 = vmatmul.f32.gmra.mxu0 %v2099
        %v2101 = vpop.f32.mrf.mxu0
        %v2102 = vadd.f32 %v2077, %v2101
        %2103 = vdwg.mxu0
        %2104 = vmatpush.msra.mxu0 0.0
        %2105 = vmatpush.msra.mxu0 0.0
        %2106 = vmatpush.msra.mxu0 0.0
        %2107 = vmatpush.msra.mxu0 0.0
        %2108 = vmatpush.msra.mxu0 0.0
        %2109 = vmatpush.msra.mxu0 0.0
        %2110 = vmatpush.msra.mxu0 0.0
        %2111 = vmatpush.msra.mxu0 0.0
        %2112 = vmatpush.msra.mxu0 0.0
        %2113 = vmatpush.msra.mxu0 0.0
        %2114 = vmatpush.msra.mxu0 0.0
        %2115 = vmatpush.msra.mxu0 0.0
        %2116 = vmatpush.msra.mxu0 0.0
        %2117 = vmatpush.msra.mxu0 0.0
        %v2118 = vand.u32 %v1994, 4294901760
        %v2119 = vsub.f32 %v1994, %v2118
        %v2120 = vand.u32 %v2119, 4294901760
        %2121 = vmatpush.msra.mxu0 %v2120
        %v2122 = vand.u32 %v1993, 4294901760
        %v2123 = vsub.f32 %v1993, %v2122
        %v2124 = vand.u32 %v2123, 4294901760
        %2125 = vmatpush.msra.mxu0 %v2124
        %v2126 = vand.u32 %v340, 4294901760
        %2127 = vmatmul.f32.gmra.mxu0 %v2126
        %v2128 = vpop.f32.mrf.mxu0
        %v2129 = vadd.f32 %v2102, %v2128
        %2130 = vdwg.mxu0
        %2131 = vmatpush.msra.mxu0 0.0
        %2132 = vmatpush.msra.mxu0 0.0
        %2133 = vmatpush.msra.mxu0 0.0
        %2134 = vmatpush.msra.mxu0 0.0
        %2135 = vmatpush.msra.mxu0 0.0
        %2136 = vmatpush.msra.mxu0 0.0
        %2137 = vmatpush.msra.mxu0 0.0
        %2138 = vmatpush.msra.mxu0 0.0
        %2139 = vmatpush.msra.mxu0 0.0
        %2140 = vmatpush.msra.mxu0 0.0
        %2141 = vmatpush.msra.mxu0 0.0
        %2142 = vmatpush.msra.mxu0 0.0
        %2143 = vmatpush.msra.mxu0 0.0
        %2144 = vmatpush.msra.mxu0 0.0
        %v2145 = vand.u32 %v1994, 4294901760
        %2146 = vmatpush.msra.mxu0 %v2145
        %v2147 = vand.u32 %v1993, 4294901760
        %2148 = vmatpush.msra.mxu0 %v2147
        %v2149 = vand.u32 %v340, 4294901760
        %2150 = vmatmul.f32.gmra.mxu0 %v2149
        %v2151 = vpop.f32.mrf.mxu0
        %v2152 = vadd.f32 %v2129, %v2151
        %2153 = vdwg.mxu0
        %2154 = vset.pattern.permute.xlu0 4
        %2155 = vperm.xlu0 %2154, %v499
        %v2156 = vpop.permute.xlu0 %2155
        %v2159 = vsel %vm338, %v2152, 0
        %2161 = vmatpush.msra.mxu0 0.0
        %2162 = vmatpush.msra.mxu0 0.0
        %2163 = vmatpush.msra.mxu0 0.0
        %2164 = vmatpush.msra.mxu0 0.0
        %2165 = vmatpush.msra.mxu0 0.0
        %2166 = vmatpush.msra.mxu0 0.0
        %2167 = vmatpush.msra.mxu0 0.0
        %2168 = vmatpush.msra.mxu0 0.0
        %2169 = vmatpush.msra.mxu0 0.0
        %2170 = vmatpush.msra.mxu0 0.0
        %2171 = vmatpush.msra.mxu0 0.0
        %2172 = vmatpush.msra.mxu0 0.0
        %2173 = vmatpush.msra.mxu0 0.0
        %2174 = vmatpush.msra.mxu0 0.0
        %v2175 = vand.u32 %v331, 4294901760
        %2176 = vmatpush.msra.mxu0 %v2175
        %v2177 = vand.u32 %v330, 4294901760
        %2178 = vmatpush.msra.mxu0 %v2177
        %v2179 = vand.u32 %v2159, 4294901760
        %v2180 = vsub.f32 %v2159, %v2179
        %v2181 = vand.u32 %v2180, 4294901760
        %v2182 = vsub.f32 %v2180, %v2181
        %v2183 = vand.u32 %v2182, 4294901760
        %2184 = vmatmul.f32.gmra.mxu0 %v2183
        %v2185 = vpop.f32.mrf.mxu0
        %v2186 = vadd.f32 %v2156, %v2185
        %2187 = vdwg.mxu0
        %2188 = vmatpush.msra.mxu0 0.0
        %2189 = vmatpush.msra.mxu0 0.0
        %2190 = vmatpush.msra.mxu0 0.0
        %2191 = vmatpush.msra.mxu0 0.0
        %2192 = vmatpush.msra.mxu0 0.0
        %2193 = vmatpush.msra.mxu0 0.0
        %2194 = vmatpush.msra.mxu0 0.0
        %2195 = vmatpush.msra.mxu0 0.0
        %2196 = vmatpush.msra.mxu0 0.0
        %2197 = vmatpush.msra.mxu0 0.0
        %2198 = vmatpush.msra.mxu0 0.0
        %2199 = vmatpush.msra.mxu0 0.0
        %2200 = vmatpush.msra.mxu0 0.0
        %2201 = vmatpush.msra.mxu0 0.0
        %v2202 = vand.u32 %v331, 4294901760
        %v2203 = vsub.f32 %v331, %v2202
        %v2204 = vand.u32 %v2203, 4294901760
        %v2205 = vsub.f32 %v2203, %v2204
        %v2206 = vand.u32 %v2205, 4294901760
        %2207 = vmatpush.msra.mxu0 %v2206
        %v2208 = vand.u32 %v330, 4294901760
        %v2209 = vsub.f32 %v330, %v2208
        %v2210 = vand.u32 %v2209, 4294901760
        %v2211 = vsub.f32 %v2209, %v2210
        %v2212 = vand.u32 %v2211, 4294901760
        %2213 = vmatpush.msra.mxu0 %v2212
        %v2214 = vand.u32 %v2159, 4294901760
        %2215 = vmatmul.f32.gmra.mxu0 %v2214
        %v2216 = vpop.f32.mrf.mxu0
        %v2217 = vadd.f32 %v2186, %v2216
        %2218 = vdwg.mxu0
        %2219 = vmatpush.msra.mxu0 0.0
        %2220 = vmatpush.msra.mxu0 0.0
        %2221 = vmatpush.msra.mxu0 0.0
        %2222 = vmatpush.msra.mxu0 0.0
        %2223 = vmatpush.msra.mxu0 0.0
        %2224 = vmatpush.msra.mxu0 0.0
        %2225 = vmatpush.msra.mxu0 0.0
        %2226 = vmatpush.msra.mxu0 0.0
        %2227 = vmatpush.msra.mxu0 0.0
        %2228 = vmatpush.msra.mxu0 0.0
        %2229 = vmatpush.msra.mxu0 0.0
        %2230 = vmatpush.msra.mxu0 0.0
        %2231 = vmatpush.msra.mxu0 0.0
        %2232 = vmatpush.msra.mxu0 0.0
        %v2233 = vand.u32 %v331, 4294901760
        %v2234 = vsub.f32 %v331, %v2233
        %2235 = vmatpush.msra.mxu0 %v2234
        %v2236 = vand.u32 %v330, 4294901760
        %v2237 = vsub.f32 %v330, %v2236
        %2238 = vmatpush.msra.mxu0 %v2237
        %v2239 = vand.u32 %v2159, 4294901760
        %v2240 = vsub.f32 %v2159, %v2239
        %2241 = vmatmul.f32.gmra.mxu0 %v2240
        %v2242 = vpop.f32.mrf.mxu0
        %v2243 = vadd.f32 %v2217, %v2242
        %2244 = vdwg.mxu0
        %2245 = vmatpush.msra.mxu0 0.0
        %2246 = vmatpush.msra.mxu0 0.0
        %2247 = vmatpush.msra.mxu0 0.0
        %2248 = vmatpush.msra.mxu0 0.0
        %2249 = vmatpush.msra.mxu0 0.0
        %2250 = vmatpush.msra.mxu0 0.0
        %2251 = vmatpush.msra.mxu0 0.0
        %2252 = vmatpush.msra.mxu0 0.0
        %2253 = vmatpush.msra.mxu0 0.0
        %2254 = vmatpush.msra.mxu0 0.0
        %2255 = vmatpush.msra.mxu0 0.0
        %2256 = vmatpush.msra.mxu0 0.0
        %2257 = vmatpush.msra.mxu0 0.0
        %2258 = vmatpush.msra.mxu0 0.0
        %v2259 = vand.u32 %v331, 4294901760
        %2260 = vmatpush.msra.mxu0 %v2259
        %v2261 = vand.u32 %v330, 4294901760
        %2262 = vmatpush.msra.mxu0 %v2261
        %v2263 = vand.u32 %v2159, 4294901760
        %v2264 = vsub.f32 %v2159, %v2263
        %v2265 = vand.u32 %v2264, 4294901760
        %2266 = vmatmul.f32.gmra.mxu0 %v2265
        %v2267 = vpop.f32.mrf.mxu0
        %v2268 = vadd.f32 %v2243, %v2267
        %2269 = vdwg.mxu0
        %2270 = vmatpush.msra.mxu0 0.0
        %2271 = vmatpush.msra.mxu0 0.0
        %2272 = vmatpush.msra.mxu0 0.0
        %2273 = vmatpush.msra.mxu0 0.0
        %2274 = vmatpush.msra.mxu0 0.0
        %2275 = vmatpush.msra.mxu0 0.0
        %2276 = vmatpush.msra.mxu0 0.0
        %2277 = vmatpush.msra.mxu0 0.0
        %2278 = vmatpush.msra.mxu0 0.0
        %2279 = vmatpush.msra.mxu0 0.0
        %2280 = vmatpush.msra.mxu0 0.0
        %2281 = vmatpush.msra.mxu0 0.0
        %2282 = vmatpush.msra.mxu0 0.0
        %2283 = vmatpush.msra.mxu0 0.0
        %v2284 = vand.u32 %v331, 4294901760
        %v2285 = vsub.f32 %v331, %v2284
        %v2286 = vand.u32 %v2285, 4294901760
        %2287 = vmatpush.msra.mxu0 %v2286
        %v2288 = vand.u32 %v330, 4294901760
        %v2289 = vsub.f32 %v330, %v2288
        %v2290 = vand.u32 %v2289, 4294901760
        %2291 = vmatpush.msra.mxu0 %v2290
        %v2292 = vand.u32 %v2159, 4294901760
        %2293 = vmatmul.f32.gmra.mxu0 %v2292
        %v2294 = vpop.f32.mrf.mxu0
        %v2295 = vadd.f32 %v2268, %v2294
        %2296 = vdwg.mxu0
        %2297 = vmatpush.msra.mxu0 0.0
        %2298 = vmatpush.msra.mxu0 0.0
        %2299 = vmatpush.msra.mxu0 0.0
        %2300 = vmatpush.msra.mxu0 0.0
        %2301 = vmatpush.msra.mxu0 0.0
        %2302 = vmatpush.msra.mxu0 0.0
        %2303 = vmatpush.msra.mxu0 0.0
        %2304 = vmatpush.msra.mxu0 0.0
        %2305 = vmatpush.msra.mxu0 0.0
        %2306 = vmatpush.msra.mxu0 0.0
        %2307 = vmatpush.msra.mxu0 0.0
        %2308 = vmatpush.msra.mxu0 0.0
        %2309 = vmatpush.msra.mxu0 0.0
        %2310 = vmatpush.msra.mxu0 0.0
        %v2311 = vand.u32 %v331, 4294901760
        %2312 = vmatpush.msra.mxu0 %v2311
        %v2313 = vand.u32 %v330, 4294901760
        %2314 = vmatpush.msra.mxu0 %v2313
        %v2315 = vand.u32 %v2159, 4294901760
        %2316 = vmatmul.f32.gmra.mxu0 %v2315
        %v2317 = vpop.f32.mrf.mxu0
        %v2318 = vadd.f32 %v2295, %v2317
        %2319 = vdwg.mxu0
        %v2320 = vperm.slane %v662, 4
        %v2321 = vadd.f32 %v2318, %v2320
        %s2322 = scalar_lea.vmem %s313, 32 [#allocation5]
        %2323 = vst.msk [vmem:[%s2322] sm:$0xff] %vm994, %v2321
        %s2324 = scalar_lea.vmem [#allocation2], 80
        %v2325 = vld [vmem:[%s2324] sm:$0xff]
        %v2326 = vld [vmem:[%s2324 + $0x8] sm:$0xff]
        %2327 = vmatpush.msra.mxu0 0.0
        %2328 = vmatpush.msra.mxu0 0.0
        %2329 = vmatpush.msra.mxu0 0.0
        %2330 = vmatpush.msra.mxu0 0.0
        %2331 = vmatpush.msra.mxu0 0.0
        %2332 = vmatpush.msra.mxu0 0.0
        %2333 = vmatpush.msra.mxu0 0.0
        %2334 = vmatpush.msra.mxu0 0.0
        %2335 = vmatpush.msra.mxu0 0.0
        %2336 = vmatpush.msra.mxu0 0.0
        %2337 = vmatpush.msra.mxu0 0.0
        %2338 = vmatpush.msra.mxu0 0.0
        %2339 = vmatpush.msra.mxu0 0.0
        %2340 = vmatpush.msra.mxu0 0.0
        %v2341 = vand.u32 %v2326, 4294901760
        %2342 = vmatpush.msra.mxu0 %v2341
        %v2343 = vand.u32 %v2325, 4294901760
        %2344 = vmatpush.msra.mxu0 %v2343
        %v2345 = vand.u32 %v340, 4294901760
        %v2346 = vsub.f32 %v340, %v2345
        %v2347 = vand.u32 %v2346, 4294901760
        %v2348 = vsub.f32 %v2346, %v2347
        %v2349 = vand.u32 %v2348, 4294901760
        %2350 = vmatmul.f32.gmra.mxu0 %v2349
        %v2351 = vpop.f32.mrf.mxu0
        %v2352 = vadd.f32 0.0, %v2351
        %2353 = vdwg.mxu0
        %2354 = vmatpush.msra.mxu0 0.0
        %2355 = vmatpush.msra.mxu0 0.0
        %2356 = vmatpush.msra.mxu0 0.0
        %2357 = vmatpush.msra.mxu0 0.0
        %2358 = vmatpush.msra.mxu0 0.0
        %2359 = vmatpush.msra.mxu0 0.0
        %2360 = vmatpush.msra.mxu0 0.0
        %2361 = vmatpush.msra.mxu0 0.0
        %2362 = vmatpush.msra.mxu0 0.0
        %2363 = vmatpush.msra.mxu0 0.0
        %2364 = vmatpush.msra.mxu0 0.0
        %2365 = vmatpush.msra.mxu0 0.0
        %2366 = vmatpush.msra.mxu0 0.0
        %2367 = vmatpush.msra.mxu0 0.0
        %v2368 = vand.u32 %v2326, 4294901760
        %v2369 = vsub.f32 %v2326, %v2368
        %v2370 = vand.u32 %v2369, 4294901760
        %v2371 = vsub.f32 %v2369, %v2370
        %v2372 = vand.u32 %v2371, 4294901760
        %2373 = vmatpush.msra.mxu0 %v2372
        %v2374 = vand.u32 %v2325, 4294901760
        %v2375 = vsub.f32 %v2325, %v2374
        %v2376 = vand.u32 %v2375, 4294901760
        %v2377 = vsub.f32 %v2375, %v2376
        %v2378 = vand.u32 %v2377, 4294901760
        %2379 = vmatpush.msra.mxu0 %v2378
        %v2380 = vand.u32 %v340, 4294901760
        %2381 = vmatmul.f32.gmra.mxu0 %v2380
        %v2382 = vpop.f32.mrf.mxu0
        %v2383 = vadd.f32 %v2352, %v2382
        %2384 = vdwg.mxu0
        %2385 = vmatpush.msra.mxu0 0.0
        %2386 = vmatpush.msra.mxu0 0.0
        %2387 = vmatpush.msra.mxu0 0.0
        %2388 = vmatpush.msra.mxu0 0.0
        %2389 = vmatpush.msra.mxu0 0.0
        %2390 = vmatpush.msra.mxu0 0.0
        %2391 = vmatpush.msra.mxu0 0.0
        %2392 = vmatpush.msra.mxu0 0.0
        %2393 = vmatpush.msra.mxu0 0.0
        %2394 = vmatpush.msra.mxu0 0.0
        %2395 = vmatpush.msra.mxu0 0.0
        %2396 = vmatpush.msra.mxu0 0.0
        %2397 = vmatpush.msra.mxu0 0.0
        %2398 = vmatpush.msra.mxu0 0.0
        %v2399 = vand.u32 %v2326, 4294901760
        %v2400 = vsub.f32 %v2326, %v2399
        %2401 = vmatpush.msra.mxu0 %v2400
        %v2402 = vand.u32 %v2325, 4294901760
        %v2403 = vsub.f32 %v2325, %v2402
        %2404 = vmatpush.msra.mxu0 %v2403
        %v2405 = vand.u32 %v340, 4294901760
        %v2406 = vsub.f32 %v340, %v2405
        %2407 = vmatmul.f32.gmra.mxu0 %v2406
        %v2408 = vpop.f32.mrf.mxu0
        %v2409 = vadd.f32 %v2383, %v2408
        %2410 = vdwg.mxu0
        %2411 = vmatpush.msra.mxu0 0.0
        %2412 = vmatpush.msra.mxu0 0.0
        %2413 = vmatpush.msra.mxu0 0.0
        %2414 = vmatpush.msra.mxu0 0.0
        %2415 = vmatpush.msra.mxu0 0.0
        %2416 = vmatpush.msra.mxu0 0.0
        %2417 = vmatpush.msra.mxu0 0.0
        %2418 = vmatpush.msra.mxu0 0.0
        %2419 = vmatpush.msra.mxu0 0.0
        %2420 = vmatpush.msra.mxu0 0.0
        %2421 = vmatpush.msra.mxu0 0.0
        %2422 = vmatpush.msra.mxu0 0.0
        %2423 = vmatpush.msra.mxu0 0.0
        %2424 = vmatpush.msra.mxu0 0.0
        %v2425 = vand.u32 %v2326, 4294901760
        %2426 = vmatpush.msra.mxu0 %v2425
        %v2427 = vand.u32 %v2325, 4294901760
        %2428 = vmatpush.msra.mxu0 %v2427
        %v2429 = vand.u32 %v340, 4294901760
        %v2430 = vsub.f32 %v340, %v2429
        %v2431 = vand.u32 %v2430, 4294901760
        %2432 = vmatmul.f32.gmra.mxu0 %v2431
        %v2433 = vpop.f32.mrf.mxu0
        %v2434 = vadd.f32 %v2409, %v2433
        %2435 = vdwg.mxu0
        %2436 = vmatpush.msra.mxu0 0.0
        %2437 = vmatpush.msra.mxu0 0.0
        %2438 = vmatpush.msra.mxu0 0.0
        %2439 = vmatpush.msra.mxu0 0.0
        %2440 = vmatpush.msra.mxu0 0.0
        %2441 = vmatpush.msra.mxu0 0.0
        %2442 = vmatpush.msra.mxu0 0.0
        %2443 = vmatpush.msra.mxu0 0.0
        %2444 = vmatpush.msra.mxu0 0.0
        %2445 = vmatpush.msra.mxu0 0.0
        %2446 = vmatpush.msra.mxu0 0.0
        %2447 = vmatpush.msra.mxu0 0.0
        %2448 = vmatpush.msra.mxu0 0.0
        %2449 = vmatpush.msra.mxu0 0.0
        %v2450 = vand.u32 %v2326, 4294901760
        %v2451 = vsub.f32 %v2326, %v2450
        %v2452 = vand.u32 %v2451, 4294901760
        %2453 = vmatpush.msra.mxu0 %v2452
        %v2454 = vand.u32 %v2325, 4294901760
        %v2455 = vsub.f32 %v2325, %v2454
        %v2456 = vand.u32 %v2455, 4294901760
        %2457 = vmatpush.msra.mxu0 %v2456
        %v2458 = vand.u32 %v340, 4294901760
        %2459 = vmatmul.f32.gmra.mxu0 %v2458
        %v2460 = vpop.f32.mrf.mxu0
        %v2461 = vadd.f32 %v2434, %v2460
        %2462 = vdwg.mxu0
        %2463 = vmatpush.msra.mxu0 0.0
        %2464 = vmatpush.msra.mxu0 0.0
        %2465 = vmatpush.msra.mxu0 0.0
        %2466 = vmatpush.msra.mxu0 0.0
        %2467 = vmatpush.msra.mxu0 0.0
        %2468 = vmatpush.msra.mxu0 0.0
        %2469 = vmatpush.msra.mxu0 0.0
        %2470 = vmatpush.msra.mxu0 0.0
        %2471 = vmatpush.msra.mxu0 0.0
        %2472 = vmatpush.msra.mxu0 0.0
        %2473 = vmatpush.msra.mxu0 0.0
        %2474 = vmatpush.msra.mxu0 0.0
        %2475 = vmatpush.msra.mxu0 0.0
        %2476 = vmatpush.msra.mxu0 0.0
        %v2477 = vand.u32 %v2326, 4294901760
        %2478 = vmatpush.msra.mxu0 %v2477
        %v2479 = vand.u32 %v2325, 4294901760
        %2480 = vmatpush.msra.mxu0 %v2479
        %v2481 = vand.u32 %v340, 4294901760
        %2482 = vmatmul.f32.gmra.mxu0 %v2481
        %v2483 = vpop.f32.mrf.mxu0
        %v2484 = vadd.f32 %v2461, %v2483
        %2485 = vdwg.mxu0
        %2486 = vset.pattern.permute.xlu0 5
        %2487 = vperm.xlu0 %2486, %v499
        %v2488 = vpop.permute.xlu0 %2487
        %v2491 = vsel %vm338, %v2484, 0
        %2493 = vmatpush.msra.mxu0 0.0
        %2494 = vmatpush.msra.mxu0 0.0
        %2495 = vmatpush.msra.mxu0 0.0
        %2496 = vmatpush.msra.mxu0 0.0
        %2497 = vmatpush.msra.mxu0 0.0
        %2498 = vmatpush.msra.mxu0 0.0
        %2499 = vmatpush.msra.mxu0 0.0
        %2500 = vmatpush.msra.mxu0 0.0
        %2501 = vmatpush.msra.mxu0 0.0
        %2502 = vmatpush.msra.mxu0 0.0
        %2503 = vmatpush.msra.mxu0 0.0
        %2504 = vmatpush.msra.mxu0 0.0
        %2505 = vmatpush.msra.mxu0 0.0
        %2506 = vmatpush.msra.mxu0 0.0
        %v2507 = vand.u32 %v331, 4294901760
        %2508 = vmatpush.msra.mxu0 %v2507
        %v2509 = vand.u32 %v330, 4294901760
        %2510 = vmatpush.msra.mxu0 %v2509
        %v2511 = vand.u32 %v2491, 4294901760
        %v2512 = vsub.f32 %v2491, %v2511
        %v2513 = vand.u32 %v2512, 4294901760
        %v2514 = vsub.f32 %v2512, %v2513
        %v2515 = vand.u32 %v2514, 4294901760
        %2516 = vmatmul.f32.gmra.mxu0 %v2515
        %v2517 = vpop.f32.mrf.mxu0
        %v2518 = vadd.f32 %v2488, %v2517
        %2519 = vdwg.mxu0
        %2520 = vmatpush.msra.mxu0 0.0
        %2521 = vmatpush.msra.mxu0 0.0
        %2522 = vmatpush.msra.mxu0 0.0
        %2523 = vmatpush.msra.mxu0 0.0
        %2524 = vmatpush.msra.mxu0 0.0
        %2525 = vmatpush.msra.mxu0 0.0
        %2526 = vmatpush.msra.mxu0 0.0
        %2527 = vmatpush.msra.mxu0 0.0
        %2528 = vmatpush.msra.mxu0 0.0
        %2529 = vmatpush.msra.mxu0 0.0
        %2530 = vmatpush.msra.mxu0 0.0
        %2531 = vmatpush.msra.mxu0 0.0
        %2532 = vmatpush.msra.mxu0 0.0
        %2533 = vmatpush.msra.mxu0 0.0
        %v2534 = vand.u32 %v331, 4294901760
        %v2535 = vsub.f32 %v331, %v2534
        %v2536 = vand.u32 %v2535, 4294901760
        %v2537 = vsub.f32 %v2535, %v2536
        %v2538 = vand.u32 %v2537, 4294901760
        %2539 = vmatpush.msra.mxu0 %v2538
        %v2540 = vand.u32 %v330, 4294901760
        %v2541 = vsub.f32 %v330, %v2540
        %v2542 = vand.u32 %v2541, 4294901760
        %v2543 = vsub.f32 %v2541, %v2542
        %v2544 = vand.u32 %v2543, 4294901760
        %2545 = vmatpush.msra.mxu0 %v2544
        %v2546 = vand.u32 %v2491, 4294901760
        %2547 = vmatmul.f32.gmra.mxu0 %v2546
        %v2548 = vpop.f32.mrf.mxu0
        %v2549 = vadd.f32 %v2518, %v2548
        %2550 = vdwg.mxu0
        %2551 = vmatpush.msra.mxu0 0.0
        %2552 = vmatpush.msra.mxu0 0.0
        %2553 = vmatpush.msra.mxu0 0.0
        %2554 = vmatpush.msra.mxu0 0.0
        %2555 = vmatpush.msra.mxu0 0.0
        %2556 = vmatpush.msra.mxu0 0.0
        %2557 = vmatpush.msra.mxu0 0.0
        %2558 = vmatpush.msra.mxu0 0.0
        %2559 = vmatpush.msra.mxu0 0.0
        %2560 = vmatpush.msra.mxu0 0.0
        %2561 = vmatpush.msra.mxu0 0.0
        %2562 = vmatpush.msra.mxu0 0.0
        %2563 = vmatpush.msra.mxu0 0.0
        %2564 = vmatpush.msra.mxu0 0.0
        %v2565 = vand.u32 %v331, 4294901760
        %v2566 = vsub.f32 %v331, %v2565
        %2567 = vmatpush.msra.mxu0 %v2566
        %v2568 = vand.u32 %v330, 4294901760
        %v2569 = vsub.f32 %v330, %v2568
        %2570 = vmatpush.msra.mxu0 %v2569
        %v2571 = vand.u32 %v2491, 4294901760
        %v2572 = vsub.f32 %v2491, %v2571
        %2573 = vmatmul.f32.gmra.mxu0 %v2572
        %v2574 = vpop.f32.mrf.mxu0
        %v2575 = vadd.f32 %v2549, %v2574
        %2576 = vdwg.mxu0
        %2577 = vmatpush.msra.mxu0 0.0
        %2578 = vmatpush.msra.mxu0 0.0
        %2579 = vmatpush.msra.mxu0 0.0
        %2580 = vmatpush.msra.mxu0 0.0
        %2581 = vmatpush.msra.mxu0 0.0
        %2582 = vmatpush.msra.mxu0 0.0
        %2583 = vmatpush.msra.mxu0 0.0
        %2584 = vmatpush.msra.mxu0 0.0
        %2585 = vmatpush.msra.mxu0 0.0
        %2586 = vmatpush.msra.mxu0 0.0
        %2587 = vmatpush.msra.mxu0 0.0
        %2588 = vmatpush.msra.mxu0 0.0
        %2589 = vmatpush.msra.mxu0 0.0
        %2590 = vmatpush.msra.mxu0 0.0
        %v2591 = vand.u32 %v331, 4294901760
        %2592 = vmatpush.msra.mxu0 %v2591
        %v2593 = vand.u32 %v330, 4294901760
        %2594 = vmatpush.msra.mxu0 %v2593
        %v2595 = vand.u32 %v2491, 4294901760
        %v2596 = vsub.f32 %v2491, %v2595
        %v2597 = vand.u32 %v2596, 4294901760
        %2598 = vmatmul.f32.gmra.mxu0 %v2597
        %v2599 = vpop.f32.mrf.mxu0
        %v2600 = vadd.f32 %v2575, %v2599
        %2601 = vdwg.mxu0
        %2602 = vmatpush.msra.mxu0 0.0
        %2603 = vmatpush.msra.mxu0 0.0
        %2604 = vmatpush.msra.mxu0 0.0
        %2605 = vmatpush.msra.mxu0 0.0
        %2606 = vmatpush.msra.mxu0 0.0
        %2607 = vmatpush.msra.mxu0 0.0
        %2608 = vmatpush.msra.mxu0 0.0
        %2609 = vmatpush.msra.mxu0 0.0
        %2610 = vmatpush.msra.mxu0 0.0
        %2611 = vmatpush.msra.mxu0 0.0
        %2612 = vmatpush.msra.mxu0 0.0
        %2613 = vmatpush.msra.mxu0 0.0
        %2614 = vmatpush.msra.mxu0 0.0
        %2615 = vmatpush.msra.mxu0 0.0
        %v2616 = vand.u32 %v331, 4294901760
        %v2617 = vsub.f32 %v331, %v2616
        %v2618 = vand.u32 %v2617, 4294901760
        %2619 = vmatpush.msra.mxu0 %v2618
        %v2620 = vand.u32 %v330, 4294901760
        %v2621 = vsub.f32 %v330, %v2620
        %v2622 = vand.u32 %v2621, 4294901760
        %2623 = vmatpush.msra.mxu0 %v2622
        %v2624 = vand.u32 %v2491, 4294901760
        %2625 = vmatmul.f32.gmra.mxu0 %v2624
        %v2626 = vpop.f32.mrf.mxu0
        %v2627 = vadd.f32 %v2600, %v2626
        %2628 = vdwg.mxu0
        %2629 = vmatpush.msra.mxu0 0.0
        %2630 = vmatpush.msra.mxu0 0.0
        %2631 = vmatpush.msra.mxu0 0.0
        %2632 = vmatpush.msra.mxu0 0.0
        %2633 = vmatpush.msra.mxu0 0.0
        %2634 = vmatpush.msra.mxu0 0.0
        %2635 = vmatpush.msra.mxu0 0.0
        %2636 = vmatpush.msra.mxu0 0.0
        %2637 = vmatpush.msra.mxu0 0.0
        %2638 = vmatpush.msra.mxu0 0.0
        %2639 = vmatpush.msra.mxu0 0.0
        %2640 = vmatpush.msra.mxu0 0.0
        %2641 = vmatpush.msra.mxu0 0.0
        %2642 = vmatpush.msra.mxu0 0.0
        %v2643 = vand.u32 %v331, 4294901760
        %2644 = vmatpush.msra.mxu0 %v2643
        %v2645 = vand.u32 %v330, 4294901760
        %2646 = vmatpush.msra.mxu0 %v2645
        %v2647 = vand.u32 %v2491, 4294901760
        %2648 = vmatmul.f32.gmra.mxu0 %v2647
        %v2649 = vpop.f32.mrf.mxu0
        %v2650 = vadd.f32 %v2627, %v2649
        %2651 = vdwg.mxu0
        %v2652 = vperm.slane %v662, 5
        %v2653 = vadd.f32 %v2650, %v2652
        %s2654 = scalar_lea.vmem %s313, 40 [#allocation5]
        %2655 = vst.msk [vmem:[%s2654] sm:$0xff] %vm994, %v2653
        %s2656 = scalar_lea.vmem [#allocation2], 96
        %v2657 = vld [vmem:[%s2656] sm:$0xff]
        %v2658 = vld [vmem:[%s2656 + $0x8] sm:$0xff]
        %2659 = vmatpush.msra.mxu0 0.0
        %2660 = vmatpush.msra.mxu0 0.0
        %2661 = vmatpush.msra.mxu0 0.0
        %2662 = vmatpush.msra.mxu0 0.0
        %2663 = vmatpush.msra.mxu0 0.0
        %2664 = vmatpush.msra.mxu0 0.0
        %2665 = vmatpush.msra.mxu0 0.0
        %2666 = vmatpush.msra.mxu0 0.0
        %2667 = vmatpush.msra.mxu0 0.0
        %2668 = vmatpush.msra.mxu0 0.0
        %2669 = vmatpush.msra.mxu0 0.0
        %2670 = vmatpush.msra.mxu0 0.0
        %2671 = vmatpush.msra.mxu0 0.0
        %2672 = vmatpush.msra.mxu0 0.0
        %v2673 = vand.u32 %v2658, 4294901760
        %2674 = vmatpush.msra.mxu0 %v2673
        %v2675 = vand.u32 %v2657, 4294901760
        %2676 = vmatpush.msra.mxu0 %v2675
        %v2677 = vand.u32 %v340, 4294901760
        %v2678 = vsub.f32 %v340, %v2677
        %v2679 = vand.u32 %v2678, 4294901760
        %v2680 = vsub.f32 %v2678, %v2679
        %v2681 = vand.u32 %v2680, 4294901760
        %2682 = vmatmul.f32.gmra.mxu0 %v2681
        %v2683 = vpop.f32.mrf.mxu0
        %v2684 = vadd.f32 0.0, %v2683
        %2685 = vdwg.mxu0
        %2686 = vmatpush.msra.mxu0 0.0
        %2687 = vmatpush.msra.mxu0 0.0
        %2688 = vmatpush.msra.mxu0 0.0
        %2689 = vmatpush.msra.mxu0 0.0
        %2690 = vmatpush.msra.mxu0 0.0
        %2691 = vmatpush.msra.mxu0 0.0
        %2692 = vmatpush.msra.mxu0 0.0
        %2693 = vmatpush.msra.mxu0 0.0
        %2694 = vmatpush.msra.mxu0 0.0
        %2695 = vmatpush.msra.mxu0 0.0
        %2696 = vmatpush.msra.mxu0 0.0
        %2697 = vmatpush.msra.mxu0 0.0
        %2698 = vmatpush.msra.mxu0 0.0
        %2699 = vmatpush.msra.mxu0 0.0
        %v2700 = vand.u32 %v2658, 4294901760
        %v2701 = vsub.f32 %v2658, %v2700
        %v2702 = vand.u32 %v2701, 4294901760
        %v2703 = vsub.f32 %v2701, %v2702
        %v2704 = vand.u32 %v2703, 4294901760
        %2705 = vmatpush.msra.mxu0 %v2704
        %v2706 = vand.u32 %v2657, 4294901760
        %v2707 = vsub.f32 %v2657, %v2706
        %v2708 = vand.u32 %v2707, 4294901760
        %v2709 = vsub.f32 %v2707, %v2708
        %v2710 = vand.u32 %v2709, 4294901760
        %2711 = vmatpush.msra.mxu0 %v2710
        %v2712 = vand.u32 %v340, 4294901760
        %2713 = vmatmul.f32.gmra.mxu0 %v2712
        %v2714 = vpop.f32.mrf.mxu0
        %v2715 = vadd.f32 %v2684, %v2714
        %2716 = vdwg.mxu0
        %2717 = vmatpush.msra.mxu0 0.0
        %2718 = vmatpush.msra.mxu0 0.0
        %2719 = vmatpush.msra.mxu0 0.0
        %2720 = vmatpush.msra.mxu0 0.0
        %2721 = vmatpush.msra.mxu0 0.0
        %2722 = vmatpush.msra.mxu0 0.0
        %2723 = vmatpush.msra.mxu0 0.0
        %2724 = vmatpush.msra.mxu0 0.0
        %2725 = vmatpush.msra.mxu0 0.0
        %2726 = vmatpush.msra.mxu0 0.0
        %2727 = vmatpush.msra.mxu0 0.0
        %2728 = vmatpush.msra.mxu0 0.0
        %2729 = vmatpush.msra.mxu0 0.0
        %2730 = vmatpush.msra.mxu0 0.0
        %v2731 = vand.u32 %v2658, 4294901760
        %v2732 = vsub.f32 %v2658, %v2731
        %2733 = vmatpush.msra.mxu0 %v2732
        %v2734 = vand.u32 %v2657, 4294901760
        %v2735 = vsub.f32 %v2657, %v2734
        %2736 = vmatpush.msra.mxu0 %v2735
        %v2737 = vand.u32 %v340, 4294901760
        %v2738 = vsub.f32 %v340, %v2737
        %2739 = vmatmul.f32.gmra.mxu0 %v2738
        %v2740 = vpop.f32.mrf.mxu0
        %v2741 = vadd.f32 %v2715, %v2740
        %2742 = vdwg.mxu0
        %2743 = vmatpush.msra.mxu0 0.0
        %2744 = vmatpush.msra.mxu0 0.0
        %2745 = vmatpush.msra.mxu0 0.0
        %2746 = vmatpush.msra.mxu0 0.0
        %2747 = vmatpush.msra.mxu0 0.0
        %2748 = vmatpush.msra.mxu0 0.0
        %2749 = vmatpush.msra.mxu0 0.0
        %2750 = vmatpush.msra.mxu0 0.0
        %2751 = vmatpush.msra.mxu0 0.0
        %2752 = vmatpush.msra.mxu0 0.0
        %2753 = vmatpush.msra.mxu0 0.0
        %2754 = vmatpush.msra.mxu0 0.0
        %2755 = vmatpush.msra.mxu0 0.0
        %2756 = vmatpush.msra.mxu0 0.0
        %v2757 = vand.u32 %v2658, 4294901760
        %2758 = vmatpush.msra.mxu0 %v2757
        %v2759 = vand.u32 %v2657, 4294901760
        %2760 = vmatpush.msra.mxu0 %v2759
        %v2761 = vand.u32 %v340, 4294901760
        %v2762 = vsub.f32 %v340, %v2761
        %v2763 = vand.u32 %v2762, 4294901760
        %2764 = vmatmul.f32.gmra.mxu0 %v2763
        %v2765 = vpop.f32.mrf.mxu0
        %v2766 = vadd.f32 %v2741, %v2765
        %2767 = vdwg.mxu0
        %2768 = vmatpush.msra.mxu0 0.0
        %2769 = vmatpush.msra.mxu0 0.0
        %2770 = vmatpush.msra.mxu0 0.0
        %2771 = vmatpush.msra.mxu0 0.0
        %2772 = vmatpush.msra.mxu0 0.0
        %2773 = vmatpush.msra.mxu0 0.0
        %2774 = vmatpush.msra.mxu0 0.0
        %2775 = vmatpush.msra.mxu0 0.0
        %2776 = vmatpush.msra.mxu0 0.0
        %2777 = vmatpush.msra.mxu0 0.0
        %2778 = vmatpush.msra.mxu0 0.0
        %2779 = vmatpush.msra.mxu0 0.0
        %2780 = vmatpush.msra.mxu0 0.0
        %2781 = vmatpush.msra.mxu0 0.0
        %v2782 = vand.u32 %v2658, 4294901760
        %v2783 = vsub.f32 %v2658, %v2782
        %v2784 = vand.u32 %v2783, 4294901760
        %2785 = vmatpush.msra.mxu0 %v2784
        %v2786 = vand.u32 %v2657, 4294901760
        %v2787 = vsub.f32 %v2657, %v2786
        %v2788 = vand.u32 %v2787, 4294901760
        %2789 = vmatpush.msra.mxu0 %v2788
        %v2790 = vand.u32 %v340, 4294901760
        %2791 = vmatmul.f32.gmra.mxu0 %v2790
        %v2792 = vpop.f32.mrf.mxu0
        %v2793 = vadd.f32 %v2766, %v2792
        %2794 = vdwg.mxu0
        %2795 = vmatpush.msra.mxu0 0.0
        %2796 = vmatpush.msra.mxu0 0.0
        %2797 = vmatpush.msra.mxu0 0.0
        %2798 = vmatpush.msra.mxu0 0.0
        %2799 = vmatpush.msra.mxu0 0.0
        %2800 = vmatpush.msra.mxu0 0.0
        %2801 = vmatpush.msra.mxu0 0.0
        %2802 = vmatpush.msra.mxu0 0.0
        %2803 = vmatpush.msra.mxu0 0.0
        %2804 = vmatpush.msra.mxu0 0.0
        %2805 = vmatpush.msra.mxu0 0.0
        %2806 = vmatpush.msra.mxu0 0.0
        %2807 = vmatpush.msra.mxu0 0.0
        %2808 = vmatpush.msra.mxu0 0.0
        %v2809 = vand.u32 %v2658, 4294901760
        %2810 = vmatpush.msra.mxu0 %v2809
        %v2811 = vand.u32 %v2657, 4294901760
        %2812 = vmatpush.msra.mxu0 %v2811
        %v2813 = vand.u32 %v340, 4294901760
        %2814 = vmatmul.f32.gmra.mxu0 %v2813
        %v2815 = vpop.f32.mrf.mxu0
        %v2816 = vadd.f32 %v2793, %v2815
        %2817 = vdwg.mxu0
        %2818 = vset.pattern.permute.xlu0 6
        %2819 = vperm.xlu0 %2818, %v499
        %v2820 = vpop.permute.xlu0 %2819
        %v2823 = vsel %vm338, %v2816, 0
        %2825 = vmatpush.msra.mxu0 0.0
        %2826 = vmatpush.msra.mxu0 0.0
        %2827 = vmatpush.msra.mxu0 0.0
        %2828 = vmatpush.msra.mxu0 0.0
        %2829 = vmatpush.msra.mxu0 0.0
        %2830 = vmatpush.msra.mxu0 0.0
        %2831 = vmatpush.msra.mxu0 0.0
        %2832 = vmatpush.msra.mxu0 0.0
        %2833 = vmatpush.msra.mxu0 0.0
        %2834 = vmatpush.msra.mxu0 0.0
        %2835 = vmatpush.msra.mxu0 0.0
        %2836 = vmatpush.msra.mxu0 0.0
        %2837 = vmatpush.msra.mxu0 0.0
        %2838 = vmatpush.msra.mxu0 0.0
        %v2839 = vand.u32 %v331, 4294901760
        %2840 = vmatpush.msra.mxu0 %v2839
        %v2841 = vand.u32 %v330, 4294901760
        %2842 = vmatpush.msra.mxu0 %v2841
        %v2843 = vand.u32 %v2823, 4294901760
        %v2844 = vsub.f32 %v2823, %v2843
        %v2845 = vand.u32 %v2844, 4294901760
        %v2846 = vsub.f32 %v2844, %v2845
        %v2847 = vand.u32 %v2846, 4294901760
        %2848 = vmatmul.f32.gmra.mxu0 %v2847
        %v2849 = vpop.f32.mrf.mxu0
        %v2850 = vadd.f32 %v2820, %v2849
        %2851 = vdwg.mxu0
        %2852 = vmatpush.msra.mxu0 0.0
        %2853 = vmatpush.msra.mxu0 0.0
        %2854 = vmatpush.msra.mxu0 0.0
        %2855 = vmatpush.msra.mxu0 0.0
        %2856 = vmatpush.msra.mxu0 0.0
        %2857 = vmatpush.msra.mxu0 0.0
        %2858 = vmatpush.msra.mxu0 0.0
        %2859 = vmatpush.msra.mxu0 0.0
        %2860 = vmatpush.msra.mxu0 0.0
        %2861 = vmatpush.msra.mxu0 0.0
        %2862 = vmatpush.msra.mxu0 0.0
        %2863 = vmatpush.msra.mxu0 0.0
        %2864 = vmatpush.msra.mxu0 0.0
        %2865 = vmatpush.msra.mxu0 0.0
        %v2866 = vand.u32 %v331, 4294901760
        %v2867 = vsub.f32 %v331, %v2866
        %v2868 = vand.u32 %v2867, 4294901760
        %v2869 = vsub.f32 %v2867, %v2868
        %v2870 = vand.u32 %v2869, 4294901760
        %2871 = vmatpush.msra.mxu0 %v2870
        %v2872 = vand.u32 %v330, 4294901760
        %v2873 = vsub.f32 %v330, %v2872
        %v2874 = vand.u32 %v2873, 4294901760
        %v2875 = vsub.f32 %v2873, %v2874
        %v2876 = vand.u32 %v2875, 4294901760
        %2877 = vmatpush.msra.mxu0 %v2876
        %v2878 = vand.u32 %v2823, 4294901760
        %2879 = vmatmul.f32.gmra.mxu0 %v2878
        %v2880 = vpop.f32.mrf.mxu0
        %v2881 = vadd.f32 %v2850, %v2880
        %2882 = vdwg.mxu0
        %2883 = vmatpush.msra.mxu0 0.0
        %2884 = vmatpush.msra.mxu0 0.0
        %2885 = vmatpush.msra.mxu0 0.0
        %2886 = vmatpush.msra.mxu0 0.0
        %2887 = vmatpush.msra.mxu0 0.0
        %2888 = vmatpush.msra.mxu0 0.0
        %2889 = vmatpush.msra.mxu0 0.0
        %2890 = vmatpush.msra.mxu0 0.0
        %2891 = vmatpush.msra.mxu0 0.0
        %2892 = vmatpush.msra.mxu0 0.0
        %2893 = vmatpush.msra.mxu0 0.0
        %2894 = vmatpush.msra.mxu0 0.0
        %2895 = vmatpush.msra.mxu0 0.0
        %2896 = vmatpush.msra.mxu0 0.0
        %v2897 = vand.u32 %v331, 4294901760
        %v2898 = vsub.f32 %v331, %v2897
        %2899 = vmatpush.msra.mxu0 %v2898
        %v2900 = vand.u32 %v330, 4294901760
        %v2901 = vsub.f32 %v330, %v2900
        %2902 = vmatpush.msra.mxu0 %v2901
        %v2903 = vand.u32 %v2823, 4294901760
        %v2904 = vsub.f32 %v2823, %v2903
        %2905 = vmatmul.f32.gmra.mxu0 %v2904
        %v2906 = vpop.f32.mrf.mxu0
        %v2907 = vadd.f32 %v2881, %v2906
        %2908 = vdwg.mxu0
        %2909 = vmatpush.msra.mxu0 0.0
        %2910 = vmatpush.msra.mxu0 0.0
        %2911 = vmatpush.msra.mxu0 0.0
        %2912 = vmatpush.msra.mxu0 0.0
        %2913 = vmatpush.msra.mxu0 0.0
        %2914 = vmatpush.msra.mxu0 0.0
        %2915 = vmatpush.msra.mxu0 0.0
        %2916 = vmatpush.msra.mxu0 0.0
        %2917 = vmatpush.msra.mxu0 0.0
        %2918 = vmatpush.msra.mxu0 0.0
        %2919 = vmatpush.msra.mxu0 0.0
        %2920 = vmatpush.msra.mxu0 0.0
        %2921 = vmatpush.msra.mxu0 0.0
        %2922 = vmatpush.msra.mxu0 0.0
        %v2923 = vand.u32 %v331, 4294901760
        %2924 = vmatpush.msra.mxu0 %v2923
        %v2925 = vand.u32 %v330, 4294901760
        %2926 = vmatpush.msra.mxu0 %v2925
        %v2927 = vand.u32 %v2823, 4294901760
        %v2928 = vsub.f32 %v2823, %v2927
        %v2929 = vand.u32 %v2928, 4294901760
        %2930 = vmatmul.f32.gmra.mxu0 %v2929
        %v2931 = vpop.f32.mrf.mxu0
        %v2932 = vadd.f32 %v2907, %v2931
        %2933 = vdwg.mxu0
        %2934 = vmatpush.msra.mxu0 0.0
        %2935 = vmatpush.msra.mxu0 0.0
        %2936 = vmatpush.msra.mxu0 0.0
        %2937 = vmatpush.msra.mxu0 0.0
        %2938 = vmatpush.msra.mxu0 0.0
        %2939 = vmatpush.msra.mxu0 0.0
        %2940 = vmatpush.msra.mxu0 0.0
        %2941 = vmatpush.msra.mxu0 0.0
        %2942 = vmatpush.msra.mxu0 0.0
        %2943 = vmatpush.msra.mxu0 0.0
        %2944 = vmatpush.msra.mxu0 0.0
        %2945 = vmatpush.msra.mxu0 0.0
        %2946 = vmatpush.msra.mxu0 0.0
        %2947 = vmatpush.msra.mxu0 0.0
        %v2948 = vand.u32 %v331, 4294901760
        %v2949 = vsub.f32 %v331, %v2948
        %v2950 = vand.u32 %v2949, 4294901760
        %2951 = vmatpush.msra.mxu0 %v2950
        %v2952 = vand.u32 %v330, 4294901760
        %v2953 = vsub.f32 %v330, %v2952
        %v2954 = vand.u32 %v2953, 4294901760
        %2955 = vmatpush.msra.mxu0 %v2954
        %v2956 = vand.u32 %v2823, 4294901760
        %2957 = vmatmul.f32.gmra.mxu0 %v2956
        %v2958 = vpop.f32.mrf.mxu0
        %v2959 = vadd.f32 %v2932, %v2958
        %2960 = vdwg.mxu0
        %2961 = vmatpush.msra.mxu0 0.0
        %2962 = vmatpush.msra.mxu0 0.0
        %2963 = vmatpush.msra.mxu0 0.0
        %2964 = vmatpush.msra.mxu0 0.0
        %2965 = vmatpush.msra.mxu0 0.0
        %2966 = vmatpush.msra.mxu0 0.0
        %2967 = vmatpush.msra.mxu0 0.0
        %2968 = vmatpush.msra.mxu0 0.0
        %2969 = vmatpush.msra.mxu0 0.0
        %2970 = vmatpush.msra.mxu0 0.0
        %2971 = vmatpush.msra.mxu0 0.0
        %2972 = vmatpush.msra.mxu0 0.0
        %2973 = vmatpush.msra.mxu0 0.0
        %2974 = vmatpush.msra.mxu0 0.0
        %v2975 = vand.u32 %v331, 4294901760
        %2976 = vmatpush.msra.mxu0 %v2975
        %v2977 = vand.u32 %v330, 4294901760
        %2978 = vmatpush.msra.mxu0 %v2977
        %v2979 = vand.u32 %v2823, 4294901760
        %2980 = vmatmul.f32.gmra.mxu0 %v2979
        %v2981 = vpop.f32.mrf.mxu0
        %v2982 = vadd.f32 %v2959, %v2981
        %2983 = vdwg.mxu0
        %v2984 = vperm.slane %v662, 6
        %v2985 = vadd.f32 %v2982, %v2984
        %s2986 = scalar_lea.vmem %s313, 48 [#allocation5]
        %2987 = vst.msk [vmem:[%s2986] sm:$0xff] %vm994, %v2985
        %s2988 = scalar_lea.vmem [#allocation2], 112
        %v2989 = vld [vmem:[%s2988] sm:$0xff]
        %v2990 = vld [vmem:[%s2988 + $0x8] sm:$0xff]
        %2991 = vmatpush.msra.mxu0 0.0
        %2992 = vmatpush.msra.mxu0 0.0
        %2993 = vmatpush.msra.mxu0 0.0
        %2994 = vmatpush.msra.mxu0 0.0
        %2995 = vmatpush.msra.mxu0 0.0
        %2996 = vmatpush.msra.mxu0 0.0
        %2997 = vmatpush.msra.mxu0 0.0
        %2998 = vmatpush.msra.mxu0 0.0
        %2999 = vmatpush.msra.mxu0 0.0
        %3000 = vmatpush.msra.mxu0 0.0
        %3001 = vmatpush.msra.mxu0 0.0
        %3002 = vmatpush.msra.mxu0 0.0
        %3003 = vmatpush.msra.mxu0 0.0
        %3004 = vmatpush.msra.mxu0 0.0
        %v3005 = vand.u32 %v2990, 4294901760
        %3006 = vmatpush.msra.mxu0 %v3005
        %v3007 = vand.u32 %v2989, 4294901760
        %3008 = vmatpush.msra.mxu0 %v3007
        %v3009 = vand.u32 %v340, 4294901760
        %v3010 = vsub.f32 %v340, %v3009
        %v3011 = vand.u32 %v3010, 4294901760
        %v3012 = vsub.f32 %v3010, %v3011
        %v3013 = vand.u32 %v3012, 4294901760
        %3014 = vmatmul.f32.gmra.mxu0 %v3013
        %v3015 = vpop.f32.mrf.mxu0
        %v3016 = vadd.f32 0.0, %v3015
        %3017 = vdwg.mxu0
        %3018 = vmatpush.msra.mxu0 0.0
        %3019 = vmatpush.msra.mxu0 0.0
        %3020 = vmatpush.msra.mxu0 0.0
        %3021 = vmatpush.msra.mxu0 0.0
        %3022 = vmatpush.msra.mxu0 0.0
        %3023 = vmatpush.msra.mxu0 0.0
        %3024 = vmatpush.msra.mxu0 0.0
        %3025 = vmatpush.msra.mxu0 0.0
        %3026 = vmatpush.msra.mxu0 0.0
        %3027 = vmatpush.msra.mxu0 0.0
        %3028 = vmatpush.msra.mxu0 0.0
        %3029 = vmatpush.msra.mxu0 0.0
        %3030 = vmatpush.msra.mxu0 0.0
        %3031 = vmatpush.msra.mxu0 0.0
        %v3032 = vand.u32 %v2990, 4294901760
        %v3033 = vsub.f32 %v2990, %v3032
        %v3034 = vand.u32 %v3033, 4294901760
        %v3035 = vsub.f32 %v3033, %v3034
        %v3036 = vand.u32 %v3035, 4294901760
        %3037 = vmatpush.msra.mxu0 %v3036
        %v3038 = vand.u32 %v2989, 4294901760
        %v3039 = vsub.f32 %v2989, %v3038
        %v3040 = vand.u32 %v3039, 4294901760
        %v3041 = vsub.f32 %v3039, %v3040
        %v3042 = vand.u32 %v3041, 4294901760
        %3043 = vmatpush.msra.mxu0 %v3042
        %v3044 = vand.u32 %v340, 4294901760
        %3045 = vmatmul.f32.gmra.mxu0 %v3044
        %v3046 = vpop.f32.mrf.mxu0
        %v3047 = vadd.f32 %v3016, %v3046
        %3048 = vdwg.mxu0
        %3049 = vmatpush.msra.mxu0 0.0
        %3050 = vmatpush.msra.mxu0 0.0
        %3051 = vmatpush.msra.mxu0 0.0
        %3052 = vmatpush.msra.mxu0 0.0
        %3053 = vmatpush.msra.mxu0 0.0
        %3054 = vmatpush.msra.mxu0 0.0
        %3055 = vmatpush.msra.mxu0 0.0
        %3056 = vmatpush.msra.mxu0 0.0
        %3057 = vmatpush.msra.mxu0 0.0
        %3058 = vmatpush.msra.mxu0 0.0
        %3059 = vmatpush.msra.mxu0 0.0
        %3060 = vmatpush.msra.mxu0 0.0
        %3061 = vmatpush.msra.mxu0 0.0
        %3062 = vmatpush.msra.mxu0 0.0
        %v3063 = vand.u32 %v2990, 4294901760
        %v3064 = vsub.f32 %v2990, %v3063
        %3065 = vmatpush.msra.mxu0 %v3064
        %v3066 = vand.u32 %v2989, 4294901760
        %v3067 = vsub.f32 %v2989, %v3066
        %3068 = vmatpush.msra.mxu0 %v3067
        %v3069 = vand.u32 %v340, 4294901760
        %v3070 = vsub.f32 %v340, %v3069
        %3071 = vmatmul.f32.gmra.mxu0 %v3070
        %v3072 = vpop.f32.mrf.mxu0
        %v3073 = vadd.f32 %v3047, %v3072
        %3074 = vdwg.mxu0
        %3075 = vmatpush.msra.mxu0 0.0
        %3076 = vmatpush.msra.mxu0 0.0
        %3077 = vmatpush.msra.mxu0 0.0
        %3078 = vmatpush.msra.mxu0 0.0
        %3079 = vmatpush.msra.mxu0 0.0
        %3080 = vmatpush.msra.mxu0 0.0
        %3081 = vmatpush.msra.mxu0 0.0
        %3082 = vmatpush.msra.mxu0 0.0
        %3083 = vmatpush.msra.mxu0 0.0
        %3084 = vmatpush.msra.mxu0 0.0
        %3085 = vmatpush.msra.mxu0 0.0
        %3086 = vmatpush.msra.mxu0 0.0
        %3087 = vmatpush.msra.mxu0 0.0
        %3088 = vmatpush.msra.mxu0 0.0
        %v3089 = vand.u32 %v2990, 4294901760
        %3090 = vmatpush.msra.mxu0 %v3089
        %v3091 = vand.u32 %v2989, 4294901760
        %3092 = vmatpush.msra.mxu0 %v3091
        %v3093 = vand.u32 %v340, 4294901760
        %v3094 = vsub.f32 %v340, %v3093
        %v3095 = vand.u32 %v3094, 4294901760
        %3096 = vmatmul.f32.gmra.mxu0 %v3095
        %v3097 = vpop.f32.mrf.mxu0
        %v3098 = vadd.f32 %v3073, %v3097
        %3099 = vdwg.mxu0
        %3100 = vmatpush.msra.mxu0 0.0
        %3101 = vmatpush.msra.mxu0 0.0
        %3102 = vmatpush.msra.mxu0 0.0
        %3103 = vmatpush.msra.mxu0 0.0
        %3104 = vmatpush.msra.mxu0 0.0
        %3105 = vmatpush.msra.mxu0 0.0
        %3106 = vmatpush.msra.mxu0 0.0
        %3107 = vmatpush.msra.mxu0 0.0
        %3108 = vmatpush.msra.mxu0 0.0
        %3109 = vmatpush.msra.mxu0 0.0
        %3110 = vmatpush.msra.mxu0 0.0
        %3111 = vmatpush.msra.mxu0 0.0
        %3112 = vmatpush.msra.mxu0 0.0
        %3113 = vmatpush.msra.mxu0 0.0
        %v3114 = vand.u32 %v2990, 4294901760
        %v3115 = vsub.f32 %v2990, %v3114
        %v3116 = vand.u32 %v3115, 4294901760
        %3117 = vmatpush.msra.mxu0 %v3116
        %v3118 = vand.u32 %v2989, 4294901760
        %v3119 = vsub.f32 %v2989, %v3118
        %v3120 = vand.u32 %v3119, 4294901760
        %3121 = vmatpush.msra.mxu0 %v3120
        %v3122 = vand.u32 %v340, 4294901760
        %3123 = vmatmul.f32.gmra.mxu0 %v3122
        %v3124 = vpop.f32.mrf.mxu0
        %v3125 = vadd.f32 %v3098, %v3124
        %3126 = vdwg.mxu0
        %3127 = vmatpush.msra.mxu0 0.0
        %3128 = vmatpush.msra.mxu0 0.0
        %3129 = vmatpush.msra.mxu0 0.0
        %3130 = vmatpush.msra.mxu0 0.0
        %3131 = vmatpush.msra.mxu0 0.0
        %3132 = vmatpush.msra.mxu0 0.0
        %3133 = vmatpush.msra.mxu0 0.0
        %3134 = vmatpush.msra.mxu0 0.0
        %3135 = vmatpush.msra.mxu0 0.0
        %3136 = vmatpush.msra.mxu0 0.0
        %3137 = vmatpush.msra.mxu0 0.0
        %3138 = vmatpush.msra.mxu0 0.0
        %3139 = vmatpush.msra.mxu0 0.0
        %3140 = vmatpush.msra.mxu0 0.0
        %v3141 = vand.u32 %v2990, 4294901760
        %3142 = vmatpush.msra.mxu0 %v3141
        %v3143 = vand.u32 %v2989, 4294901760
        %3144 = vmatpush.msra.mxu0 %v3143
        %v3145 = vand.u32 %v340, 4294901760
        %3146 = vmatmul.f32.gmra.mxu0 %v3145
        %v3147 = vpop.f32.mrf.mxu0
        %v3148 = vadd.f32 %v3125, %v3147
        %3149 = vdwg.mxu0
        %3150 = vset.pattern.permute.xlu0 7
        %3151 = vperm.xlu0 %3150, %v499
        %v3152 = vpop.permute.xlu0 %3151
        %v3155 = vsel %vm338, %v3148, 0
        %3157 = vmatpush.msra.mxu0 0.0
        %3158 = vmatpush.msra.mxu0 0.0
        %3159 = vmatpush.msra.mxu0 0.0
        %3160 = vmatpush.msra.mxu0 0.0
        %3161 = vmatpush.msra.mxu0 0.0
        %3162 = vmatpush.msra.mxu0 0.0
        %3163 = vmatpush.msra.mxu0 0.0
        %3164 = vmatpush.msra.mxu0 0.0
        %3165 = vmatpush.msra.mxu0 0.0
        %3166 = vmatpush.msra.mxu0 0.0
        %3167 = vmatpush.msra.mxu0 0.0
        %3168 = vmatpush.msra.mxu0 0.0
        %3169 = vmatpush.msra.mxu0 0.0
        %3170 = vmatpush.msra.mxu0 0.0
        %v3171 = vand.u32 %v331, 4294901760
        %3172 = vmatpush.msra.mxu0 %v3171
        %v3173 = vand.u32 %v330, 4294901760
        %3174 = vmatpush.msra.mxu0 %v3173
        %v3175 = vand.u32 %v3155, 4294901760
        %v3176 = vsub.f32 %v3155, %v3175
        %v3177 = vand.u32 %v3176, 4294901760
        %v3178 = vsub.f32 %v3176, %v3177
        %v3179 = vand.u32 %v3178, 4294901760
        %3180 = vmatmul.f32.gmra.mxu0 %v3179
        %v3181 = vpop.f32.mrf.mxu0
        %v3182 = vadd.f32 %v3152, %v3181
        %3183 = vdwg.mxu0
        %3184 = vmatpush.msra.mxu0 0.0
        %3185 = vmatpush.msra.mxu0 0.0
        %3186 = vmatpush.msra.mxu0 0.0
        %3187 = vmatpush.msra.mxu0 0.0
        %3188 = vmatpush.msra.mxu0 0.0
        %3189 = vmatpush.msra.mxu0 0.0
        %3190 = vmatpush.msra.mxu0 0.0
        %3191 = vmatpush.msra.mxu0 0.0
        %3192 = vmatpush.msra.mxu0 0.0
        %3193 = vmatpush.msra.mxu0 0.0
        %3194 = vmatpush.msra.mxu0 0.0
        %3195 = vmatpush.msra.mxu0 0.0
        %3196 = vmatpush.msra.mxu0 0.0
        %3197 = vmatpush.msra.mxu0 0.0
        %v3198 = vand.u32 %v331, 4294901760
        %v3199 = vsub.f32 %v331, %v3198
        %v3200 = vand.u32 %v3199, 4294901760
        %v3201 = vsub.f32 %v3199, %v3200
        %v3202 = vand.u32 %v3201, 4294901760
        %3203 = vmatpush.msra.mxu0 %v3202
        %v3204 = vand.u32 %v330, 4294901760
        %v3205 = vsub.f32 %v330, %v3204
        %v3206 = vand.u32 %v3205, 4294901760
        %v3207 = vsub.f32 %v3205, %v3206
        %v3208 = vand.u32 %v3207, 4294901760
        %3209 = vmatpush.msra.mxu0 %v3208
        %v3210 = vand.u32 %v3155, 4294901760
        %3211 = vmatmul.f32.gmra.mxu0 %v3210
        %v3212 = vpop.f32.mrf.mxu0
        %v3213 = vadd.f32 %v3182, %v3212
        %3214 = vdwg.mxu0
        %3215 = vmatpush.msra.mxu0 0.0
        %3216 = vmatpush.msra.mxu0 0.0
        %3217 = vmatpush.msra.mxu0 0.0
        %3218 = vmatpush.msra.mxu0 0.0
        %3219 = vmatpush.msra.mxu0 0.0
        %3220 = vmatpush.msra.mxu0 0.0
        %3221 = vmatpush.msra.mxu0 0.0
        %3222 = vmatpush.msra.mxu0 0.0
        %3223 = vmatpush.msra.mxu0 0.0
        %3224 = vmatpush.msra.mxu0 0.0
        %3225 = vmatpush.msra.mxu0 0.0
        %3226 = vmatpush.msra.mxu0 0.0
        %3227 = vmatpush.msra.mxu0 0.0
        %3228 = vmatpush.msra.mxu0 0.0
        %v3229 = vand.u32 %v331, 4294901760
        %v3230 = vsub.f32 %v331, %v3229
        %3231 = vmatpush.msra.mxu0 %v3230
        %v3232 = vand.u32 %v330, 4294901760
        %v3233 = vsub.f32 %v330, %v3232
        %3234 = vmatpush.msra.mxu0 %v3233
        %v3235 = vand.u32 %v3155, 4294901760
        %v3236 = vsub.f32 %v3155, %v3235
        %3237 = vmatmul.f32.gmra.mxu0 %v3236
        %v3238 = vpop.f32.mrf.mxu0
        %v3239 = vadd.f32 %v3213, %v3238
        %3240 = vdwg.mxu0
        %3241 = vmatpush.msra.mxu0 0.0
        %3242 = vmatpush.msra.mxu0 0.0
        %3243 = vmatpush.msra.mxu0 0.0
        %3244 = vmatpush.msra.mxu0 0.0
        %3245 = vmatpush.msra.mxu0 0.0
        %3246 = vmatpush.msra.mxu0 0.0
        %3247 = vmatpush.msra.mxu0 0.0
        %3248 = vmatpush.msra.mxu0 0.0
        %3249 = vmatpush.msra.mxu0 0.0
        %3250 = vmatpush.msra.mxu0 0.0
        %3251 = vmatpush.msra.mxu0 0.0
        %3252 = vmatpush.msra.mxu0 0.0
        %3253 = vmatpush.msra.mxu0 0.0
        %3254 = vmatpush.msra.mxu0 0.0
        %v3255 = vand.u32 %v331, 4294901760
        %3256 = vmatpush.msra.mxu0 %v3255
        %v3257 = vand.u32 %v330, 4294901760
        %3258 = vmatpush.msra.mxu0 %v3257
        %v3259 = vand.u32 %v3155, 4294901760
        %v3260 = vsub.f32 %v3155, %v3259
        %v3261 = vand.u32 %v3260, 4294901760
        %3262 = vmatmul.f32.gmra.mxu0 %v3261
        %v3263 = vpop.f32.mrf.mxu0
        %v3264 = vadd.f32 %v3239, %v3263
        %3265 = vdwg.mxu0
        %3266 = vmatpush.msra.mxu0 0.0
        %3267 = vmatpush.msra.mxu0 0.0
        %3268 = vmatpush.msra.mxu0 0.0
        %3269 = vmatpush.msra.mxu0 0.0
        %3270 = vmatpush.msra.mxu0 0.0
        %3271 = vmatpush.msra.mxu0 0.0
        %3272 = vmatpush.msra.mxu0 0.0
        %3273 = vmatpush.msra.mxu0 0.0
        %3274 = vmatpush.msra.mxu0 0.0
        %3275 = vmatpush.msra.mxu0 0.0
        %3276 = vmatpush.msra.mxu0 0.0
        %3277 = vmatpush.msra.mxu0 0.0
        %3278 = vmatpush.msra.mxu0 0.0
        %3279 = vmatpush.msra.mxu0 0.0
        %v3280 = vand.u32 %v331, 4294901760
        %v3281 = vsub.f32 %v331, %v3280
        %v3282 = vand.u32 %v3281, 4294901760
        %3283 = vmatpush.msra.mxu0 %v3282
        %v3284 = vand.u32 %v330, 4294901760
        %v3285 = vsub.f32 %v330, %v3284
        %v3286 = vand.u32 %v3285, 4294901760
        %3287 = vmatpush.msra.mxu0 %v3286
        %v3288 = vand.u32 %v3155, 4294901760
        %3289 = vmatmul.f32.gmra.mxu0 %v3288
        %v3290 = vpop.f32.mrf.mxu0
        %v3291 = vadd.f32 %v3264, %v3290
        %3292 = vdwg.mxu0
        %3293 = vmatpush.msra.mxu0 0.0
        %3294 = vmatpush.msra.mxu0 0.0
        %3295 = vmatpush.msra.mxu0 0.0
        %3296 = vmatpush.msra.mxu0 0.0
        %3297 = vmatpush.msra.mxu0 0.0
        %3298 = vmatpush.msra.mxu0 0.0
        %3299 = vmatpush.msra.mxu0 0.0
        %3300 = vmatpush.msra.mxu0 0.0
        %3301 = vmatpush.msra.mxu0 0.0
        %3302 = vmatpush.msra.mxu0 0.0
        %3303 = vmatpush.msra.mxu0 0.0
        %3304 = vmatpush.msra.mxu0 0.0
        %3305 = vmatpush.msra.mxu0 0.0
        %3306 = vmatpush.msra.mxu0 0.0
        %v3307 = vand.u32 %v331, 4294901760
        %3308 = vmatpush.msra.mxu0 %v3307
        %v3309 = vand.u32 %v330, 4294901760
        %3310 = vmatpush.msra.mxu0 %v3309
        %v3311 = vand.u32 %v3155, 4294901760
        %3312 = vmatmul.f32.gmra.mxu0 %v3311
        %v3313 = vpop.f32.mrf.mxu0
        %v3314 = vadd.f32 %v3291, %v3313
        %3315 = vdwg.mxu0
        %v3316 = vperm.slane %v662, 7
        %v3317 = vadd.f32 %v3314, %v3316
        %s3318 = scalar_lea.vmem %s313, 56 [#allocation5]
        %3319 = vst.msk [vmem:[%s3318] sm:$0xff] %vm994, %v3317
        %s3320 = sand.u32 %s192, 1
        %s3321 = scalar_lea.sflag [#allocation4], %s3320
        %s3322 = sand.u32 %s192, 1
        %s3323 = smul.addr %s3322, 64
        %s3324 = scalar_lea.vmem [#allocation5], %s3323
        // Predicated region
        $region49: #{tpu_custom_call.1} parent=43 // pred_check
          %p3325 = pneg %p202
        $region50: #{tpu_custom_call.1} parent=43 // pred_check_branch
          %3327 = sbr.rel (%p3325) target = $region52
        $region51: #{tpu_custom_call.1} parent=43 // pred_region
          %3329 = vsyncadd %s3321, 0
          %s3330 = sadd.s32 %s28, %s27
          %s3331 = smul.addr %s26, 8
          %s3332 = sadd.s32 %s3330, %s3331
          %s3333 = smul.addr %s3332, 8
          %s3334 = scalar_lea.hbm %s6, %s3333
          %s3335 = sshll.u32 %s3324, 4
          %s3336 = int_to_ptr.vmem [resolvable:$true] %s3335
          %s3337 = sshll.u32 %s3334, 4
          %s3338 = int_to_ptr.hbm [resolvable:$true] %s3337
          %3343 = dma.vmem_to_hbm [thread:$0]  %s3336, 1024, %s3338, %s3321, 128, 128, 8
        $region52: #{tpu_custom_call.1} parent=43 // pred_fallthru
          _
      $region44: #{tpu_custom_call.1} parent=5 // pred_fallthru
        _
      %p3344 = scmp.le.s32.totalorder 2, %s16
      // Predicated region
      $region53: #{tpu_custom_call.1} parent=5 // pred_check
        %p3345 = pneg %p3344
      $region54: #{tpu_custom_call.1} parent=5 // pred_check_branch
        %3347 = sbr.rel (%p3345) target = $region56
      $region55: #{tpu_custom_call.1} parent=5 // pred_region
        %s3348 = ssub.s32 %s16, 2
        // Predicated region
        $region57: #{tpu_custom_call.1} parent=55 // pred_check
          %p3349 = pneg %p208
        $region58: #{tpu_custom_call.1} parent=55 // pred_check_branch
          %3351 = sbr.rel (%p3349) target = $region60
        $region59: #{tpu_custom_call.1} parent=55 // pred_region
          %s3352 = sand.u32 %s193, 1
          %s3353 = scalar_lea.sflag [#allocation4], %s3352
          %s3354 = sand.u32 %s193, 1
          %s3355 = smul.addr %s3354, 64
          %s3356 = scalar_lea.vmem [#allocation5], %s3355
          %3358 = dma.done %s3353, 1024
        $region60: #{tpu_custom_call.1} parent=55 // pred_fallthru
          _
      $region56: #{tpu_custom_call.1} parent=5 // pred_fallthru
        _
    $region6: #{tpu_custom_call.1} parent=1 // loop_footer
      %s20 = sadd.s32 1, %s16
    $region7: #{tpu_custom_call.1} parent=1 // loop_footer_branch
      %15 = sbr.rel target = $region3
    $region8: #{tpu_custom_call.1} parent=1 // loop_exit
      _
    %3359 = vsyncpa [#allocation3], 1
    %s3360 = scalar_lea.sflag [#allocation3], 1
    %3361 = vsyncpa %s3360, 1
    %3362 = vsyncpa [#allocation4], 1
    %s3363 = scalar_lea.sflag [#allocation4], 1
    %3364 = vsyncpa %s3363, 1

</llo_original>
